<compile_context>
chip_gen: v7x
topology: tpu7x:2x2x1
jax: 0.10.0
libtpu: 0.0.40
codegen_flags: <defaults>
</compile_context>

<pallas_src>
import functools

import jax
import jax.numpy as jnp
from jax import lax
from jax.experimental import pallas as pl
from jax.experimental.pallas import tpu as pltpu

EPS = 1e-5
_VMEM_LIMIT = 48 * 1024 * 1024


def _pick_row_tile(m, target):
    """Largest row tile <= target that evenly divides m (multiple of 8), else m."""
    if m <= target:
        return m
    t = (target // 8) * 8
    while t >= 8:
        if m % t == 0:
            return t
        t -= 8
    return m


# --------------------------- Pallas kernels ---------------------------------

def _gemm_act_kernel(x_ref, s_ref, t_ref, w_ref, o_ref, *, apply_act):
    """o = [relu(x*scale + shift)] @ W   (bf16 MXU operands, f32 accumulation).

    x: (tm, Cin) bf16   s,t: (1, Cin) f32   w: (Cin, K*K*Cout) bf16.
    scale/shift fold the *previous* layer's BatchNorm into this GEMM so BN+ReLU
    never needs its own lane-sparse elementwise pass.
    """
    x = x_ref[...].astype(jnp.float32)
    if apply_act:
        x = jnp.maximum(x * s_ref[...] + t_ref[...], 0.0)
    acc = jnp.dot(x.astype(jnp.bfloat16), w_ref[...],
                  preferred_element_type=jnp.float32)
    o_ref[...] = acc.astype(o_ref.dtype)


def _bn_stats_kernel(x_ref, sum_ref, sq_ref, sum_acc, sq_acc):
    """Single-pass per-channel sum / sum-of-squares across the M grid axis."""
    i = pl.program_id(0)

    @pl.when(i == 0)
    def _():
        sum_acc[...] = jnp.zeros_like(sum_acc)
        sq_acc[...] = jnp.zeros_like(sq_acc)

    x = x_ref[...].astype(jnp.float32)
    sum_acc[...] += jnp.sum(x, axis=0, keepdims=True)
    sq_acc[...] += jnp.sum(x * x, axis=0, keepdims=True)

    @pl.when(i == pl.num_programs(0) - 1)
    def _():
        sum_ref[...] = sum_acc[...]
        sq_ref[...] = sq_acc[...]


def _tanh_kernel(x_ref, o_ref):
    o_ref[...] = jnp.tanh(x_ref[...].astype(jnp.float32))


# --------------------------- Wrappers / glue ---------------------------------

def _gemm_act(x2d, scale, shift, wg, *, apply_act):
    m, cin = x2d.shape
    nout = wg.shape[1]
    tm = _pick_row_tile(m, 512)
    kernel = functools.partial(_gemm_act_kernel, apply_act=apply_act)
    return pl.pallas_call(
        kernel,
        out_shape=jax.ShapeDtypeStruct((m, nout), jnp.bfloat16),
        grid=(m // tm,),
        in_specs=[
            pl.BlockSpec((tm, cin), lambda i: (i, 0)),
            pl.BlockSpec((1, cin), lambda i: (0, 0)),
            pl.BlockSpec((1, cin), lambda i: (0, 0)),
            pl.BlockSpec((cin, nout), lambda i: (0, 0)),
        ],
        out_specs=pl.BlockSpec((tm, nout), lambda i: (i, 0)),
        compiler_params=pltpu.CompilerParams(
            dimension_semantics=("parallel",),
            vmem_limit_bytes=_VMEM_LIMIT),
    )(x2d,
      scale.reshape(1, cin).astype(jnp.float32),
      shift.reshape(1, cin).astype(jnp.float32),
      wg)


def _convt_weight_to_gemm(wt, K):
    # PyTorch ConvTranspose2d weight: (Cin, Cout, K, K) -> (Cin, K*K*Cout).
    cin, cout = wt.shape[0], wt.shape[1]
    wg = jnp.transpose(wt, (0, 2, 3, 1)).reshape(cin, K * K * cout)
    return wg.astype(jnp.bfloat16)


def _col2im(y, N, H, W, K, cout, stride, pad, out_dtype):
    """Scatter-add the K*K GEMM output slabs into the transposed-conv output.

    y: (N*H*W, K*K*cout) -> (N, Ho, Wo, cout).  Pure data movement + adds
    (JAX glue); overlapping windows are accumulated in f32.
    """
    y = y.reshape(N, H, W, K, K, cout).astype(jnp.float32)
    hf = (H - 1) * stride + K
    wf = (W - 1) * stride + K
    canvas = jnp.zeros((N, hf, wf, cout), jnp.float32)
    for kh in range(K):
        for kw in range(K):
            canvas = canvas.at[
                :, kh:kh + (H - 1) * stride + 1:stride,
                kw:kw + (W - 1) * stride + 1:stride, :].add(y[:, :, :, kh, kw, :])
    ho = (H - 1) * stride - 2 * pad + K
    wo = (W - 1) * stride - 2 * pad + K
    return canvas[:, pad:pad + ho, pad:pad + wo, :].astype(out_dtype)


def _convt_block(x2d, nhw, wt, scale, shift, *, K, stride, pad,
                 apply_act, cout_pad=None, out_dtype=jnp.bfloat16):
    N, H, W = nhw
    cout = wt.shape[1]
    if cout_pad is not None and cout_pad > cout:
        wt = jnp.pad(wt, ((0, 0), (0, cout_pad - cout), (0, 0), (0, 0)))
        cout = cout_pad
    wg = _convt_weight_to_gemm(wt, K)
    y = _gemm_act(x2d, scale, shift, wg, apply_act=apply_act)
    return _col2im(y, N, H, W, K, cout, stride, pad, out_dtype)


def _bn_scale_shift(a_nhwc, gamma, beta):
    """Batch statistics (train mode) of a_nhwc -> folded per-channel scale/shift."""
    # TODO(synk): BatchNorm running-stat updates (training bookkeeping) are not
    # modeled; they do not affect the train-mode forward output reproduced here.
    N, H, W, C = a_nhwc.shape
    m = N * H * W
    x2d = a_nhwc.reshape(m, C)
    tm = _pick_row_tile(m, 1024)
    ssum, ssq = pl.pallas_call(
        _bn_stats_kernel,
        out_shape=(jax.ShapeDtypeStruct((1, C), jnp.float32),
                   jax.ShapeDtypeStruct((1, C), jnp.float32)),
        grid=(m // tm,),
        in_specs=[pl.BlockSpec((tm, C), lambda i: (i, 0))],
        out_specs=(pl.BlockSpec((1, C), lambda i: (0, 0)),
                   pl.BlockSpec((1, C), lambda i: (0, 0))),
        scratch_shapes=[pltpu.VMEM((1, C), jnp.float32),
                        pltpu.VMEM((1, C), jnp.float32)],
        compiler_params=pltpu.CompilerParams(
            dimension_semantics=("arbitrary",),
            vmem_limit_bytes=_VMEM_LIMIT),
    )(x2d)
    mean = ssum[0] / m
    var = jnp.maximum(ssq[0] / m - mean * mean, 0.0)   # population variance
    scale = gamma * lax.rsqrt(var + EPS)
    shift = beta - mean * scale
    return x2d, scale, shift


def _tanh_apply(a_nhwc, nc):
    N, H, W, C = a_nhwc.shape
    x2d = a_nhwc.reshape(N * H, W * C)        # lane-dense elementwise view
    m, L = x2d.shape
    tm = _pick_row_tile(m, 512)
    out = pl.pallas_call(
        _tanh_kernel,
        out_shape=jax.ShapeDtypeStruct((m, L), jnp.float32),
        grid=(m // tm,),
        in_specs=[pl.BlockSpec((tm, L), lambda i: (i, 0))],
        out_specs=pl.BlockSpec((tm, L), lambda i: (i, 0)),
        compiler_params=pltpu.CompilerParams(
            dimension_semantics=("parallel",),
            vmem_limit_bytes=_VMEM_LIMIT),
    )(x2d)
    return out.reshape(N, H, W, C)[:, :, :, :nc]


def generator_forward(params, noise_nchw, labels):
    """Matches Generator.forward(noise, labels) with the module in train() mode."""
    # Label embedding (tiny matmul) in plain jnp — a pallas_call here is overhead.
    emb = jnp.dot(labels, params["emb_w"]) + params["emb_b"]          # (B, nz)
    B, nz = emb.shape
    x0 = jnp.concatenate([noise_nchw.reshape(B, nz), emb], axis=-1)   # (B, 2nz)
    x0 = x0.astype(jnp.bfloat16)
    cin0 = x0.shape[1]
    one = jnp.ones((cin0,), jnp.float32)
    zero = jnp.zeros((cin0,), jnp.float32)

    # Layer 1: ConvT(2nz, 8ngf, 4, 1, 0); its BN+ReLU is folded into layer 2's GEMM.
    a1 = _convt_block(x0, (B, 1, 1), params["w1"], one, zero,
                      K=4, stride=1, pad=0, apply_act=False)          # (B,4,4,8ngf)
    x1, s1, t1 = _bn_scale_shift(a1, params["g1"], params["b1"])

    a2 = _convt_block(x1, (B, 4, 4), params["w2"], s1, t1,
                      K=4, stride=2, pad=1, apply_act=True)           # (B,8,8,4ngf)
    x2, s2, t2 = _bn_scale_shift(a2, params["g2"], params["b2"])

    a3 = _convt_block(x2, (B, 8, 8), params["w3"], s2, t2,
                      K=4, stride=2, pad=1, apply_act=True)           # (B,16,16,2ngf)
    x3, s3, t3 = _bn_scale_shift(a3, params["g3"], params["b3"])

    a4 = _convt_block(x3, (B, 16, 16), params["w4"], s3, t3,
                      K=4, stride=2, pad=1, apply_act=True)           # (B,32,32,ngf)
    x4, s4, t4 = _bn_scale_shift(a4, params["g4"], params["b4"])

    nc = params["w5"].shape[1]
    cout_pad = -(-nc // 8) * 8                                        # lane-dense GEMM
    a5 = _convt_block(x4, (B, 32, 32), params["w5"], s4, t4,
                      K=4, stride=2, pad=1, apply_act=True,
                      cout_pad=cout_pad, out_dtype=jnp.float32)       # (B,64,64,pad)
    out = _tanh_apply(a5, nc)                                         # (B,64,64,nc)
    return jnp.transpose(out, (0, 3, 1, 2))                           # back to NCHW


# ---------------------- Pure-JAX reference (NCHW, f32) ------------------------

def _ref_conv_transpose(x, wt, stride, pad, K):
    wp = jnp.transpose(jnp.flip(wt, axis=(2, 3)), (1, 0, 2, 3))   # (Cout,Cin,K,K)
    return lax.conv_general_dilated(
        x, wp, window_strides=(1, 1),
        padding=[(K - 1 - pad, K - 1 - pad)] * 2,
        lhs_dilation=(stride, stride),
        dimension_numbers=("NCHW", "OIHW", "NCHW"),
        precision=lax.Precision.HIGHEST)


def _ref_bn_relu(x, g, b):
    mean = jnp.mean(x, axis=(0, 2, 3), keepdims=True)
    var = jnp.mean((x - mean) ** 2, axis=(0, 2, 3), keepdims=True)
    y = (x - mean) * lax.rsqrt(var + EPS)
    y = y * g.reshape(1, -1, 1, 1) + b.reshape(1, -1, 1, 1)
    return jnp.maximum(y, 0.0)


def generator_reference(params, noise, labels):
    emb = jnp.dot(labels, params["emb_w"],
                  precision=lax.Precision.HIGHEST) + params["emb_b"]
    x = jnp.concatenate([noise, emb[:, :, None, None]], axis=1)
    x = _ref_bn_relu(_ref_conv_transpose(x, params["w1"], 1, 0, 4),
                     params["g1"], params["b1"])
    x = _ref_bn_relu(_ref_conv_transpose(x, params["w2"], 2, 1, 4),
                     params["g2"], params["b2"])
    x = _ref_bn_relu(_ref_conv_transpose(x, params["w3"], 2, 1, 4),
                     params["g3"], params["b3"])
    x = _ref_bn_relu(_ref_conv_transpose(x, params["w4"], 2, 1, 4),
                     params["g4"], params["b4"])
    return jnp.tanh(_ref_conv_transpose(x, params["w5"], 2, 1, 4))


# ------------------------------- Main -----------------------------------------

if __name__ == "__main__":
    B, nz, ngf, nc, num_classes = 2, 16, 8, 3, 10
    key = jax.random.PRNGKey(0)
    ks = jax.random.split(key, 16)

    def nrm(k, shape, scale=0.02):
        return scale * jax.random.normal(k, shape, dtype=jnp.float32)

    params = {
        "emb_w": nrm(ks[0], (num_classes, nz), 0.1),      # Linear weight (transposed)
        "emb_b": nrm(ks[1], (nz,), 0.1),
        "w1": nrm(ks[2], (2 * nz, ngf * 8, 4, 4)),        # ConvT (Cin, Cout, K, K)
        "g1": 1.0 + nrm(ks[3], (ngf * 8,), 0.1),
        "b1": nrm(ks[4], (ngf * 8,), 0.1),
        "w2": nrm(ks[5], (ngf * 8, ngf * 4, 4, 4)),
        "g2": 1.0 + nrm(ks[6], (ngf * 4,), 0.1),
        "b2": nrm(ks[7], (ngf * 4,), 0.1),
        "w3": nrm(ks[8], (ngf * 4, ngf * 2, 4, 4)),
        "g3": 1.0 + nrm(ks[9], (ngf * 2,), 0.1),
        "b3": nrm(ks[10], (ngf * 2,), 0.1),
        "w4": nrm(ks[11], (ngf * 2, ngf, 4, 4)),
        "g4": 1.0 + nrm(ks[12], (ngf,), 0.1),
        "b4": nrm(ks[13], (ngf,), 0.1),
        "w5": nrm(ks[14], (ngf, nc, 4, 4)),
    }

    kn, kl = jax.random.split(ks[15])
    noise = jax.random.normal(kn, (B, nz, 1, 1), dtype=jnp.float32)
    label_ids = jax.random.randint(kl, (B,), 0, num_classes)
    labels = jax.nn.one_hot(label_ids, num_classes, dtype=jnp.float32)

    out = jax.jit(generator_forward)(params, noise, labels)
    out = jax.block_until_ready(out)
    assert out.shape == (B, nc, 64, 64), out.shape
    assert out.dtype == jnp.float32

    ref = generator_reference(params, noise, labels)
    # bf16 MXU operands / bf16 intermediate activations vs an f32-HIGHEST
    # reference: allow a few 1e-2 of absolute slack on the tanh output.
    err = float(jnp.max(jnp.abs(out - ref)))
    assert err < 3e-2, err

    print("KERNEL_OK")
</pallas_src>

<mosaic_0001>
module attributes {stable_mosaic.version = 11 : i64} {
  func.func @_gemm_act_kernel(%arg0: i32, %arg1: memref<2x32xbf16, #tpu.memory_space<vmem>>, %arg2: memref<1x32xf32, #tpu.memory_space<vmem>>, %arg3: memref<1x32xf32, #tpu.memory_space<vmem>>, %arg4: memref<32x1024xbf16, #tpu.memory_space<vmem>>, %arg5: memref<2x1024xbf16, #tpu.memory_space<vmem>>) attributes {dimension_semantics = [#tpu.dimension_semantics<parallel>], iteration_bounds = array<i64: 1>, scalar_prefetch = 0 : i64, scratch_operands = 0 : i64, tpu.core_type = #tpu.core_type<tc>, window_params = [{transform_indices = @transform_0, window_bounds = array<i64: 2, 32>}, {pipeline_mode = #tpu.pipeline_mode<synchronous>, transform_indices = @transform_1, window_bounds = array<i64: 1, 32>}, {pipeline_mode = #tpu.pipeline_mode<synchronous>, transform_indices = @transform_2, window_bounds = array<i64: 1, 32>}, {pipeline_mode = #tpu.pipeline_mode<synchronous>, transform_indices = @transform_3, window_bounds = array<i64: 32, 1024>}, {transform_indices = @transform_4, window_bounds = array<i64: 2, 1024>}]} {
    %c0 = arith.constant 0 : index
    %c0_0 = arith.constant 0 : index
    %0 = vector.load %arg1[%c0, %c0_0] : memref<2x32xbf16, #tpu.memory_space<vmem>>, vector<2x32xbf16>
    %1 = arith.extf %0 : vector<2x32xbf16> to vector<2x32xf32>
    %2 = arith.truncf %1 : vector<2x32xf32> to vector<2x32xbf16>
    %c0_1 = arith.constant 0 : index
    %c0_2 = arith.constant 0 : index
    %3 = vector.load %arg4[%c0_1, %c0_2] : memref<32x1024xbf16, #tpu.memory_space<vmem>>, vector<32x1024xbf16>
    %cst = arith.constant dense<0.000000e+00> : vector<2x1024xf32>
    %4 = tpu.matmul %2, %3, %cst {dimension_numbers = #tpu.dot_dimension_numbers<[1], [0], [0], [1], [0, 0, 1, 1], [], []>} : vector<2x32xbf16>, vector<32x1024xbf16>, vector<2x1024xf32> -> vector<2x1024xf32>
    %5 = arith.truncf %4 : vector<2x1024xf32> to vector<2x1024xbf16>
    %c0_3 = arith.constant 0 : index
    %c0_4 = arith.constant 0 : index
    %6 = vector.load %arg5[%c0_3, %c0_4] : memref<2x1024xbf16, #tpu.memory_space<vmem>>, vector<2x1024xbf16>
    tpu.vector_store %arg5[%c0_3, %c0_4], %5 {strides = array<i32>} : memref<2x1024xbf16, #tpu.memory_space<vmem>>, vector<2x1024xbf16>,
    return
  }
  func.func @transform_0(%arg0: i32) -> (i32, i32) {
    %c0_i32 = arith.constant 0 : i32
    %c0_i32_0 = arith.constant 0 : i32
    return %arg0, %c0_i32 : i32, i32
  }
  func.func @transform_1(%arg0: i32) -> (i32, i32) {
    %c0_i32 = arith.constant 0 : i32
    %c0_i32_0 = arith.constant 0 : i32
    %c0_i32_1 = arith.constant 0 : i32
    return %c0_i32, %c0_i32_0 : i32, i32
  }
  func.func @transform_2(%arg0: i32) -> (i32, i32) {
    %c0_i32 = arith.constant 0 : i32
    %c0_i32_0 = arith.constant 0 : i32
    %c0_i32_1 = arith.constant 0 : i32
    return %c0_i32, %c0_i32_0 : i32, i32
  }
  func.func @transform_3(%arg0: i32) -> (i32, i32) {
    %c0_i32 = arith.constant 0 : i32
    %c0_i32_0 = arith.constant 0 : i32
    %c0_i32_1 = arith.constant 0 : i32
    return %c0_i32, %c0_i32_0 : i32, i32
  }
  func.func @transform_4(%arg0: i32) -> (i32, i32) {
    %c0_i32 = arith.constant 0 : i32
    %c0_i32_0 = arith.constant 0 : i32
    return %arg0, %c0_i32 : i32, i32
  }
}

module attributes {stable_mosaic.version = 11 : i64} {
  func.func @_bn_stats_kernel(%arg0: i32, %arg1: memref<32x64xbf16, #tpu.memory_space<vmem>>, %arg2: memref<1x64xf32, #tpu.memory_space<vmem>>, %arg3: memref<1x64xf32, #tpu.memory_space<vmem>>, %arg4: memref<1x64xf32, #tpu.memory_space<vmem>>, %arg5: memref<1x64xf32, #tpu.memory_space<vmem>>) attributes {dimension_semantics = [#tpu.dimension_semantics<arbitrary>], iteration_bounds = array<i64: 1>, scalar_prefetch = 0 : i64, scratch_operands = 2 : i64, tpu.core_type = #tpu.core_type<tc>, window_params = [{transform_indices = @transform_0, window_bounds = array<i64: 32, 64>}, {pipeline_mode = #tpu.pipeline_mode<synchronous>, transform_indices = @transform_1, window_bounds = array<i64: 1, 64>}, {pipeline_mode = #tpu.pipeline_mode<synchronous>, transform_indices = @transform_2, window_bounds = array<i64: 1, 64>}]} {
    %c0_i32 = arith.constant 0 : i32
    %0 = arith.cmpi eq, %arg0, %c0_i32 : i32
    %1 = arith.extui %0 : i1 to i32
    %c0_i32_0 = arith.constant 0 : i32
    %2 = arith.cmpi ne, %1, %c0_i32_0 : i32
    scf.if %2 {
      %cst_13 = arith.constant 0.000000e+00 : f32
      %19 = vector.broadcast %cst_13 : f32 to vector<1x64xf32>
      %c0_14 = arith.constant 0 : index
      %c0_15 = arith.constant 0 : index
      %20 = vector.load %arg4[%c0_14, %c0_15] : memref<1x64xf32, #tpu.memory_space<vmem>>, vector<1x64xf32>
      tpu.vector_store %arg4[%c0_14, %c0_15], %19 {strides = array<i32>} : memref<1x64xf32, #tpu.memory_space<vmem>>, vector<1x64xf32>,
      %cst_16 = arith.constant 0.000000e+00 : f32
      %21 = vector.broadcast %cst_16 : f32 to vector<1x64xf32>
      %c0_17 = arith.constant 0 : index
      %c0_18 = arith.constant 0 : index
      %22 = vector.load %arg5[%c0_17, %c0_18] : memref<1x64xf32, #tpu.memory_space<vmem>>, vector<1x64xf32>
      tpu.vector_store %arg5[%c0_17, %c0_18], %21 {strides = array<i32>} : memref<1x64xf32, #tpu.memory_space<vmem>>, vector<1x64xf32>,
    } else {
    }
    %c0 = arith.constant 0 : index
    %c0_1 = arith.constant 0 : index
    %3 = vector.load %arg1[%c0, %c0_1] : memref<32x64xbf16, #tpu.memory_space<vmem>>, vector<32x64xbf16>
    %4 = arith.extf %3 : vector<32x64xbf16> to vector<32x64xf32>
    %c0_2 = arith.constant 0 : index
    %c0_3 = arith.constant 0 : index
    %5 = vector.load %arg4[%c0_2, %c0_3] : memref<1x64xf32, #tpu.memory_space<vmem>>, vector<1x64xf32>
    %cst = arith.constant dense<0.000000e+00> : vector<64xf32>
    %6 = vector.multi_reduction <add>, %4, %cst [0] : vector<32x64xf32> to vector<64xf32>
    %7 = vector.shape_cast %6 : vector<64xf32> to vector<1x64xf32>
    %8 = arith.addf %5, %7 : vector<1x64xf32>
    %c0_4 = arith.constant 0 : index
    %c0_5 = arith.constant 0 : index
    %9 = vector.load %arg4[%c0_4, %c0_5] : memref<1x64xf32, #tpu.memory_space<vmem>>, vector<1x64xf32>
    tpu.vector_store %arg4[%c0_4, %c0_5], %8 {strides = array<i32>} : memref<1x64xf32, #tpu.memory_space<vmem>>, vector<1x64xf32>,
    %c0_6 = arith.constant 0 : index
    %c0_7 = arith.constant 0 : index
    %10 = vector.load %arg5[%c0_6, %c0_7] : memref<1x64xf32, #tpu.memory_space<vmem>>, vector<1x64xf32>
    %11 = arith.mulf %4, %4 : vector<32x64xf32>
    %cst_8 = arith.constant dense<0.000000e+00> : vector<64xf32>
    %12 = vector.multi_reduction <add>, %11, %cst_8 [0] : vector<32x64xf32> to vector<64xf32>
    %13 = vector.shape_cast %12 : vector<64xf32> to vector<1x64xf32>
    %14 = arith.addf %10, %13 : vector<1x64xf32>
    %c0_9 = arith.constant 0 : index
    %c0_10 = arith.constant 0 : index
    %15 = vector.load %arg5[%c0_9, %c0_10] : memref<1x64xf32, #tpu.memory_space<vmem>>, vector<1x64xf32>
    tpu.vector_store %arg5[%c0_9, %c0_10], %14 {strides = array<i32>} : memref<1x64xf32, #tpu.memory_space<vmem>>, vector<1x64xf32>,
    %c0_i32_11 = arith.constant 0 : i32
    %16 = arith.cmpi eq, %arg0, %c0_i32_11 : i32
    %17 = arith.extui %16 : i1 to i32
    %c0_i32_12 = arith.constant 0 : i32
    %18 = arith.cmpi ne, %17, %c0_i32_12 : i32
    scf.if %18 {
      %c0_13 = arith.constant 0 : index
      %c0_14 = arith.constant 0 : index
      %19 = vector.load %arg4[%c0_13, %c0_14] : memref<1x64xf32, #tpu.memory_space<vmem>>, vector<1x64xf32>
      %c0_15 = arith.constant 0 : index
      %c0_16 = arith.constant 0 : index
      %20 = vector.load %arg2[%c0_15, %c0_16] : memref<1x64xf32, #tpu.memory_space<vmem>>, vector<1x64xf32>
      tpu.vector_store %arg2[%c0_15, %c0_16], %19 {strides = array<i32>} : memref<1x64xf32, #tpu.memory_space<vmem>>, vector<1x64xf32>,
      %c0_17 = arith.constant 0 : index
      %c0_18 = arith.constant 0 : index
      %21 = vector.load %arg5[%c0_17, %c0_18] : memref<1x64xf32, #tpu.memory_space<vmem>>, vector<1x64xf32>
      %c0_19 = arith.constant 0 : index
      %c0_20 = arith.constant 0 : index
      %22 = vector.load %arg3[%c0_19, %c0_20] : memref<1x64xf32, #tpu.memory_space<vmem>>, vector<1x64xf32>
      tpu.vector_store %arg3[%c0_19, %c0_20], %21 {strides = array<i32>} : memref<1x64xf32, #tpu.memory_space<vmem>>, vector<1x64xf32>,
    } else {
    }
    return
  }
  func.func @transform_0(%arg0: i32) -> (i32, i32) {
    %c0_i32 = arith.constant 0 : i32
    %c0_i32_0 = arith.constant 0 : i32
    return %arg0, %c0_i32 : i32, i32
  }
  func.func @transform_1(%arg0: i32) -> (i32, i32) {
    %c0_i32 = arith.constant 0 : i32
    %c0_i32_0 = arith.constant 0 : i32
    %c0_i32_1 = arith.constant 0 : i32
    return %c0_i32, %c0_i32_0 : i32, i32
  }
  func.func @transform_2(%arg0: i32) -> (i32, i32) {
    %c0_i32 = arith.constant 0 : i32
    %c0_i32_0 = arith.constant 0 : i32
    %c0_i32_1 = arith.constant 0 : i32
    return %c0_i32, %c0_i32_0 : i32, i32
  }
}

module attributes {stable_mosaic.version = 11 : i64} {
  func.func @_gemm_act_kernel(%arg0: i32, %arg1: memref<32x64xbf16, #tpu.memory_space<vmem>>, %arg2: memref<1x64xf32, #tpu.memory_space<vmem>>, %arg3: memref<1x64xf32, #tpu.memory_space<vmem>>, %arg4: memref<64x512xbf16, #tpu.memory_space<vmem>>, %arg5: memref<32x512xbf16, #tpu.memory_space<vmem>>) attributes {dimension_semantics = [#tpu.dimension_semantics<parallel>], iteration_bounds = array<i64: 1>, scalar_prefetch = 0 : i64, scratch_operands = 0 : i64, tpu.core_type = #tpu.core_type<tc>, window_params = [{transform_indices = @transform_0, window_bounds = array<i64: 32, 64>}, {pipeline_mode = #tpu.pipeline_mode<synchronous>, transform_indices = @transform_1, window_bounds = array<i64: 1, 64>}, {pipeline_mode = #tpu.pipeline_mode<synchronous>, transform_indices = @transform_2, window_bounds = array<i64: 1, 64>}, {pipeline_mode = #tpu.pipeline_mode<synchronous>, transform_indices = @transform_3, window_bounds = array<i64: 64, 512>}, {transform_indices = @transform_4, window_bounds = array<i64: 32, 512>}]} {
    %c0 = arith.constant 0 : index
    %c0_0 = arith.constant 0 : index
    %0 = vector.load %arg1[%c0, %c0_0] : memref<32x64xbf16, #tpu.memory_space<vmem>>, vector<32x64xbf16>
    %1 = arith.extf %0 : vector<32x64xbf16> to vector<32x64xf32>
    %c0_1 = arith.constant 0 : index
    %c0_2 = arith.constant 0 : index
    %2 = vector.load %arg2[%c0_1, %c0_2] : memref<1x64xf32, #tpu.memory_space<vmem>>, vector<1x64xf32>
    %3 = vector.broadcast %2 : vector<1x64xf32> to vector<32x64xf32>
    %4 = arith.mulf %1, %3 : vector<32x64xf32>
    %c0_3 = arith.constant 0 : index
    %c0_4 = arith.constant 0 : index
    %5 = vector.load %arg3[%c0_3, %c0_4] : memref<1x64xf32, #tpu.memory_space<vmem>>, vector<1x64xf32>
    %6 = vector.broadcast %5 : vector<1x64xf32> to vector<32x64xf32>
    %7 = arith.addf %4, %6 : vector<32x64xf32>
    %cst = arith.constant 0.000000e+00 : f32
    %8 = vector.broadcast %cst : f32 to vector<32x64xf32>
    %9 = arith.maximumf %7, %8 : vector<32x64xf32>
    %10 = arith.truncf %9 : vector<32x64xf32> to vector<32x64xbf16>
    %c0_5 = arith.constant 0 : index
    %c0_6 = arith.constant 0 : index
    %11 = vector.load %arg4[%c0_5, %c0_6] : memref<64x512xbf16, #tpu.memory_space<vmem>>, vector<64x512xbf16>
    %cst_7 = arith.constant dense<0.000000e+00> : vector<32x512xf32>
    %12 = tpu.matmul %10, %11, %cst_7 {dimension_numbers = #tpu.dot_dimension_numbers<[1], [0], [0], [1], [0, 0, 1, 1], [], []>} : vector<32x64xbf16>, vector<64x512xbf16>, vector<32x512xf32> -> vector<32x512xf32>
    %13 = arith.truncf %12 : vector<32x512xf32> to vector<32x512xbf16>
    %c0_8 = arith.constant 0 : index
    %c0_9 = arith.constant 0 : index
    %14 = vector.load %arg5[%c0_8, %c0_9] : memref<32x512xbf16, #tpu.memory_space<vmem>>, vector<32x512xbf16>
    tpu.vector_store %arg5[%c0_8, %c0_9], %13 {strides = array<i32>} : memref<32x512xbf16, #tpu.memory_space<vmem>>, vector<32x512xbf16>,
    return
  }
  func.func @transform_0(%arg0: i32) -> (i32, i32) {
    %c0_i32 = arith.constant 0 : i32
    %c0_i32_0 = arith.constant 0 : i32
    return %arg0, %c0_i32 : i32, i32
  }
  func.func @transform_1(%arg0: i32) -> (i32, i32) {
    %c0_i32 = arith.constant 0 : i32
    %c0_i32_0 = arith.constant 0 : i32
    %c0_i32_1 = arith.constant 0 : i32
    return %c0_i32, %c0_i32_0 : i32, i32
  }
  func.func @transform_2(%arg0: i32) -> (i32, i32) {
    %c0_i32 = arith.constant 0 : i32
    %c0_i32_0 = arith.constant 0 : i32
    %c0_i32_1 = arith.constant 0 : i32
    return %c0_i32, %c0_i32_0 : i32, i32
  }
  func.func @transform_3(%arg0: i32) -> (i32, i32) {
    %c0_i32 = arith.constant 0 : i32
    %c0_i32_0 = arith.constant 0 : i32
    %c0_i32_1 = arith.constant 0 : i32
    return %c0_i32, %c0_i32_0 : i32, i32
  }
  func.func @transform_4(%arg0: i32) -> (i32, i32) {
    %c0_i32 = arith.constant 0 : i32
    %c0_i32_0 = arith.constant 0 : i32
    return %arg0, %c0_i32 : i32, i32
  }
}

module attributes {stable_mosaic.version = 11 : i64} {
  func.func @_bn_stats_kernel(%arg0: i32, %arg1: memref<128x32xbf16, #tpu.memory_space<vmem>>, %arg2: memref<1x32xf32, #tpu.memory_space<vmem>>, %arg3: memref<1x32xf32, #tpu.memory_space<vmem>>, %arg4: memref<1x32xf32, #tpu.memory_space<vmem>>, %arg5: memref<1x32xf32, #tpu.memory_space<vmem>>) attributes {dimension_semantics = [#tpu.dimension_semantics<arbitrary>], iteration_bounds = array<i64: 1>, scalar_prefetch = 0 : i64, scratch_operands = 2 : i64, tpu.core_type = #tpu.core_type<tc>, window_params = [{transform_indices = @transform_0, window_bounds = array<i64: 128, 32>}, {pipeline_mode = #tpu.pipeline_mode<synchronous>, transform_indices = @transform_1, window_bounds = array<i64: 1, 32>}, {pipeline_mode = #tpu.pipeline_mode<synchronous>, transform_indices = @transform_2, window_bounds = array<i64: 1, 32>}]} {
    %c0_i32 = arith.constant 0 : i32
    %0 = arith.cmpi eq, %arg0, %c0_i32 : i32
    %1 = arith.extui %0 : i1 to i32
    %c0_i32_0 = arith.constant 0 : i32
    %2 = arith.cmpi ne, %1, %c0_i32_0 : i32
    scf.if %2 {
      %cst_13 = arith.constant 0.000000e+00 : f32
      %19 = vector.broadcast %cst_13 : f32 to vector<1x32xf32>
      %c0_14 = arith.constant 0 : index
      %c0_15 = arith.constant 0 : index
      %20 = vector.load %arg4[%c0_14, %c0_15] : memref<1x32xf32, #tpu.memory_space<vmem>>, vector<1x32xf32>
      tpu.vector_store %arg4[%c0_14, %c0_15], %19 {strides = array<i32>} : memref<1x32xf32, #tpu.memory_space<vmem>>, vector<1x32xf32>,
      %cst_16 = arith.constant 0.000000e+00 : f32
      %21 = vector.broadcast %cst_16 : f32 to vector<1x32xf32>
      %c0_17 = arith.constant 0 : index
      %c0_18 = arith.constant 0 : index
      %22 = vector.load %arg5[%c0_17, %c0_18] : memref<1x32xf32, #tpu.memory_space<vmem>>, vector<1x32xf32>
      tpu.vector_store %arg5[%c0_17, %c0_18], %21 {strides = array<i32>} : memref<1x32xf32, #tpu.memory_space<vmem>>, vector<1x32xf32>,
    } else {
    }
    %c0 = arith.constant 0 : index
    %c0_1 = arith.constant 0 : index
    %3 = vector.load %arg1[%c0, %c0_1] : memref<128x32xbf16, #tpu.memory_space<vmem>>, vector<128x32xbf16>
    %4 = arith.extf %3 : vector<128x32xbf16> to vector<128x32xf32>
    %c0_2 = arith.constant 0 : index
    %c0_3 = arith.constant 0 : index
    %5 = vector.load %arg4[%c0_2, %c0_3] : memref<1x32xf32, #tpu.memory_space<vmem>>, vector<1x32xf32>
    %cst = arith.constant dense<0.000000e+00> : vector<32xf32>
    %6 = vector.multi_reduction <add>, %4, %cst [0] : vector<128x32xf32> to vector<32xf32>
    %7 = vector.shape_cast %6 : vector<32xf32> to vector<1x32xf32>
    %8 = arith.addf %5, %7 : vector<1x32xf32>
    %c0_4 = arith.constant 0 : index
    %c0_5 = arith.constant 0 : index
    %9 = vector.load %arg4[%c0_4, %c0_5] : memref<1x32xf32, #tpu.memory_space<vmem>>, vector<1x32xf32>
    tpu.vector_store %arg4[%c0_4, %c0_5], %8 {strides = array<i32>} : memref<1x32xf32, #tpu.memory_space<vmem>>, vector<1x32xf32>,
    %c0_6 = arith.constant 0 : index
    %c0_7 = arith.constant 0 : index
    %10 = vector.load %arg5[%c0_6, %c0_7] : memref<1x32xf32, #tpu.memory_space<vmem>>, vector<1x32xf32>
    %11 = arith.mulf %4, %4 : vector<128x32xf32>
    %cst_8 = arith.constant dense<0.000000e+00> : vector<32xf32>
    %12 = vector.multi_reduction <add>, %11, %cst_8 [0] : vector<128x32xf32> to vector<32xf32>
    %13 = vector.shape_cast %12 : vector<32xf32> to vector<1x32xf32>
    %14 = arith.addf %10, %13 : vector<1x32xf32>
    %c0_9 = arith.constant 0 : index
    %c0_10 = arith.constant 0 : index
    %15 = vector.load %arg5[%c0_9, %c0_10] : memref<1x32xf32, #tpu.memory_space<vmem>>, vector<1x32xf32>
    tpu.vector_store %arg5[%c0_9, %c0_10], %14 {strides = array<i32>} : memref<1x32xf32, #tpu.memory_space<vmem>>, vector<1x32xf32>,
    %c0_i32_11 = arith.constant 0 : i32
    %16 = arith.cmpi eq, %arg0, %c0_i32_11 : i32
    %17 = arith.extui %16 : i1 to i32
    %c0_i32_12 = arith.constant 0 : i32
    %18 = arith.cmpi ne, %17, %c0_i32_12 : i32
    scf.if %18 {
      %c0_13 = arith.constant 0 : index
      %c0_14 = arith.constant 0 : index
      %19 = vector.load %arg4[%c0_13, %c0_14] : memref<1x32xf32, #tpu.memory_space<vmem>>, vector<1x32xf32>
      %c0_15 = arith.constant 0 : index
      %c0_16 = arith.constant 0 : index
      %20 = vector.load %arg2[%c0_15, %c0_16] : memref<1x32xf32, #tpu.memory_space<vmem>>, vector<1x32xf32>
      tpu.vector_store %arg2[%c0_15, %c0_16], %19 {strides = array<i32>} : memref<1x32xf32, #tpu.memory_space<vmem>>, vector<1x32xf32>,
      %c0_17 = arith.constant 0 : index
      %c0_18 = arith.constant 0 : index
      %21 = vector.load %arg5[%c0_17, %c0_18] : memref<1x32xf32, #tpu.memory_space<vmem>>, vector<1x32xf32>
      %c0_19 = arith.constant 0 : index
      %c0_20 = arith.constant 0 : index
      %22 = vector.load %arg3[%c0_19, %c0_20] : memref<1x32xf32, #tpu.memory_space<vmem>>, vector<1x32xf32>
      tpu.vector_store %arg3[%c0_19, %c0_20], %21 {strides = array<i32>} : memref<1x32xf32, #tpu.memory_space<vmem>>, vector<1x32xf32>,
    } else {
    }
    return
  }
  func.func @transform_0(%arg0: i32) -> (i32, i32) {
    %c0_i32 = arith.constant 0 : i32
    %c0_i32_0 = arith.constant 0 : i32
    return %arg0, %c0_i32 : i32, i32
  }
  func.func @transform_1(%arg0: i32) -> (i32, i32) {
    %c0_i32 = arith.constant 0 : i32
    %c0_i32_0 = arith.constant 0 : i32
    %c0_i32_1 = arith.constant 0 : i32
    return %c0_i32, %c0_i32_0 : i32, i32
  }
  func.func @transform_2(%arg0: i32) -> (i32, i32) {
    %c0_i32 = arith.constant 0 : i32
    %c0_i32_0 = arith.constant 0 : i32
    %c0_i32_1 = arith.constant 0 : i32
    return %c0_i32, %c0_i32_0 : i32, i32
  }
}

module attributes {stable_mosaic.version = 11 : i64} {
  func.func @_gemm_act_kernel(%arg0: i32, %arg1: memref<128x32xbf16, #tpu.memory_space<vmem>>, %arg2: memref<1x32xf32, #tpu.memory_space<vmem>>, %arg3: memref<1x32xf32, #tpu.memory_space<vmem>>, %arg4: memref<32x256xbf16, #tpu.memory_space<vmem>>, %arg5: memref<128x256xbf16, #tpu.memory_space<vmem>>) attributes {dimension_semantics = [#tpu.dimension_semantics<parallel>], iteration_bounds = array<i64: 1>, scalar_prefetch = 0 : i64, scratch_operands = 0 : i64, tpu.core_type = #tpu.core_type<tc>, window_params = [{transform_indices = @transform_0, window_bounds = array<i64: 128, 32>}, {pipeline_mode = #tpu.pipeline_mode<synchronous>, transform_indices = @transform_1, window_bounds = array<i64: 1, 32>}, {pipeline_mode = #tpu.pipeline_mode<synchronous>, transform_indices = @transform_2, window_bounds = array<i64: 1, 32>}, {pipeline_mode = #tpu.pipeline_mode<synchronous>, transform_indices = @transform_3, window_bounds = array<i64: 32, 256>}, {transform_indices = @transform_4, window_bounds = array<i64: 128, 256>}]} {
    %c0 = arith.constant 0 : index
    %c0_0 = arith.constant 0 : index
    %0 = vector.load %arg1[%c0, %c0_0] : memref<128x32xbf16, #tpu.memory_space<vmem>>, vector<128x32xbf16>
    %1 = arith.extf %0 : vector<128x32xbf16> to vector<128x32xf32>
    %c0_1 = arith.constant 0 : index
    %c0_2 = arith.constant 0 : index
    %2 = vector.load %arg2[%c0_1, %c0_2] : memref<1x32xf32, #tpu.memory_space<vmem>>, vector<1x32xf32>
    %3 = vector.broadcast %2 : vector<1x32xf32> to vector<128x32xf32>
    %4 = arith.mulf %1, %3 : vector<128x32xf32>
    %c0_3 = arith.constant 0 : index
    %c0_4 = arith.constant 0 : index
    %5 = vector.load %arg3[%c0_3, %c0_4] : memref<1x32xf32, #tpu.memory_space<vmem>>, vector<1x32xf32>
    %6 = vector.broadcast %5 : vector<1x32xf32> to vector<128x32xf32>
    %7 = arith.addf %4, %6 : vector<128x32xf32>
    %cst = arith.constant 0.000000e+00 : f32
    %8 = vector.broadcast %cst : f32 to vector<128x32xf32>
    %9 = arith.maximumf %7, %8 : vector<128x32xf32>
    %10 = arith.truncf %9 : vector<128x32xf32> to vector<128x32xbf16>
    %c0_5 = arith.constant 0 : index
    %c0_6 = arith.constant 0 : index
    %11 = vector.load %arg4[%c0_5, %c0_6] : memref<32x256xbf16, #tpu.memory_space<vmem>>, vector<32x256xbf16>
    %cst_7 = arith.constant dense<0.000000e+00> : vector<128x256xf32>
    %12 = tpu.matmul %10, %11, %cst_7 {dimension_numbers = #tpu.dot_dimension_numbers<[1], [0], [0], [1], [0, 0, 1, 1], [], []>} : vector<128x32xbf16>, vector<32x256xbf16>, vector<128x256xf32> -> vector<128x256xf32>
    %13 = arith.truncf %12 : vector<128x256xf32> to vector<128x256xbf16>
    %c0_8 = arith.constant 0 : index
    %c0_9 = arith.constant 0 : index
    %14 = vector.load %arg5[%c0_8, %c0_9] : memref<128x256xbf16, #tpu.memory_space<vmem>>, vector<128x256xbf16>
    tpu.vector_store %arg5[%c0_8, %c0_9], %13 {strides = array<i32>} : memref<128x256xbf16, #tpu.memory_space<vmem>>, vector<128x256xbf16>,
    return
  }
  func.func @transform_0(%arg0: i32) -> (i32, i32) {
    %c0_i32 = arith.constant 0 : i32
    %c0_i32_0 = arith.constant 0 : i32
    return %arg0, %c0_i32 : i32, i32
  }
  func.func @transform_1(%arg0: i32) -> (i32, i32) {
    %c0_i32 = arith.constant 0 : i32
    %c0_i32_0 = arith.constant 0 : i32
    %c0_i32_1 = arith.constant 0 : i32
    return %c0_i32, %c0_i32_0 : i32, i32
  }
  func.func @transform_2(%arg0: i32) -> (i32, i32) {
    %c0_i32 = arith.constant 0 : i32
    %c0_i32_0 = arith.constant 0 : i32
    %c0_i32_1 = arith.constant 0 : i32
    return %c0_i32, %c0_i32_0 : i32, i32
  }
  func.func @transform_3(%arg0: i32) -> (i32, i32) {
    %c0_i32 = arith.constant 0 : i32
    %c0_i32_0 = arith.constant 0 : i32
    %c0_i32_1 = arith.constant 0 : i32
    return %c0_i32, %c0_i32_0 : i32, i32
  }
  func.func @transform_4(%arg0: i32) -> (i32, i32) {
    %c0_i32 = arith.constant 0 : i32
    %c0_i32_0 = arith.constant 0 : i32
    return %arg0, %c0_i32 : i32, i32
  }
}

module attributes {stable_mosaic.version = 11 : i64} {
  func.func @_bn_stats_kernel(%arg0: i32, %arg1: memref<512x16xbf16, #tpu.memory_space<vmem>>, %arg2: memref<1x16xf32, #tpu.memory_space<vmem>>, %arg3: memref<1x16xf32, #tpu.memory_space<vmem>>, %arg4: memref<1x16xf32, #tpu.memory_space<vmem>>, %arg5: memref<1x16xf32, #tpu.memory_space<vmem>>) attributes {dimension_semantics = [#tpu.dimension_semantics<arbitrary>], iteration_bounds = array<i64: 1>, scalar_prefetch = 0 : i64, scratch_operands = 2 : i64, tpu.core_type = #tpu.core_type<tc>, window_params = [{transform_indices = @transform_0, window_bounds = array<i64: 512, 16>}, {pipeline_mode = #tpu.pipeline_mode<synchronous>, transform_indices = @transform_1, window_bounds = array<i64: 1, 16>}, {pipeline_mode = #tpu.pipeline_mode<synchronous>, transform_indices = @transform_2, window_bounds = array<i64: 1, 16>}]} {
    %c0_i32 = arith.constant 0 : i32
    %0 = arith.cmpi eq, %arg0, %c0_i32 : i32
    %1 = arith.extui %0 : i1 to i32
    %c0_i32_0 = arith.constant 0 : i32
    %2 = arith.cmpi ne, %1, %c0_i32_0 : i32
    scf.if %2 {
      %cst_13 = arith.constant 0.000000e+00 : f32
      %19 = vector.broadcast %cst_13 : f32 to vector<1x16xf32>
      %c0_14 = arith.constant 0 : index
      %c0_15 = arith.constant 0 : index
      %20 = vector.load %arg4[%c0_14, %c0_15] : memref<1x16xf32, #tpu.memory_space<vmem>>, vector<1x16xf32>
      tpu.vector_store %arg4[%c0_14, %c0_15], %19 {strides = array<i32>} : memref<1x16xf32, #tpu.memory_space<vmem>>, vector<1x16xf32>,
      %cst_16 = arith.constant 0.000000e+00 : f32
      %21 = vector.broadcast %cst_16 : f32 to vector<1x16xf32>
      %c0_17 = arith.constant 0 : index
      %c0_18 = arith.constant 0 : index
      %22 = vector.load %arg5[%c0_17, %c0_18] : memref<1x16xf32, #tpu.memory_space<vmem>>, vector<1x16xf32>
      tpu.vector_store %arg5[%c0_17, %c0_18], %21 {strides = array<i32>} : memref<1x16xf32, #tpu.memory_space<vmem>>, vector<1x16xf32>,
    } else {
    }
    %c0 = arith.constant 0 : index
    %c0_1 = arith.constant 0 : index
    %3 = vector.load %arg1[%c0, %c0_1] : memref<512x16xbf16, #tpu.memory_space<vmem>>, vector<512x16xbf16>
    %4 = arith.extf %3 : vector<512x16xbf16> to vector<512x16xf32>
    %c0_2 = arith.constant 0 : index
    %c0_3 = arith.constant 0 : index
    %5 = vector.load %arg4[%c0_2, %c0_3] : memref<1x16xf32, #tpu.memory_space<vmem>>, vector<1x16xf32>
    %cst = arith.constant dense<0.000000e+00> : vector<16xf32>
    %6 = vector.multi_reduction <add>, %4, %cst [0] : vector<512x16xf32> to vector<16xf32>
    %7 = vector.shape_cast %6 : vector<16xf32> to vector<1x16xf32>
    %8 = arith.addf %5, %7 : vector<1x16xf32>
    %c0_4 = arith.constant 0 : index
    %c0_5 = arith.constant 0 : index
    %9 = vector.load %arg4[%c0_4, %c0_5] : memref<1x16xf32, #tpu.memory_space<vmem>>, vector<1x16xf32>
    tpu.vector_store %arg4[%c0_4, %c0_5], %8 {strides = array<i32>} : memref<1x16xf32, #tpu.memory_space<vmem>>, vector<1x16xf32>,
    %c0_6 = arith.constant 0 : index
    %c0_7 = arith.constant 0 : index
    %10 = vector.load %arg5[%c0_6, %c0_7] : memref<1x16xf32, #tpu.memory_space<vmem>>, vector<1x16xf32>
    %11 = arith.mulf %4, %4 : vector<512x16xf32>
    %cst_8 = arith.constant dense<0.000000e+00> : vector<16xf32>
    %12 = vector.multi_reduction <add>, %11, %cst_8 [0] : vector<512x16xf32> to vector<16xf32>
    %13 = vector.shape_cast %12 : vector<16xf32> to vector<1x16xf32>
    %14 = arith.addf %10, %13 : vector<1x16xf32>
    %c0_9 = arith.constant 0 : index
    %c0_10 = arith.constant 0 : index
    %15 = vector.load %arg5[%c0_9, %c0_10] : memref<1x16xf32, #tpu.memory_space<vmem>>, vector<1x16xf32>
    tpu.vector_store %arg5[%c0_9, %c0_10], %14 {strides = array<i32>} : memref<1x16xf32, #tpu.memory_space<vmem>>, vector<1x16xf32>,
    %c0_i32_11 = arith.constant 0 : i32
    %16 = arith.cmpi eq, %arg0, %c0_i32_11 : i32
    %17 = arith.extui %16 : i1 to i32
    %c0_i32_12 = arith.constant 0 : i32
    %18 = arith.cmpi ne, %17, %c0_i32_12 : i32
    scf.if %18 {
      %c0_13 = arith.constant 0 : index
      %c0_14 = arith.constant 0 : index
      %19 = vector.load %arg4[%c0_13, %c0_14] : memref<1x16xf32, #tpu.memory_space<vmem>>, vector<1x16xf32>
      %c0_15 = arith.constant 0 : index
      %c0_16 = arith.constant 0 : index
      %20 = vector.load %arg2[%c0_15, %c0_16] : memref<1x16xf32, #tpu.memory_space<vmem>>, vector<1x16xf32>
      tpu.vector_store %arg2[%c0_15, %c0_16], %19 {strides = array<i32>} : memref<1x16xf32, #tpu.memory_space<vmem>>, vector<1x16xf32>,
      %c0_17 = arith.constant 0 : index
      %c0_18 = arith.constant 0 : index
      %21 = vector.load %arg5[%c0_17, %c0_18] : memref<1x16xf32, #tpu.memory_space<vmem>>, vector<1x16xf32>
      %c0_19 = arith.constant 0 : index
      %c0_20 = arith.constant 0 : index
      %22 = vector.load %arg3[%c0_19, %c0_20] : memref<1x16xf32, #tpu.memory_space<vmem>>, vector<1x16xf32>
      tpu.vector_store %arg3[%c0_19, %c0_20], %21 {strides = array<i32>} : memref<1x16xf32, #tpu.memory_space<vmem>>, vector<1x16xf32>,
    } else {
    }
    return
  }
  func.func @transform_0(%arg0: i32) -> (i32, i32) {
    %c0_i32 = arith.constant 0 : i32
    %c0_i32_0 = arith.constant 0 : i32
    return %arg0, %c0_i32 : i32, i32
  }
  func.func @transform_1(%arg0: i32) -> (i32, i32) {
    %c0_i32 = arith.constant 0 : i32
    %c0_i32_0 = arith.constant 0 : i32
    %c0_i32_1 = arith.constant 0 : i32
    return %c0_i32, %c0_i32_0 : i32, i32
  }
  func.func @transform_2(%arg0: i32) -> (i32, i32) {
    %c0_i32 = arith.constant 0 : i32
    %c0_i32_0 = arith.constant 0 : i32
    %c0_i32_1 = arith.constant 0 : i32
    return %c0_i32, %c0_i32_0 : i32, i32
  }
}

module attributes {stable_mosaic.version = 11 : i64} {
  func.func @_gemm_act_kernel(%arg0: i32, %arg1: memref<512x16xbf16, #tpu.memory_space<vmem>>, %arg2: memref<1x16xf32, #tpu.memory_space<vmem>>, %arg3: memref<1x16xf32, #tpu.memory_space<vmem>>, %arg4: memref<16x128xbf16, #tpu.memory_space<vmem>>, %arg5: memref<512x128xbf16, #tpu.memory_space<vmem>>) attributes {dimension_semantics = [#tpu.dimension_semantics<parallel>], iteration_bounds = array<i64: 1>, scalar_prefetch = 0 : i64, scratch_operands = 0 : i64, tpu.core_type = #tpu.core_type<tc>, window_params = [{transform_indices = @transform_0, window_bounds = array<i64: 512, 16>}, {pipeline_mode = #tpu.pipeline_mode<synchronous>, transform_indices = @transform_1, window_bounds = array<i64: 1, 16>}, {pipeline_mode = #tpu.pipeline_mode<synchronous>, transform_indices = @transform_2, window_bounds = array<i64: 1, 16>}, {pipeline_mode = #tpu.pipeline_mode<synchronous>, transform_indices = @transform_3, window_bounds = array<i64: 16, 128>}, {transform_indices = @transform_4, window_bounds = array<i64: 512, 128>}]} {
    %c0 = arith.constant 0 : index
    %c0_0 = arith.constant 0 : index
    %0 = vector.load %arg1[%c0, %c0_0] : memref<512x16xbf16, #tpu.memory_space<vmem>>, vector<512x16xbf16>
    %1 = arith.extf %0 : vector<512x16xbf16> to vector<512x16xf32>
    %c0_1 = arith.constant 0 : index
    %c0_2 = arith.constant 0 : index
    %2 = vector.load %arg2[%c0_1, %c0_2] : memref<1x16xf32, #tpu.memory_space<vmem>>, vector<1x16xf32>
    %3 = vector.broadcast %2 : vector<1x16xf32> to vector<512x16xf32>
    %4 = arith.mulf %1, %3 : vector<512x16xf32>
    %c0_3 = arith.constant 0 : index
    %c0_4 = arith.constant 0 : index
    %5 = vector.load %arg3[%c0_3, %c0_4] : memref<1x16xf32, #tpu.memory_space<vmem>>, vector<1x16xf32>
    %6 = vector.broadcast %5 : vector<1x16xf32> to vector<512x16xf32>
    %7 = arith.addf %4, %6 : vector<512x16xf32>
    %cst = arith.constant 0.000000e+00 : f32
    %8 = vector.broadcast %cst : f32 to vector<512x16xf32>
    %9 = arith.maximumf %7, %8 : vector<512x16xf32>
    %10 = arith.truncf %9 : vector<512x16xf32> to vector<512x16xbf16>
    %c0_5 = arith.constant 0 : index
    %c0_6 = arith.constant 0 : index
    %11 = vector.load %arg4[%c0_5, %c0_6] : memref<16x128xbf16, #tpu.memory_space<vmem>>, vector<16x128xbf16>
    %cst_7 = arith.constant dense<0.000000e+00> : vector<512x128xf32>
    %12 = tpu.matmul %10, %11, %cst_7 {dimension_numbers = #tpu.dot_dimension_numbers<[1], [0], [0], [1], [0, 0, 1, 1], [], []>} : vector<512x16xbf16>, vector<16x128xbf16>, vector<512x128xf32> -> vector<512x128xf32>
    %13 = arith.truncf %12 : vector<512x128xf32> to vector<512x128xbf16>
    %c0_8 = arith.constant 0 : index
    %c0_9 = arith.constant 0 : index
    %14 = vector.load %arg5[%c0_8, %c0_9] : memref<512x128xbf16, #tpu.memory_space<vmem>>, vector<512x128xbf16>
    tpu.vector_store %arg5[%c0_8, %c0_9], %13 {strides = array<i32>} : memref<512x128xbf16, #tpu.memory_space<vmem>>, vector<512x128xbf16>,
    return
  }
  func.func @transform_0(%arg0: i32) -> (i32, i32) {
    %c0_i32 = arith.constant 0 : i32
    %c0_i32_0 = arith.constant 0 : i32
    return %arg0, %c0_i32 : i32, i32
  }
  func.func @transform_1(%arg0: i32) -> (i32, i32) {
    %c0_i32 = arith.constant 0 : i32
    %c0_i32_0 = arith.constant 0 : i32
    %c0_i32_1 = arith.constant 0 : i32
    return %c0_i32, %c0_i32_0 : i32, i32
  }
  func.func @transform_2(%arg0: i32) -> (i32, i32) {
    %c0_i32 = arith.constant 0 : i32
    %c0_i32_0 = arith.constant 0 : i32
    %c0_i32_1 = arith.constant 0 : i32
    return %c0_i32, %c0_i32_0 : i32, i32
  }
  func.func @transform_3(%arg0: i32) -> (i32, i32) {
    %c0_i32 = arith.constant 0 : i32
    %c0_i32_0 = arith.constant 0 : i32
    %c0_i32_1 = arith.constant 0 : i32
    return %c0_i32, %c0_i32_0 : i32, i32
  }
  func.func @transform_4(%arg0: i32) -> (i32, i32) {
    %c0_i32 = arith.constant 0 : i32
    %c0_i32_0 = arith.constant 0 : i32
    return %arg0, %c0_i32 : i32, i32
  }
}

module attributes {stable_mosaic.version = 11 : i64} {
  func.func @_bn_stats_kernel(%arg0: i32, %arg1: memref<1024x8xbf16, #tpu.memory_space<vmem>>, %arg2: memref<1x8xf32, #tpu.memory_space<vmem>>, %arg3: memref<1x8xf32, #tpu.memory_space<vmem>>, %arg4: memref<1x8xf32, #tpu.memory_space<vmem>>, %arg5: memref<1x8xf32, #tpu.memory_space<vmem>>) attributes {dimension_semantics = [#tpu.dimension_semantics<arbitrary>], iteration_bounds = array<i64: 2>, scalar_prefetch = 0 : i64, scratch_operands = 2 : i64, tpu.core_type = #tpu.core_type<tc>, window_params = [{transform_indices = @transform_0, window_bounds = array<i64: 1024, 8>}, {pipeline_mode = #tpu.pipeline_mode<synchronous>, transform_indices = @transform_1, window_bounds = array<i64: 1, 8>}, {pipeline_mode = #tpu.pipeline_mode<synchronous>, transform_indices = @transform_2, window_bounds = array<i64: 1, 8>}]} {
    %c0_i32 = arith.constant 0 : i32
    %0 = arith.cmpi eq, %arg0, %c0_i32 : i32
    %1 = arith.extui %0 : i1 to i32
    %c0_i32_0 = arith.constant 0 : i32
    %2 = arith.cmpi ne, %1, %c0_i32_0 : i32
    scf.if %2 {
      %cst_12 = arith.constant 0.000000e+00 : f32
      %19 = vector.broadcast %cst_12 : f32 to vector<1x8xf32>
      %c0_13 = arith.constant 0 : index
      %c0_14 = arith.constant 0 : index
      %20 = vector.load %arg4[%c0_13, %c0_14] : memref<1x8xf32, #tpu.memory_space<vmem>>, vector<1x8xf32>
      tpu.vector_store %arg4[%c0_13, %c0_14], %19 {strides = array<i32>} : memref<1x8xf32, #tpu.memory_space<vmem>>, vector<1x8xf32>,
      %cst_15 = arith.constant 0.000000e+00 : f32
      %21 = vector.broadcast %cst_15 : f32 to vector<1x8xf32>
      %c0_16 = arith.constant 0 : index
      %c0_17 = arith.constant 0 : index
      %22 = vector.load %arg5[%c0_16, %c0_17] : memref<1x8xf32, #tpu.memory_space<vmem>>, vector<1x8xf32>
      tpu.vector_store %arg5[%c0_16, %c0_17], %21 {strides = array<i32>} : memref<1x8xf32, #tpu.memory_space<vmem>>, vector<1x8xf32>,
    } else {
    }
    %c0 = arith.constant 0 : index
    %c0_1 = arith.constant 0 : index
    %3 = vector.load %arg1[%c0, %c0_1] : memref<1024x8xbf16, #tpu.memory_space<vmem>>, vector<1024x8xbf16>
    %4 = arith.extf %3 : vector<1024x8xbf16> to vector<1024x8xf32>
    %c0_2 = arith.constant 0 : index
    %c0_3 = arith.constant 0 : index
    %5 = vector.load %arg4[%c0_2, %c0_3] : memref<1x8xf32, #tpu.memory_space<vmem>>, vector<1x8xf32>
    %cst = arith.constant dense<0.000000e+00> : vector<8xf32>
    %6 = vector.multi_reduction <add>, %4, %cst [0] : vector<1024x8xf32> to vector<8xf32>
    %7 = vector.shape_cast %6 : vector<8xf32> to vector<1x8xf32>
    %8 = arith.addf %5, %7 : vector<1x8xf32>
    %c0_4 = arith.constant 0 : index
    %c0_5 = arith.constant 0 : index
    %9 = vector.load %arg4[%c0_4, %c0_5] : memref<1x8xf32, #tpu.memory_space<vmem>>, vector<1x8xf32>
    tpu.vector_store %arg4[%c0_4, %c0_5], %8 {strides = array<i32>} : memref<1x8xf32, #tpu.memory_space<vmem>>, vector<1x8xf32>,
    %c0_6 = arith.constant 0 : index
    %c0_7 = arith.constant 0 : index
    %10 = vector.load %arg5[%c0_6, %c0_7] : memref<1x8xf32, #tpu.memory_space<vmem>>, vector<1x8xf32>
    %11 = arith.mulf %4, %4 : vector<1024x8xf32>
    %cst_8 = arith.constant dense<0.000000e+00> : vector<8xf32>
    %12 = vector.multi_reduction <add>, %11, %cst_8 [0] : vector<1024x8xf32> to vector<8xf32>
    %13 = vector.shape_cast %12 : vector<8xf32> to vector<1x8xf32>
    %14 = arith.addf %10, %13 : vector<1x8xf32>
    %c0_9 = arith.constant 0 : index
    %c0_10 = arith.constant 0 : index
    %15 = vector.load %arg5[%c0_9, %c0_10] : memref<1x8xf32, #tpu.memory_space<vmem>>, vector<1x8xf32>
    tpu.vector_store %arg5[%c0_9, %c0_10], %14 {strides = array<i32>} : memref<1x8xf32, #tpu.memory_space<vmem>>, vector<1x8xf32>,
    %c1_i32 = arith.constant 1 : i32
    %16 = arith.cmpi eq, %arg0, %c1_i32 : i32
    %17 = arith.extui %16 : i1 to i32
    %c0_i32_11 = arith.constant 0 : i32
    %18 = arith.cmpi ne, %17, %c0_i32_11 : i32
    scf.if %18 {
      %c0_12 = arith.constant 0 : index
      %c0_13 = arith.constant 0 : index
      %19 = vector.load %arg4[%c0_12, %c0_13] : memref<1x8xf32, #tpu.memory_space<vmem>>, vector<1x8xf32>
      %c0_14 = arith.constant 0 : index
      %c0_15 = arith.constant 0 : index
      %20 = vector.load %arg2[%c0_14, %c0_15] : memref<1x8xf32, #tpu.memory_space<vmem>>, vector<1x8xf32>
      tpu.vector_store %arg2[%c0_14, %c0_15], %19 {strides = array<i32>} : memref<1x8xf32, #tpu.memory_space<vmem>>, vector<1x8xf32>,
      %c0_16 = arith.constant 0 : index
      %c0_17 = arith.constant 0 : index
      %21 = vector.load %arg5[%c0_16, %c0_17] : memref<1x8xf32, #tpu.memory_space<vmem>>, vector<1x8xf32>
      %c0_18 = arith.constant 0 : index
      %c0_19 = arith.constant 0 : index
      %22 = vector.load %arg3[%c0_18, %c0_19] : memref<1x8xf32, #tpu.memory_space<vmem>>, vector<1x8xf32>
      tpu.vector_store %arg3[%c0_18, %c0_19], %21 {strides = array<i32>} : memref<1x8xf32, #tpu.memory_space<vmem>>, vector<1x8xf32>,
    } else {
    }
    return
  }
  func.func @transform_0(%arg0: i32) -> (i32, i32) {
    %c0_i32 = arith.constant 0 : i32
    %c0_i32_0 = arith.constant 0 : i32
    return %arg0, %c0_i32 : i32, i32
  }
  func.func @transform_1(%arg0: i32) -> (i32, i32) {
    %c0_i32 = arith.constant 0 : i32
    %c0_i32_0 = arith.constant 0 : i32
    %c0_i32_1 = arith.constant 0 : i32
    return %c0_i32, %c0_i32_0 : i32, i32
  }
  func.func @transform_2(%arg0: i32) -> (i32, i32) {
    %c0_i32 = arith.constant 0 : i32
    %c0_i32_0 = arith.constant 0 : i32
    %c0_i32_1 = arith.constant 0 : i32
    return %c0_i32, %c0_i32_0 : i32, i32
  }
}

module attributes {stable_mosaic.version = 11 : i64} {
  func.func @_gemm_act_kernel(%arg0: i32, %arg1: memref<512x8xbf16, #tpu.memory_space<vmem>>, %arg2: memref<1x8xf32, #tpu.memory_space<vmem>>, %arg3: memref<1x8xf32, #tpu.memory_space<vmem>>, %arg4: memref<8x128xbf16, #tpu.memory_space<vmem>>, %arg5: memref<512x128xbf16, #tpu.memory_space<vmem>>) attributes {dimension_semantics = [#tpu.dimension_semantics<parallel>], iteration_bounds = array<i64: 4>, scalar_prefetch = 0 : i64, scratch_operands = 0 : i64, tpu.core_type = #tpu.core_type<tc>, window_params = [{transform_indices = @transform_0, window_bounds = array<i64: 512, 8>}, {pipeline_mode = #tpu.pipeline_mode<synchronous>, transform_indices = @transform_1, window_bounds = array<i64: 1, 8>}, {pipeline_mode = #tpu.pipeline_mode<synchronous>, transform_indices = @transform_2, window_bounds = array<i64: 1, 8>}, {pipeline_mode = #tpu.pipeline_mode<synchronous>, transform_indices = @transform_3, window_bounds = array<i64: 8, 128>}, {transform_indices = @transform_4, window_bounds = array<i64: 512, 128>}]} {
    %c0 = arith.constant 0 : index
    %c0_0 = arith.constant 0 : index
    %0 = vector.load %arg1[%c0, %c0_0] : memref<512x8xbf16, #tpu.memory_space<vmem>>, vector<512x8xbf16>
    %1 = arith.extf %0 : vector<512x8xbf16> to vector<512x8xf32>
    %c0_1 = arith.constant 0 : index
    %c0_2 = arith.constant 0 : index
    %2 = vector.load %arg2[%c0_1, %c0_2] : memref<1x8xf32, #tpu.memory_space<vmem>>, vector<1x8xf32>
    %3 = vector.broadcast %2 : vector<1x8xf32> to vector<512x8xf32>
    %4 = arith.mulf %1, %3 : vector<512x8xf32>
    %c0_3 = arith.constant 0 : index
    %c0_4 = arith.constant 0 : index
    %5 = vector.load %arg3[%c0_3, %c0_4] : memref<1x8xf32, #tpu.memory_space<vmem>>, vector<1x8xf32>
    %6 = vector.broadcast %5 : vector<1x8xf32> to vector<512x8xf32>
    %7 = arith.addf %4, %6 : vector<512x8xf32>
    %cst = arith.constant 0.000000e+00 : f32
    %8 = vector.broadcast %cst : f32 to vector<512x8xf32>
    %9 = arith.maximumf %7, %8 : vector<512x8xf32>
    %10 = arith.truncf %9 : vector<512x8xf32> to vector<512x8xbf16>
    %c0_5 = arith.constant 0 : index
    %c0_6 = arith.constant 0 : index
    %11 = vector.load %arg4[%c0_5, %c0_6] : memref<8x128xbf16, #tpu.memory_space<vmem>>, vector<8x128xbf16>
    %cst_7 = arith.constant dense<0.000000e+00> : vector<512x128xf32>
    %12 = tpu.matmul %10, %11, %cst_7 {dimension_numbers = #tpu.dot_dimension_numbers<[1], [0], [0], [1], [0, 0, 1, 1], [], []>} : vector<512x8xbf16>, vector<8x128xbf16>, vector<512x128xf32> -> vector<512x128xf32>
    %13 = arith.truncf %12 : vector<512x128xf32> to vector<512x128xbf16>
    %c0_8 = arith.constant 0 : index
    %c0_9 = arith.constant 0 : index
    %14 = vector.load %arg5[%c0_8, %c0_9] : memref<512x128xbf16, #tpu.memory_space<vmem>>, vector<512x128xbf16>
    tpu.vector_store %arg5[%c0_8, %c0_9], %13 {strides = array<i32>} : memref<512x128xbf16, #tpu.memory_space<vmem>>, vector<512x128xbf16>,
    return
  }
  func.func @transform_0(%arg0: i32) -> (i32, i32) {
    %c0_i32 = arith.constant 0 : i32
    %c0_i32_0 = arith.constant 0 : i32
    return %arg0, %c0_i32 : i32, i32
  }
  func.func @transform_1(%arg0: i32) -> (i32, i32) {
    %c0_i32 = arith.constant 0 : i32
    %c0_i32_0 = arith.constant 0 : i32
    %c0_i32_1 = arith.constant 0 : i32
    return %c0_i32, %c0_i32_0 : i32, i32
  }
  func.func @transform_2(%arg0: i32) -> (i32, i32) {
    %c0_i32 = arith.constant 0 : i32
    %c0_i32_0 = arith.constant 0 : i32
    %c0_i32_1 = arith.constant 0 : i32
    return %c0_i32, %c0_i32_0 : i32, i32
  }
  func.func @transform_3(%arg0: i32) -> (i32, i32) {
    %c0_i32 = arith.constant 0 : i32
    %c0_i32_0 = arith.constant 0 : i32
    %c0_i32_1 = arith.constant 0 : i32
    return %c0_i32, %c0_i32_0 : i32, i32
  }
  func.func @transform_4(%arg0: i32) -> (i32, i32) {
    %c0_i32 = arith.constant 0 : i32
    %c0_i32_0 = arith.constant 0 : i32
    return %arg0, %c0_i32 : i32, i32
  }
}

module attributes {stable_mosaic.version = 11 : i64} {
  func.func @_tanh_kernel(%arg0: i32, %arg1: memref<128x512xf32, #tpu.memory_space<vmem>>, %arg2: memref<128x512xf32, #tpu.memory_space<vmem>>) attributes {dimension_semantics = [#tpu.dimension_semantics<parallel>], iteration_bounds = array<i64: 1>, scalar_prefetch = 0 : i64, scratch_operands = 0 : i64, tpu.core_type = #tpu.core_type<tc>, window_params = [{transform_indices = @transform_0, window_bounds = array<i64: 128, 512>}, {transform_indices = @transform_1, window_bounds = array<i64: 128, 512>}]} {
    %c0 = arith.constant 0 : index
    %c0_0 = arith.constant 0 : index
    %0 = vector.load %arg1[%c0, %c0_0] : memref<128x512xf32, #tpu.memory_space<vmem>>, vector<128x512xf32>
    %1 = math.tanh %0 : vector<128x512xf32>
    %c0_1 = arith.constant 0 : index
    %c0_2 = arith.constant 0 : index
    %2 = vector.load %arg2[%c0_1, %c0_2] : memref<128x512xf32, #tpu.memory_space<vmem>>, vector<128x512xf32>
    tpu.vector_store %arg2[%c0_1, %c0_2], %1 {strides = array<i32>} : memref<128x512xf32, #tpu.memory_space<vmem>>, vector<128x512xf32>,
    return
  }
  func.func @transform_0(%arg0: i32) -> (i32, i32) {
    %c0_i32 = arith.constant 0 : i32
    %c0_i32_0 = arith.constant 0 : i32
    return %arg0, %c0_i32 : i32, i32
  }
  func.func @transform_1(%arg0: i32) -> (i32, i32) {
    %c0_i32 = arith.constant 0 : i32
    %c0_i32_0 = arith.constant 0 : i32
    return %arg0, %c0_i32 : i32, i32
  }
}

</mosaic_0001>

<llo_original>
// kernel: generator_forward.10
$region0: #{generator_forward.10}
  #allocation0 [shape = 'u32[]', space=smem, size = 0x4, offset = 0x4, fixed_abs, tag = 'smem constant byte address 0x4 - core index']
  #allocation1 [shape = 'u32[144,128]{1,0:T(1,128)}', space=vmem, size = 0x12000, scoped, tag = 'internal scratch']
  %s0 = inlined_call_operand.vmem [shape: bf16[2,32], index: 0, kind: input, shape index: {}]
  %s1 = inlined_call_operand.vmem [shape: f32[1,32], index: 1, kind: input, shape index: {}]
  %s2 = inlined_call_operand.vmem [shape: f32[1,32], index: 2, kind: input, shape index: {}]
  %s3 = inlined_call_operand.vmem [shape: bf16[32,1024], index: 3, kind: input, shape index: {}]
  %s4 = inlined_call_operand.vmem [shape: bf16[2,1024], index: 4, kind: output, shape index: {}]
  %s5 = sld [smem:[#allocation0]]
  $region26: #{generator_forward.10} parent=0
    _
  %s7 = ssub.s32 1, %s5
  %s8 = scalar_select 0, %s7, %s5
  // Predicated region
  $region2: #{generator_forward.10} parent=0 // pred_check
    _
  $region3: #{generator_forward.10} parent=0 // pred_check_branch
    %10 = sbr.rel (0) target = $region5
  $region4: #{generator_forward.10} parent=0 // pred_region
    _
  $region5: #{generator_forward.10} parent=0 // pred_fallthru
    _
  // Predicated region
  $region6: #{generator_forward.10} parent=0 // pred_check
    _
  $region7: #{generator_forward.10} parent=0 // pred_check_branch
    %12 = sbr.rel (0) target = $region9
  $region8: #{generator_forward.10} parent=0 // pred_region
    _
  $region9: #{generator_forward.10} parent=0 // pred_fallthru
    _
  // Predicated region
  $region10: #{generator_forward.10} parent=0 // pred_check
    _
  $region11: #{generator_forward.10} parent=0 // pred_check_branch
    %14 = sbr.rel (0) target = $region13
  $region12: #{generator_forward.10} parent=0 // pred_region
    _
  $region13: #{generator_forward.10} parent=0 // pred_fallthru
    _
  // Predicated region
  $region14: #{generator_forward.10} parent=0 // pred_check
    _
  $region15: #{generator_forward.10} parent=0 // pred_check_branch
    %16 = sbr.rel (0) target = $region17
  $region16: #{generator_forward.10} parent=0 // pred_region
    _
  $region17: #{generator_forward.10} parent=0 // pred_fallthru
    _
  %v18 = vld [vmem:[%s0] sm:$0x1]
  %v19 = vld [vmem:[%s3] sm:$0xff]
  %v20 = vld [vmem:[%s3 + $0x8] sm:$0xff]
  %v21 = vld [vmem:[%s3 + $0x10] sm:$0xff]
  %v22 = vld [vmem:[%s3 + $0x18] sm:$0xff]
  %v23 = vld [vmem:[%s3 + $0x20] sm:$0xff]
  %v24 = vld [vmem:[%s3 + $0x28] sm:$0xff]
  %v25 = vld [vmem:[%s3 + $0x30] sm:$0xff]
  %v26 = vld [vmem:[%s3 + $0x38] sm:$0xff]
  %v27 = vld [vmem:[%s3 + $0x40] sm:$0xff]
  %v28 = vld [vmem:[%s3 + $0x48] sm:$0xff]
  %v29 = vld [vmem:[%s3 + $0x50] sm:$0xff]
  %v30 = vld [vmem:[%s3 + $0x58] sm:$0xff]
  %v31 = vld [vmem:[%s3 + $0x60] sm:$0xff]
  %v32 = vld [vmem:[%s3 + $0x68] sm:$0xff]
  %v33 = vld [vmem:[%s3 + $0x70] sm:$0xff]
  %v34 = vld [vmem:[%s3 + $0x78] sm:$0xff]
  %v51 = vunpack.c.l.b16 %v19
  %v52 = vunpack.c.h.b16 %v19
  %v53 = vunpack.c.l.b16 %v20
  %v54 = vunpack.c.h.b16 %v20
  %v55 = vunpack.c.l.b16 %v21
  %v56 = vunpack.c.h.b16 %v21
  %v57 = vunpack.c.l.b16 %v22
  %v58 = vunpack.c.h.b16 %v22
  %v59 = vunpack.c.l.b16 %v23
  %v60 = vunpack.c.h.b16 %v23
  %v61 = vunpack.c.l.b16 %v24
  %v62 = vunpack.c.h.b16 %v24
  %v63 = vunpack.c.l.b16 %v25
  %v64 = vunpack.c.h.b16 %v25
  %v65 = vunpack.c.l.b16 %v26
  %v66 = vunpack.c.h.b16 %v26
  %v67 = vunpack.c.l.b16 %v27
  %v68 = vunpack.c.h.b16 %v27
  %v69 = vunpack.c.l.b16 %v28
  %v70 = vunpack.c.h.b16 %v28
  %v71 = vunpack.c.l.b16 %v29
  %v72 = vunpack.c.h.b16 %v29
  %v73 = vunpack.c.l.b16 %v30
  %v74 = vunpack.c.h.b16 %v30
  %v75 = vunpack.c.l.b16 %v31
  %v76 = vunpack.c.h.b16 %v31
  %v77 = vunpack.c.l.b16 %v32
  %v78 = vunpack.c.h.b16 %v32
  %v79 = vunpack.c.l.b16 %v33
  %v80 = vunpack.c.h.b16 %v33
  %v81 = vunpack.c.l.b16 %v34
  %v82 = vunpack.c.h.b16 %v34
  %v83 = vpack.c.b16 %v59, %v51
  %v84 = vpack.c.b16 %v60, %v52
  %v85 = vpack.c.b16 %v61, %v53
  %v86 = vpack.c.b16 %v62, %v54
  %v87 = vpack.c.b16 %v63, %v55
  %v88 = vpack.c.b16 %v64, %v56
  %v89 = vpack.c.b16 %v65, %v57
  %v90 = vpack.c.b16 %v66, %v58
  %v91 = vpack.c.b16 %v75, %v67
  %v92 = vpack.c.b16 %v76, %v68
  %v93 = vpack.c.b16 %v77, %v69
  %v94 = vpack.c.b16 %v78, %v70
  %v95 = vpack.c.b16 %v79, %v71
  %v96 = vpack.c.b16 %v80, %v72
  %v97 = vpack.c.b16 %v81, %v73
  %v98 = vpack.c.b16 %v82, %v74
  %vm115 = vcmask 261120
  %v117 = vsel %vm115, %v18, 0
  %119 = vmatprep.subr.bf16.mxu0 %v84
  %120 = vmatpush1.bf16.msra.mxu0 %v83
  %121 = vmatprep.subr.bf16.mxu0 %v92
  %122 = vmatpush1.bf16.msra.mxu0 %v91
  %123 = vmatprep.subr.bf16.mxu0 0
  %124 = vmatpush1.bf16.msra.mxu0 0
  %125 = vmatprep.subr.bf16.mxu0 0
  %126 = vmatpush1.bf16.msra.mxu0 0
  %127 = vmatprep.subr.bf16.mxu0 0
  %128 = vmatpush1.bf16.msra.mxu0 0
  %129 = vmatprep.subr.bf16.mxu0 0
  %130 = vmatpush1.bf16.msra.mxu0 0
  %131 = vmatprep.subr.bf16.mxu0 0
  %132 = vmatpush1.bf16.msra.mxu0 0
  %133 = vmatprep.subr.bf16.mxu0 0
  %134 = vmatpush1.bf16.msra.mxu0 0
  %135 = vmatprep.subr.bf16.mxu0 0
  %136 = vmatpush1.bf16.msra.mxu0 0
  %137 = vmatprep.subr.bf16.mxu0 0
  %138 = vmatpush1.bf16.msra.mxu0 0
  %139 = vmatprep.subr.bf16.mxu0 0
  %140 = vmatpush1.bf16.msra.mxu0 0
  %141 = vmatprep.subr.bf16.mxu0 0
  %142 = vmatpush1.bf16.msra.mxu0 0
  %143 = vmatprep.subr.bf16.mxu0 0
  %144 = vmatpush1.bf16.msra.mxu0 0
  %145 = vmatprep.subr.bf16.mxu0 0
  %146 = vmatpush1.bf16.msra.mxu0 0
  %147 = vmatprep.subr.bf16.mxu0 0
  %148 = vmatpush1.bf16.msra.mxu0 0
  %149 = vmatprep.subr.bf16.mxu0 0
  %150 = vmatpush1.bf16.msra.mxu0 0
  %151 = vmatprep.mubr.bf16.mxu0 0
  %152 = vmatmul.mubr.bf16.gmra.mrb[0].mxu0 %v117
  %v153 = vpop.f32.mrb[0].mxu0
  %v154 = vadd.f32 0.0, %v153
  %v155 = vpop.f32.mrb[0].mxu0
  %v156 = vadd.f32 0.0, %v155
  %v157 = vpop.f32.mrb[0].mxu0
  %v158 = vpop.f32.mrb[0].mxu0
  %159 = vdwg.mxu0
  %160 = vmatprep.subr.bf16.mxu0 %v86
  %161 = vmatpush1.bf16.msra.mxu0 %v85
  %162 = vmatprep.subr.bf16.mxu0 %v94
  %163 = vmatpush1.bf16.msra.mxu0 %v93
  %164 = vmatprep.subr.bf16.mxu0 0
  %165 = vmatpush1.bf16.msra.mxu0 0
  %166 = vmatprep.subr.bf16.mxu0 0
  %167 = vmatpush1.bf16.msra.mxu0 0
  %168 = vmatprep.subr.bf16.mxu0 0
  %169 = vmatpush1.bf16.msra.mxu0 0
  %170 = vmatprep.subr.bf16.mxu0 0
  %171 = vmatpush1.bf16.msra.mxu0 0
  %172 = vmatprep.subr.bf16.mxu0 0
  %173 = vmatpush1.bf16.msra.mxu0 0
  %174 = vmatprep.subr.bf16.mxu0 0
  %175 = vmatpush1.bf16.msra.mxu0 0
  %176 = vmatprep.subr.bf16.mxu0 0
  %177 = vmatpush1.bf16.msra.mxu0 0
  %178 = vmatprep.subr.bf16.mxu0 0
  %179 = vmatpush1.bf16.msra.mxu0 0
  %180 = vmatprep.subr.bf16.mxu0 0
  %181 = vmatpush1.bf16.msra.mxu0 0
  %182 = vmatprep.subr.bf16.mxu0 0
  %183 = vmatpush1.bf16.msra.mxu0 0
  %184 = vmatprep.subr.bf16.mxu0 0
  %185 = vmatpush1.bf16.msra.mxu0 0
  %186 = vmatprep.subr.bf16.mxu0 0
  %187 = vmatpush1.bf16.msra.mxu0 0
  %188 = vmatprep.subr.bf16.mxu0 0
  %189 = vmatpush1.bf16.msra.mxu0 0
  %190 = vmatprep.subr.bf16.mxu0 0
  %191 = vmatpush1.bf16.msra.mxu0 0
  %192 = vmatprep.mubr.bf16.mxu0 0
  %193 = vmatmul.mubr.bf16.gmra.mrb[0].mxu0 %v117
  %v194 = vpop.f32.mrb[0].mxu0
  %v195 = vadd.f32 0.0, %v194
  %v196 = vpop.f32.mrb[0].mxu0
  %v197 = vadd.f32 0.0, %v196
  %v198 = vpop.f32.mrb[0].mxu0
  %v199 = vpop.f32.mrb[0].mxu0
  %200 = vdwg.mxu0
  %201 = vmatprep.subr.bf16.mxu0 %v88
  %202 = vmatpush1.bf16.msra.mxu0 %v87
  %203 = vmatprep.subr.bf16.mxu0 %v96
  %204 = vmatpush1.bf16.msra.mxu0 %v95
  %205 = vmatprep.subr.bf16.mxu0 0
  %206 = vmatpush1.bf16.msra.mxu0 0
  %207 = vmatprep.subr.bf16.mxu0 0
  %208 = vmatpush1.bf16.msra.mxu0 0
  %209 = vmatprep.subr.bf16.mxu0 0
  %210 = vmatpush1.bf16.msra.mxu0 0
  %211 = vmatprep.subr.bf16.mxu0 0
  %212 = vmatpush1.bf16.msra.mxu0 0
  %213 = vmatprep.subr.bf16.mxu0 0
  %214 = vmatpush1.bf16.msra.mxu0 0
  %215 = vmatprep.subr.bf16.mxu0 0
  %216 = vmatpush1.bf16.msra.mxu0 0
  %217 = vmatprep.subr.bf16.mxu0 0
  %218 = vmatpush1.bf16.msra.mxu0 0
  %219 = vmatprep.subr.bf16.mxu0 0
  %220 = vmatpush1.bf16.msra.mxu0 0
  %221 = vmatprep.subr.bf16.mxu0 0
  %222 = vmatpush1.bf16.msra.mxu0 0
  %223 = vmatprep.subr.bf16.mxu0 0
  %224 = vmatpush1.bf16.msra.mxu0 0
  %225 = vmatprep.subr.bf16.mxu0 0
  %226 = vmatpush1.bf16.msra.mxu0 0
  %227 = vmatprep.subr.bf16.mxu0 0
  %228 = vmatpush1.bf16.msra.mxu0 0
  %229 = vmatprep.subr.bf16.mxu0 0
  %230 = vmatpush1.bf16.msra.mxu0 0
  %231 = vmatprep.subr.bf16.mxu0 0
  %232 = vmatpush1.bf16.msra.mxu0 0
  %233 = vmatprep.mubr.bf16.mxu0 0
  %234 = vmatmul.mubr.bf16.gmra.mrb[0].mxu0 %v117
  %v235 = vpop.f32.mrb[0].mxu0
  %v236 = vadd.f32 0.0, %v235
  %v237 = vpop.f32.mrb[0].mxu0
  %v238 = vadd.f32 0.0, %v237
  %v239 = vpop.f32.mrb[0].mxu0
  %v240 = vpop.f32.mrb[0].mxu0
  %241 = vdwg.mxu0
  %242 = vmatprep.subr.bf16.mxu0 %v90
  %243 = vmatpush1.bf16.msra.mxu0 %v89
  %244 = vmatprep.subr.bf16.mxu0 %v98
  %245 = vmatpush1.bf16.msra.mxu0 %v97
  %246 = vmatprep.subr.bf16.mxu0 0
  %247 = vmatpush1.bf16.msra.mxu0 0
  %248 = vmatprep.subr.bf16.mxu0 0
  %249 = vmatpush1.bf16.msra.mxu0 0
  %250 = vmatprep.subr.bf16.mxu0 0
  %251 = vmatpush1.bf16.msra.mxu0 0
  %252 = vmatprep.subr.bf16.mxu0 0
  %253 = vmatpush1.bf16.msra.mxu0 0
  %254 = vmatprep.subr.bf16.mxu0 0
  %255 = vmatpush1.bf16.msra.mxu0 0
  %256 = vmatprep.subr.bf16.mxu0 0
  %257 = vmatpush1.bf16.msra.mxu0 0
  %258 = vmatprep.subr.bf16.mxu0 0
  %259 = vmatpush1.bf16.msra.mxu0 0
  %260 = vmatprep.subr.bf16.mxu0 0
  %261 = vmatpush1.bf16.msra.mxu0 0
  %262 = vmatprep.subr.bf16.mxu0 0
  %263 = vmatpush1.bf16.msra.mxu0 0
  %264 = vmatprep.subr.bf16.mxu0 0
  %265 = vmatpush1.bf16.msra.mxu0 0
  %266 = vmatprep.subr.bf16.mxu0 0
  %267 = vmatpush1.bf16.msra.mxu0 0
  %268 = vmatprep.subr.bf16.mxu0 0
  %269 = vmatpush1.bf16.msra.mxu0 0
  %270 = vmatprep.subr.bf16.mxu0 0
  %271 = vmatpush1.bf16.msra.mxu0 0
  %272 = vmatprep.subr.bf16.mxu0 0
  %273 = vmatpush1.bf16.msra.mxu0 0
  %274 = vmatprep.mubr.bf16.mxu0 0
  %275 = vmatmul.mubr.bf16.gmra.mrb[0].mxu0 %v117
  %v276 = vpop.f32.mrb[0].mxu0
  %v277 = vadd.f32 0.0, %v276
  %v278 = vpop.f32.mrb[0].mxu0
  %v279 = vadd.f32 0.0, %v278
  %v280 = vpop.f32.mrb[0].mxu0
  %v281 = vpop.f32.mrb[0].mxu0
  %282 = vdwg.mxu0
  %v283 = vpack.c.bf16 %v154, %v154
  %v284 = vpack.c.bf16 %v156, %v156
  %v285 = vpack.c.bf16 %v195, %v195
  %v286 = vpack.c.bf16 %v197, %v197
  %v287 = vpack.c.bf16 %v236, %v236
  %v288 = vpack.c.bf16 %v238, %v238
  %v289 = vpack.c.bf16 %v277, %v277
  %v290 = vpack.c.bf16 %v279, %v279
  %v299 = vcombine.low %v283, %v284
  %v300 = vcombine.low %v285, %v286
  %v301 = vcombine.low %v287, %v288
  %v302 = vcombine.low %v289, %v290
  %v304 = vunpack.c.l.s4 1966171168
  %v305 = vunpack.c.0.s8 %v304
  %v306 = vlaneseq
  %v307 = vshrl.u32 %v306, 7
  %v308 = vsub.s32 %v305, %v307
  %v309 = vrot.slane %v299, %v308
  %v311 = vunpack.c.l.s4 1966171168
  %v312 = vunpack.c.0.s8 %v311
  %v313 = vlaneseq
  %v314 = vshrl.u32 %v313, 7
  %v315 = vsub.s32 %v312, %v314
  %v316 = vrot.slane %v300, %v315
  %v318 = vunpack.c.l.s4 1966171168
  %v319 = vunpack.c.0.s8 %v318
  %v320 = vlaneseq
  %v321 = vshrl.u32 %v320, 7
  %v322 = vsub.s32 %v319, %v321
  %v323 = vrot.slane %v301, %v322
  %v325 = vunpack.c.l.s4 1966171168
  %v326 = vunpack.c.0.s8 %v325
  %v327 = vlaneseq
  %v328 = vshrl.u32 %v327, 7
  %v329 = vsub.s32 %v326, %v328
  %v330 = vrot.slane %v302, %v329
  %v331 = vcombine.low %v309, %v316
  %v332 = vcombine.low %v323, %v330
  %v334 = vunpack.c.l.s4 1966171168
  %v335 = vunpack.c.0.s8 %v334
  %v336 = vlaneseq
  %v337 = vshrl.u32 %v336, 7
  %v338 = vsub.s32 %v335, %v337
  %v339 = vrot.slane %v331, %v338
  %v341 = vunpack.c.l.s4 1966171168
  %v342 = vunpack.c.0.s8 %v341
  %v343 = vlaneseq
  %v344 = vshrl.u32 %v343, 7
  %v345 = vsub.s32 %v342, %v344
  %v346 = vrot.slane %v332, %v345
  %v347 = vcombine.low %v339, %v346
  %349 = vst [vmem:[%s4] sm:$0xff] %v347
  // Predicated region
  $region18: #{generator_forward.10} parent=0 // pred_check
    _
  $region19: #{generator_forward.10} parent=0 // pred_check_branch
    %351 = sbr.rel (0) target = $region21
  $region20: #{generator_forward.10} parent=0 // pred_region
    _
  $region21: #{generator_forward.10} parent=0 // pred_fallthru
    _
  // Predicated region
  $region22: #{generator_forward.10} parent=0 // pred_check
    _
  $region23: #{generator_forward.10} parent=0 // pred_check_branch
    %353 = sbr.rel (0) target = $region25
  $region24: #{generator_forward.10} parent=0 // pred_region
    _
  $region25: #{generator_forward.10} parent=0 // pred_fallthru
    _

// kernel: generator_forward.11
$region0: #{generator_forward.11}
  #allocation0 [shape = 'u32[]', space=smem, size = 0x4, offset = 0x4, fixed_abs, tag = 'smem constant byte address 0x4 - core index']
  #allocation1 [shape = 'u32[144,128]{1,0:T(1,128)}', space=vmem, size = 0x12000, scoped, tag = 'internal scratch']
  #allocation2 [shape = 'f32[1,64]{1,0:T(1,128)}', space=vmem, size = 0x200, scoped, tag = 'scratch operand']
  #allocation3 [shape = 'f32[1,64]{1,0:T(1,128)}', space=vmem, size = 0x200, scoped, tag = 'scratch operand']
  %s0 = inlined_call_operand.vmem [shape: bf16[32,64], index: 0, kind: input, shape index: {}]
  %s1 = inlined_call_operand.vmem [shape: f32[1,64], index: 1, kind: output, shape index: {0}]
  %s2 = inlined_call_operand.vmem [shape: f32[1,64], index: 2, kind: output, shape index: {1}]
  %3 = xla_tuple %s1, %s2
  %s4 = sld [smem:[#allocation0]]
  $region30: #{generator_forward.11} parent=0
    _
  %s6 = ssub.s32 1, %s4
  %s7 = scalar_select 0, %s6, %s4
  // Predicated region
  $region2: #{generator_forward.11} parent=0 // pred_check
    _
  $region3: #{generator_forward.11} parent=0 // pred_check_branch
    %9 = sbr.rel (0) target = $region5
  $region4: #{generator_forward.11} parent=0 // pred_region
    _
  $region5: #{generator_forward.11} parent=0 // pred_fallthru
    _
  %p10 = scmp.eq.s32.totalorder 0, 0
  // Predicated region
  $region6: #{generator_forward.11} parent=0 // pred_check
    %p11 = pneg %p10
  $region7: #{generator_forward.11} parent=0 // pred_check_branch
    %13 = sbr.rel (%p11) target = $region9
  $region8: #{generator_forward.11} parent=0 // pred_region
    %vm14 = vcmask 516096
    %15 = vst.msk [vmem:[#allocation2] sm:$0x1] %vm14, 0.0
    %16 = vst.msk [vmem:[#allocation3] sm:$0x1] %vm14, 0.0
  $region9: #{generator_forward.11} parent=0 // pred_fallthru
    _
  %v17 = vld [vmem:[%s0] sm:$0xf]
  %v18 = vld [vmem:[%s0 + $0x4] sm:$0xf]
  %v19 = vld [vmem:[%s0 + $0x8] sm:$0xf]
  %v20 = vld [vmem:[%s0 + $0xc] sm:$0xf]
  %v21 = vunpack.c.l.bf16 %v17
  %v22 = vunpack.c.l.bf16 %v18
  %v23 = vunpack.c.l.bf16 %v19
  %v24 = vunpack.c.l.bf16 %v20
  %v25 = vld [vmem:[#allocation2] sm:$0x1]
  %vm26 = vcmask 523264
  %v27 = vsel %vm26, %v21, 0.0
  %v28 = vsel %vm26, %v22, 0.0
  %v29 = vadd.f32 %v27, %v28
  %v30 = vsel %vm26, %v23, 0.0
  %v31 = vadd.f32 %v29, %v30
  %v32 = vsel %vm26, %v24, 0.0
  %v33 = vadd.f32 %v31, %v32
  %v34 = vrot.slane %v33, 4
  %v35 = vadd.f32 %v33, %v34
  %v36 = vrot.slane %v35, 2
  %v37 = vadd.f32 %v35, %v36
  %v38 = vrot.slane %v37, 1
  %v39 = vadd.f32 %v37, %v38
  %v40 = vadd.f32 %v25, %v39
  %vm41 = vcmask 516096
  %42 = vst.msk [vmem:[#allocation2] sm:$0x1] %vm41, %v40
  %v43 = vld [vmem:[#allocation3] sm:$0x1]
  %v44 = vmul.f32 %v21, %v21
  %v45 = vmul.f32 %v22, %v22
  %v46 = vmul.f32 %v23, %v23
  %v47 = vmul.f32 %v24, %v24
  %v48 = vsel %vm26, %v44, 0.0
  %v49 = vsel %vm26, %v45, 0.0
  %v50 = vadd.f32 %v48, %v49
  %v51 = vsel %vm26, %v46, 0.0
  %v52 = vadd.f32 %v50, %v51
  %v53 = vsel %vm26, %v47, 0.0
  %v54 = vadd.f32 %v52, %v53
  %v55 = vrot.slane %v54, 4
  %v56 = vadd.f32 %v54, %v55
  %v57 = vrot.slane %v56, 2
  %v58 = vadd.f32 %v56, %v57
  %v59 = vrot.slane %v58, 1
  %v60 = vadd.f32 %v58, %v59
  %v61 = vadd.f32 %v43, %v60
  %62 = vst.msk [vmem:[#allocation3] sm:$0x1] %vm41, %v61
  // Predicated region
  $region10: #{generator_forward.11} parent=0 // pred_check
    %p63 = pneg %p10
  $region11: #{generator_forward.11} parent=0 // pred_check_branch
    %65 = sbr.rel (%p63) target = $region13
  $region12: #{generator_forward.11} parent=0 // pred_region
    %v66 = vld [vmem:[#allocation2] sm:$0x1]
    %67 = vst.msk [vmem:[%s1] sm:$0x1] %vm41, %v66
    %v68 = vld [vmem:[#allocation3] sm:$0x1]
    %69 = vst.msk [vmem:[%s2] sm:$0x1] %vm41, %v68
  $region13: #{generator_forward.11} parent=0 // pred_fallthru
    _
  // Predicated region
  $region14: #{generator_forward.11} parent=0 // pred_check
    _
  $region15: #{generator_forward.11} parent=0 // pred_check_branch
    %71 = sbr.rel (0) target = $region17
  $region16: #{generator_forward.11} parent=0 // pred_region
    _
  $region17: #{generator_forward.11} parent=0 // pred_fallthru
    _
  // Predicated region
  $region18: #{generator_forward.11} parent=0 // pred_check
    _
  $region19: #{generator_forward.11} parent=0 // pred_check_branch
    %73 = sbr.rel (0) target = $region21
  $region20: #{generator_forward.11} parent=0 // pred_region
    _
  $region21: #{generator_forward.11} parent=0 // pred_fallthru
    _
  // Predicated region
  $region22: #{generator_forward.11} parent=0 // pred_check
    _
  $region23: #{generator_forward.11} parent=0 // pred_check_branch
    %75 = sbr.rel (0) target = $region25
  $region24: #{generator_forward.11} parent=0 // pred_region
    _
  $region25: #{generator_forward.11} parent=0 // pred_fallthru
    _
  // Predicated region
  $region26: #{generator_forward.11} parent=0 // pred_check
    _
  $region27: #{generator_forward.11} parent=0 // pred_check_branch
    %77 = sbr.rel (0) target = $region29
  $region28: #{generator_forward.11} parent=0 // pred_region
    _
  $region29: #{generator_forward.11} parent=0 // pred_fallthru
    _

// kernel: generator_forward.12
$region0: #{generator_forward.12}
  #allocation0 [shape = 'u32[]', space=smem, size = 0x4, offset = 0x4, fixed_abs, tag = 'smem constant byte address 0x4 - core index']
  #allocation1 [shape = 'u32[144,128]{1,0:T(1,128)}', space=vmem, size = 0x12000, scoped, tag = 'internal scratch']
  %s0 = inlined_call_operand.vmem [shape: bf16[32,64], index: 0, kind: input, shape index: {}]
  %s1 = inlined_call_operand.vmem [shape: f32[1,64], index: 1, kind: input, shape index: {}]
  %s2 = inlined_call_operand.vmem [shape: f32[1,64], index: 2, kind: input, shape index: {}]
  %s3 = inlined_call_operand.vmem [shape: bf16[64,512], index: 3, kind: input, shape index: {}]
  %s4 = inlined_call_operand.vmem [shape: bf16[32,512], index: 4, kind: output, shape index: {}]
  %s5 = sld [smem:[#allocation0]]
  $region26: #{generator_forward.12} parent=0
    _
  %s7 = ssub.s32 1, %s5
  %s8 = scalar_select 0, %s7, %s5
  // Predicated region
  $region2: #{generator_forward.12} parent=0 // pred_check
    _
  $region3: #{generator_forward.12} parent=0 // pred_check_branch
    %10 = sbr.rel (0) target = $region5
  $region4: #{generator_forward.12} parent=0 // pred_region
    _
  $region5: #{generator_forward.12} parent=0 // pred_fallthru
    _
  // Predicated region
  $region6: #{generator_forward.12} parent=0 // pred_check
    _
  $region7: #{generator_forward.12} parent=0 // pred_check_branch
    %12 = sbr.rel (0) target = $region9
  $region8: #{generator_forward.12} parent=0 // pred_region
    _
  $region9: #{generator_forward.12} parent=0 // pred_fallthru
    _
  // Predicated region
  $region10: #{generator_forward.12} parent=0 // pred_check
    _
  $region11: #{generator_forward.12} parent=0 // pred_check_branch
    %14 = sbr.rel (0) target = $region13
  $region12: #{generator_forward.12} parent=0 // pred_region
    _
  $region13: #{generator_forward.12} parent=0 // pred_fallthru
    _
  // Predicated region
  $region14: #{generator_forward.12} parent=0 // pred_check
    _
  $region15: #{generator_forward.12} parent=0 // pred_check_branch
    %16 = sbr.rel (0) target = $region17
  $region16: #{generator_forward.12} parent=0 // pred_region
    _
  $region17: #{generator_forward.12} parent=0 // pred_fallthru
    _
  %v18 = vld [vmem:[%s0] sm:$0xf]
  %v19 = vld [vmem:[%s0 + $0x4] sm:$0xf]
  %v20 = vld [vmem:[%s0 + $0x8] sm:$0xf]
  %v21 = vld [vmem:[%s0 + $0xc] sm:$0xf]
  %v22 = vunpack.c.l.bf16 %v18
  %v23 = vunpack.c.l.bf16 %v19
  %v24 = vunpack.c.l.bf16 %v20
  %v25 = vunpack.c.l.bf16 %v21
  %v26 = vld [vmem:[%s1] sm:$0x1]
  %v28 = vlaneseq
  %v29 = vshrl.u32 %v28, 7
  %v30 = vsub.s32 0, %v29
  %v31 = vrot.slane %v26, %v30
  %v33 = vmul.f32 %v22, %v31
  %v34 = vmul.f32 %v23, %v31
  %v35 = vmul.f32 %v24, %v31
  %v36 = vmul.f32 %v25, %v31
  %v37 = vld [vmem:[%s2] sm:$0x1]
  %v39 = vlaneseq
  %v40 = vshrl.u32 %v39, 7
  %v41 = vsub.s32 0, %v40
  %v42 = vrot.slane %v37, %v41
  %v44 = vadd.f32 %v33, %v42
  %v45 = vadd.f32 %v34, %v42
  %v46 = vadd.f32 %v35, %v42
  %v47 = vadd.f32 %v36, %v42
  %v48 = vmax.f32 %v44, 0.0
  %v49 = vmax.f32 %v45, 0.0
  %v50 = vmax.f32 %v46, 0.0
  %v51 = vmax.f32 %v47, 0.0
  %v52 = vpack.c.bf16 %v49, %v48
  %v53 = vpack.c.bf16 %v51, %v50
  %v54 = vld [vmem:[%s3] sm:$0xff]
  %v55 = vld [vmem:[%s3 + $0x8] sm:$0xff]
  %v56 = vld [vmem:[%s3 + $0x10] sm:$0xff]
  %v57 = vld [vmem:[%s3 + $0x18] sm:$0xff]
  %v58 = vld [vmem:[%s3 + $0x20] sm:$0xff]
  %v59 = vld [vmem:[%s3 + $0x28] sm:$0xff]
  %v60 = vld [vmem:[%s3 + $0x30] sm:$0xff]
  %v61 = vld [vmem:[%s3 + $0x38] sm:$0xff]
  %v62 = vld [vmem:[%s3 + $0x40] sm:$0xff]
  %v63 = vld [vmem:[%s3 + $0x48] sm:$0xff]
  %v64 = vld [vmem:[%s3 + $0x50] sm:$0xff]
  %v65 = vld [vmem:[%s3 + $0x58] sm:$0xff]
  %v66 = vld [vmem:[%s3 + $0x60] sm:$0xff]
  %v67 = vld [vmem:[%s3 + $0x68] sm:$0xff]
  %v68 = vld [vmem:[%s3 + $0x70] sm:$0xff]
  %v69 = vld [vmem:[%s3 + $0x78] sm:$0xff]
  %v86 = vunpack.c.l.b16 %v54
  %v87 = vunpack.c.h.b16 %v54
  %v88 = vunpack.c.l.b16 %v55
  %v89 = vunpack.c.h.b16 %v55
  %v90 = vunpack.c.l.b16 %v56
  %v91 = vunpack.c.h.b16 %v56
  %v92 = vunpack.c.l.b16 %v57
  %v93 = vunpack.c.h.b16 %v57
  %v94 = vunpack.c.l.b16 %v58
  %v95 = vunpack.c.h.b16 %v58
  %v96 = vunpack.c.l.b16 %v59
  %v97 = vunpack.c.h.b16 %v59
  %v98 = vunpack.c.l.b16 %v60
  %v99 = vunpack.c.h.b16 %v60
  %v100 = vunpack.c.l.b16 %v61
  %v101 = vunpack.c.h.b16 %v61
  %v102 = vunpack.c.l.b16 %v62
  %v103 = vunpack.c.h.b16 %v62
  %v104 = vunpack.c.l.b16 %v63
  %v105 = vunpack.c.h.b16 %v63
  %v106 = vunpack.c.l.b16 %v64
  %v107 = vunpack.c.h.b16 %v64
  %v108 = vunpack.c.l.b16 %v65
  %v109 = vunpack.c.h.b16 %v65
  %v110 = vunpack.c.l.b16 %v66
  %v111 = vunpack.c.h.b16 %v66
  %v112 = vunpack.c.l.b16 %v67
  %v113 = vunpack.c.h.b16 %v67
  %v114 = vunpack.c.l.b16 %v68
  %v115 = vunpack.c.h.b16 %v68
  %v116 = vunpack.c.l.b16 %v69
  %v117 = vunpack.c.h.b16 %v69
  %v118 = vpack.c.b16 %v90, %v86
  %v119 = vpack.c.b16 %v91, %v87
  %v120 = vpack.c.b16 %v92, %v88
  %v121 = vpack.c.b16 %v93, %v89
  %v122 = vpack.c.b16 %v98, %v94
  %v123 = vpack.c.b16 %v99, %v95
  %v124 = vpack.c.b16 %v100, %v96
  %v125 = vpack.c.b16 %v101, %v97
  %v126 = vpack.c.b16 %v106, %v102
  %v127 = vpack.c.b16 %v107, %v103
  %v128 = vpack.c.b16 %v108, %v104
  %v129 = vpack.c.b16 %v109, %v105
  %v130 = vpack.c.b16 %v114, %v110
  %v131 = vpack.c.b16 %v115, %v111
  %v132 = vpack.c.b16 %v116, %v112
  %v133 = vpack.c.b16 %v117, %v113
  %vm150 = vcmask 523264
  %v152 = vsel %vm150, %v52, 0
  %v155 = vsel %vm150, %v53, 0
  %157 = vmatprep.subr.bf16.mxu0 %v119
  %158 = vmatpush1.bf16.msra.mxu0 %v118
  %159 = vmatprep.subr.bf16.mxu0 %v123
  %160 = vmatpush1.bf16.msra.mxu0 %v122
  %161 = vmatprep.subr.bf16.mxu0 %v127
  %162 = vmatpush1.bf16.msra.mxu0 %v126
  %163 = vmatprep.subr.bf16.mxu0 %v131
  %164 = vmatpush1.bf16.msra.mxu0 %v130
  %165 = vmatprep.subr.bf16.mxu0 0
  %166 = vmatpush1.bf16.msra.mxu0 0
  %167 = vmatprep.subr.bf16.mxu0 0
  %168 = vmatpush1.bf16.msra.mxu0 0
  %169 = vmatprep.subr.bf16.mxu0 0
  %170 = vmatpush1.bf16.msra.mxu0 0
  %171 = vmatprep.subr.bf16.mxu0 0
  %172 = vmatpush1.bf16.msra.mxu0 0
  %173 = vmatprep.subr.bf16.mxu0 0
  %174 = vmatpush1.bf16.msra.mxu0 0
  %175 = vmatprep.subr.bf16.mxu0 0
  %176 = vmatpush1.bf16.msra.mxu0 0
  %177 = vmatprep.subr.bf16.mxu0 0
  %178 = vmatpush1.bf16.msra.mxu0 0
  %179 = vmatprep.subr.bf16.mxu0 0
  %180 = vmatpush1.bf16.msra.mxu0 0
  %181 = vmatprep.subr.bf16.mxu0 0
  %182 = vmatpush1.bf16.msra.mxu0 0
  %183 = vmatprep.subr.bf16.mxu0 0
  %184 = vmatpush1.bf16.msra.mxu0 0
  %185 = vmatprep.subr.bf16.mxu0 0
  %186 = vmatpush1.bf16.msra.mxu0 0
  %187 = vmatprep.subr.bf16.mxu0 0
  %188 = vmatpush1.bf16.msra.mxu0 0
  %189 = vmatprep.mubr.bf16.mxu0 0
  %190 = vmatmul.mubr.bf16.gmra.mrb[0].mxu0 %v152
  %v191 = vpop.f32.mrb[0].mxu0
  %v192 = vadd.f32 0.0, %v191
  %v193 = vpop.f32.mrb[0].mxu0
  %v194 = vadd.f32 0.0, %v193
  %v195 = vpop.f32.mrb[0].mxu0
  %v196 = vadd.f32 0.0, %v195
  %v197 = vpop.f32.mrb[0].mxu0
  %v198 = vadd.f32 0.0, %v197
  %199 = vmatprep.mubr.bf16.mxu0 0
  %200 = vmatmul.mubr.bf16.gmra.mrb[0].mxu0 %v155
  %v201 = vpop.f32.mrb[0].mxu0
  %v202 = vadd.f32 0.0, %v201
  %v203 = vpop.f32.mrb[0].mxu0
  %v204 = vadd.f32 0.0, %v203
  %v205 = vpop.f32.mrb[0].mxu0
  %v206 = vadd.f32 0.0, %v205
  %v207 = vpop.f32.mrb[0].mxu0
  %v208 = vadd.f32 0.0, %v207
  %209 = vdwg.mxu0
  %210 = vmatprep.subr.bf16.mxu0 %v121
  %211 = vmatpush1.bf16.msra.mxu0 %v120
  %212 = vmatprep.subr.bf16.mxu0 %v125
  %213 = vmatpush1.bf16.msra.mxu0 %v124
  %214 = vmatprep.subr.bf16.mxu0 %v129
  %215 = vmatpush1.bf16.msra.mxu0 %v128
  %216 = vmatprep.subr.bf16.mxu0 %v133
  %217 = vmatpush1.bf16.msra.mxu0 %v132
  %218 = vmatprep.subr.bf16.mxu0 0
  %219 = vmatpush1.bf16.msra.mxu0 0
  %220 = vmatprep.subr.bf16.mxu0 0
  %221 = vmatpush1.bf16.msra.mxu0 0
  %222 = vmatprep.subr.bf16.mxu0 0
  %223 = vmatpush1.bf16.msra.mxu0 0
  %224 = vmatprep.subr.bf16.mxu0 0
  %225 = vmatpush1.bf16.msra.mxu0 0
  %226 = vmatprep.subr.bf16.mxu0 0
  %227 = vmatpush1.bf16.msra.mxu0 0
  %228 = vmatprep.subr.bf16.mxu0 0
  %229 = vmatpush1.bf16.msra.mxu0 0
  %230 = vmatprep.subr.bf16.mxu0 0
  %231 = vmatpush1.bf16.msra.mxu0 0
  %232 = vmatprep.subr.bf16.mxu0 0
  %233 = vmatpush1.bf16.msra.mxu0 0
  %234 = vmatprep.subr.bf16.mxu0 0
  %235 = vmatpush1.bf16.msra.mxu0 0
  %236 = vmatprep.subr.bf16.mxu0 0
  %237 = vmatpush1.bf16.msra.mxu0 0
  %238 = vmatprep.subr.bf16.mxu0 0
  %239 = vmatpush1.bf16.msra.mxu0 0
  %240 = vmatprep.subr.bf16.mxu0 0
  %241 = vmatpush1.bf16.msra.mxu0 0
  %242 = vmatprep.mubr.bf16.mxu0 0
  %243 = vmatmul.mubr.bf16.gmra.mrb[0].mxu0 %v152
  %v244 = vpop.f32.mrb[0].mxu0
  %v245 = vadd.f32 0.0, %v244
  %v246 = vpop.f32.mrb[0].mxu0
  %v247 = vadd.f32 0.0, %v246
  %v248 = vpop.f32.mrb[0].mxu0
  %v249 = vadd.f32 0.0, %v248
  %v250 = vpop.f32.mrb[0].mxu0
  %v251 = vadd.f32 0.0, %v250
  %252 = vmatprep.mubr.bf16.mxu0 0
  %253 = vmatmul.mubr.bf16.gmra.mrb[0].mxu0 %v155
  %v254 = vpop.f32.mrb[0].mxu0
  %v255 = vadd.f32 0.0, %v254
  %v256 = vpop.f32.mrb[0].mxu0
  %v257 = vadd.f32 0.0, %v256
  %v258 = vpop.f32.mrb[0].mxu0
  %v259 = vadd.f32 0.0, %v258
  %v260 = vpop.f32.mrb[0].mxu0
  %v261 = vadd.f32 0.0, %v260
  %262 = vdwg.mxu0
  %v263 = vpack.c.bf16 %v196, %v192
  %v264 = vpack.c.bf16 %v198, %v194
  %v265 = vpack.c.bf16 %v249, %v245
  %v266 = vpack.c.bf16 %v251, %v247
  %v267 = vpack.c.bf16 %v206, %v202
  %v268 = vpack.c.bf16 %v208, %v204
  %v269 = vpack.c.bf16 %v259, %v255
  %v270 = vpack.c.bf16 %v261, %v257
  %v279 = vunpack.c.l.b16 %v263
  %v280 = vunpack.c.l.b16 %v264
  %v281 = vunpack.c.l.b16 %v265
  %v282 = vunpack.c.l.b16 %v266
  %v283 = vunpack.c.h.b16 %v263
  %v284 = vunpack.c.h.b16 %v264
  %v285 = vunpack.c.h.b16 %v265
  %v286 = vunpack.c.h.b16 %v266
  %v287 = vunpack.c.l.b16 %v267
  %v288 = vunpack.c.l.b16 %v268
  %v289 = vunpack.c.l.b16 %v269
  %v290 = vunpack.c.l.b16 %v270
  %v291 = vunpack.c.h.b16 %v267
  %v292 = vunpack.c.h.b16 %v268
  %v293 = vunpack.c.h.b16 %v269
  %v294 = vunpack.c.h.b16 %v270
  %v295 = vpack.c.b16 %v280, %v279
  %v296 = vpack.c.b16 %v282, %v281
  %v297 = vpack.c.b16 %v284, %v283
  %v298 = vpack.c.b16 %v286, %v285
  %v299 = vpack.c.b16 %v288, %v287
  %v300 = vpack.c.b16 %v290, %v289
  %v301 = vpack.c.b16 %v292, %v291
  %v302 = vpack.c.b16 %v294, %v293
  %311 = vst [vmem:[%s4] sm:$0xff] %v295
  %312 = vst [vmem:[%s4 + $0x8] sm:$0xff] %v296
  %313 = vst [vmem:[%s4 + $0x10] sm:$0xff] %v297
  %314 = vst [vmem:[%s4 + $0x18] sm:$0xff] %v298
  %315 = vst [vmem:[%s4 + $0x20] sm:$0xff] %v299
  %316 = vst [vmem:[%s4 + $0x28] sm:$0xff] %v300
  %317 = vst [vmem:[%s4 + $0x30] sm:$0xff] %v301
  %318 = vst [vmem:[%s4 + $0x38] sm:$0xff] %v302
  // Predicated region
  $region18: #{generator_forward.12} parent=0 // pred_check
    _
  $region19: #{generator_forward.12} parent=0 // pred_check_branch
    %320 = sbr.rel (0) target = $region21
  $region20: #{generator_forward.12} parent=0 // pred_region
    _
  $region21: #{generator_forward.12} parent=0 // pred_fallthru
    _
  // Predicated region
  $region22: #{generator_forward.12} parent=0 // pred_check
    _
  $region23: #{generator_forward.12} parent=0 // pred_check_branch
    %322 = sbr.rel (0) target = $region25
  $region24: #{generator_forward.12} parent=0 // pred_region
    _
  $region25: #{generator_forward.12} parent=0 // pred_fallthru
    _

// kernel: generator_forward.13
$region0: #{generator_forward.13}
  #allocation0 [shape = 'u32[]', space=smem, size = 0x4, offset = 0x4, fixed_abs, tag = 'smem constant byte address 0x4 - core index']
  #allocation1 [shape = 'u32[144,128]{1,0:T(1,128)}', space=vmem, size = 0x12000, scoped, tag = 'internal scratch']
  #allocation2 [shape = 'f32[1,32]{1,0:T(1,128)}', space=vmem, size = 0x200, scoped, tag = 'scratch operand']
  #allocation3 [shape = 'f32[1,32]{1,0:T(1,128)}', space=vmem, size = 0x200, scoped, tag = 'scratch operand']
  %s0 = inlined_call_operand.vmem [shape: bf16[128,32], index: 0, kind: input, shape index: {}]
  %s1 = inlined_call_operand.vmem [shape: f32[1,32], index: 1, kind: output, shape index: {0}]
  %s2 = inlined_call_operand.vmem [shape: f32[1,32], index: 2, kind: output, shape index: {1}]
  %3 = xla_tuple %s1, %s2
  %s4 = sld [smem:[#allocation0]]
  $region30: #{generator_forward.13} parent=0
    _
  %s6 = ssub.s32 1, %s4
  %s7 = scalar_select 0, %s6, %s4
  // Predicated region
  $region2: #{generator_forward.13} parent=0 // pred_check
    _
  $region3: #{generator_forward.13} parent=0 // pred_check_branch
    %9 = sbr.rel (0) target = $region5
  $region4: #{generator_forward.13} parent=0 // pred_region
    _
  $region5: #{generator_forward.13} parent=0 // pred_fallthru
    _
  %p10 = scmp.eq.s32.totalorder 0, 0
  // Predicated region
  $region6: #{generator_forward.13} parent=0 // pred_check
    %p11 = pneg %p10
  $region7: #{generator_forward.13} parent=0 // pred_check_branch
    %13 = sbr.rel (%p11) target = $region9
  $region8: #{generator_forward.13} parent=0 // pred_region
    %vm14 = vcmask 253952
    %15 = vst.msk [vmem:[#allocation2] sm:$0x1] %vm14, 0.0
    %16 = vst.msk [vmem:[#allocation3] sm:$0x1] %vm14, 0.0
  $region9: #{generator_forward.13} parent=0 // pred_fallthru
    _
  %v17 = vld [vmem:[%s0] sm:$0xf]
  %v18 = vld [vmem:[%s0 + $0x4] sm:$0xf]
  %v19 = vld [vmem:[%s0 + $0x8] sm:$0xf]
  %v20 = vld [vmem:[%s0 + $0xc] sm:$0xf]
  %v21 = vld [vmem:[%s0 + $0x10] sm:$0xf]
  %v22 = vld [vmem:[%s0 + $0x14] sm:$0xf]
  %v23 = vld [vmem:[%s0 + $0x18] sm:$0xf]
  %v24 = vld [vmem:[%s0 + $0x1c] sm:$0xf]
  %v25 = vld [vmem:[%s0 + $0x20] sm:$0xf]
  %v26 = vld [vmem:[%s0 + $0x24] sm:$0xf]
  %v27 = vld [vmem:[%s0 + $0x28] sm:$0xf]
  %v28 = vld [vmem:[%s0 + $0x2c] sm:$0xf]
  %v29 = vld [vmem:[%s0 + $0x30] sm:$0xf]
  %v30 = vld [vmem:[%s0 + $0x34] sm:$0xf]
  %v31 = vld [vmem:[%s0 + $0x38] sm:$0xf]
  %v32 = vld [vmem:[%s0 + $0x3c] sm:$0xf]
  %v33 = vunpack.c.l.bf16 %v17
  %v34 = vunpack.c.l.bf16 %v18
  %v35 = vunpack.c.l.bf16 %v19
  %v36 = vunpack.c.l.bf16 %v20
  %v37 = vunpack.c.l.bf16 %v21
  %v38 = vunpack.c.l.bf16 %v22
  %v39 = vunpack.c.l.bf16 %v23
  %v40 = vunpack.c.l.bf16 %v24
  %v41 = vunpack.c.l.bf16 %v25
  %v42 = vunpack.c.l.bf16 %v26
  %v43 = vunpack.c.l.bf16 %v27
  %v44 = vunpack.c.l.bf16 %v28
  %v45 = vunpack.c.l.bf16 %v29
  %v46 = vunpack.c.l.bf16 %v30
  %v47 = vunpack.c.l.bf16 %v31
  %v48 = vunpack.c.l.bf16 %v32
  %v49 = vld [vmem:[#allocation2] sm:$0x1]
  %vm50 = vcmask 261120
  %v51 = vsel %vm50, %v33, 0.0
  %v52 = vsel %vm50, %v34, 0.0
  %v53 = vadd.f32 %v51, %v52
  %v54 = vsel %vm50, %v35, 0.0
  %v55 = vadd.f32 %v53, %v54
  %v56 = vsel %vm50, %v36, 0.0
  %v57 = vadd.f32 %v55, %v56
  %v58 = vsel %vm50, %v37, 0.0
  %v59 = vadd.f32 %v57, %v58
  %v60 = vsel %vm50, %v38, 0.0
  %v61 = vadd.f32 %v59, %v60
  %v62 = vsel %vm50, %v39, 0.0
  %v63 = vadd.f32 %v61, %v62
  %v64 = vsel %vm50, %v40, 0.0
  %v65 = vadd.f32 %v63, %v64
  %v66 = vsel %vm50, %v41, 0.0
  %v67 = vadd.f32 %v65, %v66
  %v68 = vsel %vm50, %v42, 0.0
  %v69 = vadd.f32 %v67, %v68
  %v70 = vsel %vm50, %v43, 0.0
  %v71 = vadd.f32 %v69, %v70
  %v72 = vsel %vm50, %v44, 0.0
  %v73 = vadd.f32 %v71, %v72
  %v74 = vsel %vm50, %v45, 0.0
  %v75 = vadd.f32 %v73, %v74
  %v76 = vsel %vm50, %v46, 0.0
  %v77 = vadd.f32 %v75, %v76
  %v78 = vsel %vm50, %v47, 0.0
  %v79 = vadd.f32 %v77, %v78
  %v80 = vsel %vm50, %v48, 0.0
  %v81 = vadd.f32 %v79, %v80
  %v82 = vrot.slane %v81, 4
  %v83 = vadd.f32 %v81, %v82
  %v84 = vrot.slane %v83, 2
  %v85 = vadd.f32 %v83, %v84
  %v86 = vrot.slane %v85, 1
  %v87 = vadd.f32 %v85, %v86
  %v88 = vadd.f32 %v49, %v87
  %vm89 = vcmask 253952
  %90 = vst.msk [vmem:[#allocation2] sm:$0x1] %vm89, %v88
  %v91 = vld [vmem:[#allocation3] sm:$0x1]
  %v92 = vmul.f32 %v33, %v33
  %v93 = vmul.f32 %v34, %v34
  %v94 = vmul.f32 %v35, %v35
  %v95 = vmul.f32 %v36, %v36
  %v96 = vmul.f32 %v37, %v37
  %v97 = vmul.f32 %v38, %v38
  %v98 = vmul.f32 %v39, %v39
  %v99 = vmul.f32 %v40, %v40
  %v100 = vmul.f32 %v41, %v41
  %v101 = vmul.f32 %v42, %v42
  %v102 = vmul.f32 %v43, %v43
  %v103 = vmul.f32 %v44, %v44
  %v104 = vmul.f32 %v45, %v45
  %v105 = vmul.f32 %v46, %v46
  %v106 = vmul.f32 %v47, %v47
  %v107 = vmul.f32 %v48, %v48
  %v108 = vsel %vm50, %v92, 0.0
  %v109 = vsel %vm50, %v93, 0.0
  %v110 = vadd.f32 %v108, %v109
  %v111 = vsel %vm50, %v94, 0.0
  %v112 = vadd.f32 %v110, %v111
  %v113 = vsel %vm50, %v95, 0.0
  %v114 = vadd.f32 %v112, %v113
  %v115 = vsel %vm50, %v96, 0.0
  %v116 = vadd.f32 %v114, %v115
  %v117 = vsel %vm50, %v97, 0.0
  %v118 = vadd.f32 %v116, %v117
  %v119 = vsel %vm50, %v98, 0.0
  %v120 = vadd.f32 %v118, %v119
  %v121 = vsel %vm50, %v99, 0.0
  %v122 = vadd.f32 %v120, %v121
  %v123 = vsel %vm50, %v100, 0.0
  %v124 = vadd.f32 %v122, %v123
  %v125 = vsel %vm50, %v101, 0.0
  %v126 = vadd.f32 %v124, %v125
  %v127 = vsel %vm50, %v102, 0.0
  %v128 = vadd.f32 %v126, %v127
  %v129 = vsel %vm50, %v103, 0.0
  %v130 = vadd.f32 %v128, %v129
  %v131 = vsel %vm50, %v104, 0.0
  %v132 = vadd.f32 %v130, %v131
  %v133 = vsel %vm50, %v105, 0.0
  %v134 = vadd.f32 %v132, %v133
  %v135 = vsel %vm50, %v106, 0.0
  %v136 = vadd.f32 %v134, %v135
  %v137 = vsel %vm50, %v107, 0.0
  %v138 = vadd.f32 %v136, %v137
  %v139 = vrot.slane %v138, 4
  %v140 = vadd.f32 %v138, %v139
  %v141 = vrot.slane %v140, 2
  %v142 = vadd.f32 %v140, %v141
  %v143 = vrot.slane %v142, 1
  %v144 = vadd.f32 %v142, %v143
  %v145 = vadd.f32 %v91, %v144
  %146 = vst.msk [vmem:[#allocation3] sm:$0x1] %vm89, %v145
  // Predicated region
  $region10: #{generator_forward.13} parent=0 // pred_check
    %p147 = pneg %p10
  $region11: #{generator_forward.13} parent=0 // pred_check_branch
    %149 = sbr.rel (%p147) target = $region13
  $region12: #{generator_forward.13} parent=0 // pred_region
    %v150 = vld [vmem:[#allocation2] sm:$0x1]
    %151 = vst.msk [vmem:[%s1] sm:$0x1] %vm89, %v150
    %v152 = vld [vmem:[#allocation3] sm:$0x1]
    %153 = vst.msk [vmem:[%s2] sm:$0x1] %vm89, %v152
  $region13: #{generator_forward.13} parent=0 // pred_fallthru
    _
  // Predicated region
  $region14: #{generator_forward.13} parent=0 // pred_check
    _
  $region15: #{generator_forward.13} parent=0 // pred_check_branch
    %155 = sbr.rel (0) target = $region17
  $region16: #{generator_forward.13} parent=0 // pred_region
    _
  $region17: #{generator_forward.13} parent=0 // pred_fallthru
    _
  // Predicated region
  $region18: #{generator_forward.13} parent=0 // pred_check
    _
  $region19: #{generator_forward.13} parent=0 // pred_check_branch
    %157 = sbr.rel (0) target = $region21
  $region20: #{generator_forward.13} parent=0 // pred_region
    _
  $region21: #{generator_forward.13} parent=0 // pred_fallthru
    _
  // Predicated region
  $region22: #{generator_forward.13} parent=0 // pred_check
    _
  $region23: #{generator_forward.13} parent=0 // pred_check_branch
    %159 = sbr.rel (0) target = $region25
  $region24: #{generator_forward.13} parent=0 // pred_region
    _
  $region25: #{generator_forward.13} parent=0 // pred_fallthru
    _
  // Predicated region
  $region26: #{generator_forward.13} parent=0 // pred_check
    _
  $region27: #{generator_forward.13} parent=0 // pred_check_branch
    %161 = sbr.rel (0) target = $region29
  $region28: #{generator_forward.13} parent=0 // pred_region
    _
  $region29: #{generator_forward.13} parent=0 // pred_fallthru
    _

// kernel: generator_forward.14
$region0: #{generator_forward.14}
  #allocation0 [shape = 'u32[]', space=smem, size = 0x4, offset = 0x4, fixed_abs, tag = 'smem constant byte address 0x4 - core index']
  #allocation1 [shape = 'u32[144,128]{1,0:T(1,128)}', space=vmem, size = 0x12000, scoped, tag = 'internal scratch']
  %s0 = inlined_call_operand.vmem [shape: bf16[128,32], index: 0, kind: input, shape index: {}]
  %s1 = inlined_call_operand.vmem [shape: f32[1,32], index: 1, kind: input, shape index: {}]
  %s2 = inlined_call_operand.vmem [shape: f32[1,32], index: 2, kind: input, shape index: {}]
  %s3 = inlined_call_operand.vmem [shape: bf16[32,256], index: 3, kind: input, shape index: {}]
  %s4 = inlined_call_operand.vmem [shape: bf16[128,256], index: 4, kind: output, shape index: {}]
  %s5 = sld [smem:[#allocation0]]
  $region26: #{generator_forward.14} parent=0
    _
  %s7 = ssub.s32 1, %s5
  %s8 = scalar_select 0, %s7, %s5
  // Predicated region
  $region2: #{generator_forward.14} parent=0 // pred_check
    _
  $region3: #{generator_forward.14} parent=0 // pred_check_branch
    %10 = sbr.rel (0) target = $region5
  $region4: #{generator_forward.14} parent=0 // pred_region
    _
  $region5: #{generator_forward.14} parent=0 // pred_fallthru
    _
  // Predicated region
  $region6: #{generator_forward.14} parent=0 // pred_check
    _
  $region7: #{generator_forward.14} parent=0 // pred_check_branch
    %12 = sbr.rel (0) target = $region9
  $region8: #{generator_forward.14} parent=0 // pred_region
    _
  $region9: #{generator_forward.14} parent=0 // pred_fallthru
    _
  // Predicated region
  $region10: #{generator_forward.14} parent=0 // pred_check
    _
  $region11: #{generator_forward.14} parent=0 // pred_check_branch
    %14 = sbr.rel (0) target = $region13
  $region12: #{generator_forward.14} parent=0 // pred_region
    _
  $region13: #{generator_forward.14} parent=0 // pred_fallthru
    _
  // Predicated region
  $region14: #{generator_forward.14} parent=0 // pred_check
    _
  $region15: #{generator_forward.14} parent=0 // pred_check_branch
    %16 = sbr.rel (0) target = $region17
  $region16: #{generator_forward.14} parent=0 // pred_region
    _
  $region17: #{generator_forward.14} parent=0 // pred_fallthru
    _
  %v18 = vld [vmem:[%s0] sm:$0xf]
  %v19 = vld [vmem:[%s0 + $0x4] sm:$0xf]
  %v20 = vld [vmem:[%s0 + $0x8] sm:$0xf]
  %v21 = vld [vmem:[%s0 + $0xc] sm:$0xf]
  %v22 = vld [vmem:[%s0 + $0x10] sm:$0xf]
  %v23 = vld [vmem:[%s0 + $0x14] sm:$0xf]
  %v24 = vld [vmem:[%s0 + $0x18] sm:$0xf]
  %v25 = vld [vmem:[%s0 + $0x1c] sm:$0xf]
  %v26 = vld [vmem:[%s0 + $0x20] sm:$0xf]
  %v27 = vld [vmem:[%s0 + $0x24] sm:$0xf]
  %v28 = vld [vmem:[%s0 + $0x28] sm:$0xf]
  %v29 = vld [vmem:[%s0 + $0x2c] sm:$0xf]
  %v30 = vld [vmem:[%s0 + $0x30] sm:$0xf]
  %v31 = vld [vmem:[%s0 + $0x34] sm:$0xf]
  %v32 = vld [vmem:[%s0 + $0x38] sm:$0xf]
  %v33 = vld [vmem:[%s0 + $0x3c] sm:$0xf]
  %v34 = vunpack.c.l.bf16 %v18
  %v35 = vunpack.c.l.bf16 %v19
  %v36 = vunpack.c.l.bf16 %v20
  %v37 = vunpack.c.l.bf16 %v21
  %v38 = vunpack.c.l.bf16 %v22
  %v39 = vunpack.c.l.bf16 %v23
  %v40 = vunpack.c.l.bf16 %v24
  %v41 = vunpack.c.l.bf16 %v25
  %v42 = vunpack.c.l.bf16 %v26
  %v43 = vunpack.c.l.bf16 %v27
  %v44 = vunpack.c.l.bf16 %v28
  %v45 = vunpack.c.l.bf16 %v29
  %v46 = vunpack.c.l.bf16 %v30
  %v47 = vunpack.c.l.bf16 %v31
  %v48 = vunpack.c.l.bf16 %v32
  %v49 = vunpack.c.l.bf16 %v33
  %v50 = vld [vmem:[%s1] sm:$0x1]
  %v52 = vlaneseq
  %v53 = vshrl.u32 %v52, 7
  %v54 = vsub.s32 0, %v53
  %v55 = vrot.slane %v50, %v54
  %v57 = vmul.f32 %v34, %v55
  %v58 = vmul.f32 %v35, %v55
  %v59 = vmul.f32 %v36, %v55
  %v60 = vmul.f32 %v37, %v55
  %v61 = vmul.f32 %v38, %v55
  %v62 = vmul.f32 %v39, %v55
  %v63 = vmul.f32 %v40, %v55
  %v64 = vmul.f32 %v41, %v55
  %v65 = vmul.f32 %v42, %v55
  %v66 = vmul.f32 %v43, %v55
  %v67 = vmul.f32 %v44, %v55
  %v68 = vmul.f32 %v45, %v55
  %v69 = vmul.f32 %v46, %v55
  %v70 = vmul.f32 %v47, %v55
  %v71 = vmul.f32 %v48, %v55
  %v72 = vmul.f32 %v49, %v55
  %v73 = vld [vmem:[%s2] sm:$0x1]
  %v75 = vlaneseq
  %v76 = vshrl.u32 %v75, 7
  %v77 = vsub.s32 0, %v76
  %v78 = vrot.slane %v73, %v77
  %v80 = vadd.f32 %v57, %v78
  %v81 = vadd.f32 %v58, %v78
  %v82 = vadd.f32 %v59, %v78
  %v83 = vadd.f32 %v60, %v78
  %v84 = vadd.f32 %v61, %v78
  %v85 = vadd.f32 %v62, %v78
  %v86 = vadd.f32 %v63, %v78
  %v87 = vadd.f32 %v64, %v78
  %v88 = vadd.f32 %v65, %v78
  %v89 = vadd.f32 %v66, %v78
  %v90 = vadd.f32 %v67, %v78
  %v91 = vadd.f32 %v68, %v78
  %v92 = vadd.f32 %v69, %v78
  %v93 = vadd.f32 %v70, %v78
  %v94 = vadd.f32 %v71, %v78
  %v95 = vadd.f32 %v72, %v78
  %v96 = vmax.f32 %v80, 0.0
  %v97 = vmax.f32 %v81, 0.0
  %v98 = vmax.f32 %v82, 0.0
  %v99 = vmax.f32 %v83, 0.0
  %v100 = vmax.f32 %v84, 0.0
  %v101 = vmax.f32 %v85, 0.0
  %v102 = vmax.f32 %v86, 0.0
  %v103 = vmax.f32 %v87, 0.0
  %v104 = vmax.f32 %v88, 0.0
  %v105 = vmax.f32 %v89, 0.0
  %v106 = vmax.f32 %v90, 0.0
  %v107 = vmax.f32 %v91, 0.0
  %v108 = vmax.f32 %v92, 0.0
  %v109 = vmax.f32 %v93, 0.0
  %v110 = vmax.f32 %v94, 0.0
  %v111 = vmax.f32 %v95, 0.0
  %v112 = vpack.c.bf16 %v97, %v96
  %v113 = vpack.c.bf16 %v99, %v98
  %v114 = vpack.c.bf16 %v101, %v100
  %v115 = vpack.c.bf16 %v103, %v102
  %v116 = vpack.c.bf16 %v105, %v104
  %v117 = vpack.c.bf16 %v107, %v106
  %v118 = vpack.c.bf16 %v109, %v108
  %v119 = vpack.c.bf16 %v111, %v110
  %v120 = vld [vmem:[%s3] sm:$0xff]
  %v121 = vld [vmem:[%s3 + $0x8] sm:$0xff]
  %v122 = vld [vmem:[%s3 + $0x10] sm:$0xff]
  %v123 = vld [vmem:[%s3 + $0x18] sm:$0xff]
  %v128 = vunpack.c.l.b16 %v120
  %v129 = vunpack.c.h.b16 %v120
  %v130 = vunpack.c.l.b16 %v121
  %v131 = vunpack.c.h.b16 %v121
  %v132 = vunpack.c.l.b16 %v122
  %v133 = vunpack.c.h.b16 %v122
  %v134 = vunpack.c.l.b16 %v123
  %v135 = vunpack.c.h.b16 %v123
  %v136 = vpack.c.b16 %v130, %v128
  %v137 = vpack.c.b16 %v131, %v129
  %v138 = vpack.c.b16 %v134, %v132
  %v139 = vpack.c.b16 %v135, %v133
  %vm144 = vcmask 261120
  %v146 = vsel %vm144, %v112, 0
  %v149 = vsel %vm144, %v113, 0
  %v152 = vsel %vm144, %v114, 0
  %v155 = vsel %vm144, %v115, 0
  %v158 = vsel %vm144, %v116, 0
  %v161 = vsel %vm144, %v117, 0
  %v164 = vsel %vm144, %v118, 0
  %v167 = vsel %vm144, %v119, 0
  %169 = vmatprep.subr.bf16.mxu0 %v137
  %170 = vmatpush1.bf16.msra.mxu0 %v136
  %171 = vmatprep.subr.bf16.mxu0 %v139
  %172 = vmatpush1.bf16.msra.mxu0 %v138
  %173 = vmatprep.subr.bf16.mxu0 0
  %174 = vmatpush1.bf16.msra.mxu0 0
  %175 = vmatprep.subr.bf16.mxu0 0
  %176 = vmatpush1.bf16.msra.mxu0 0
  %177 = vmatprep.subr.bf16.mxu0 0
  %178 = vmatpush1.bf16.msra.mxu0 0
  %179 = vmatprep.subr.bf16.mxu0 0
  %180 = vmatpush1.bf16.msra.mxu0 0
  %181 = vmatprep.subr.bf16.mxu0 0
  %182 = vmatpush1.bf16.msra.mxu0 0
  %183 = vmatprep.subr.bf16.mxu0 0
  %184 = vmatpush1.bf16.msra.mxu0 0
  %185 = vmatprep.subr.bf16.mxu0 0
  %186 = vmatpush1.bf16.msra.mxu0 0
  %187 = vmatprep.subr.bf16.mxu0 0
  %188 = vmatpush1.bf16.msra.mxu0 0
  %189 = vmatprep.subr.bf16.mxu0 0
  %190 = vmatpush1.bf16.msra.mxu0 0
  %191 = vmatprep.subr.bf16.mxu0 0
  %192 = vmatpush1.bf16.msra.mxu0 0
  %193 = vmatprep.subr.bf16.mxu0 0
  %194 = vmatpush1.bf16.msra.mxu0 0
  %195 = vmatprep.subr.bf16.mxu0 0
  %196 = vmatpush1.bf16.msra.mxu0 0
  %197 = vmatprep.subr.bf16.mxu0 0
  %198 = vmatpush1.bf16.msra.mxu0 0
  %199 = vmatprep.subr.bf16.mxu0 0
  %200 = vmatpush1.bf16.msra.mxu0 0
  %201 = vmatprep.mubr.bf16.mxu0 0
  %202 = vmatmul.mubr.bf16.gmra.mrb[0].mxu0 %v146
  %v203 = vpop.f32.mrb[0].mxu0
  %v204 = vadd.f32 0.0, %v203
  %v205 = vpop.f32.mrb[0].mxu0
  %v206 = vadd.f32 0.0, %v205
  %v207 = vpop.f32.mrb[0].mxu0
  %v208 = vadd.f32 0.0, %v207
  %v209 = vpop.f32.mrb[0].mxu0
  %v210 = vadd.f32 0.0, %v209
  %211 = vmatprep.mubr.bf16.mxu0 0
  %212 = vmatmul.mubr.bf16.gmra.mrb[0].mxu0 %v149
  %v213 = vpop.f32.mrb[0].mxu0
  %v214 = vadd.f32 0.0, %v213
  %v215 = vpop.f32.mrb[0].mxu0
  %v216 = vadd.f32 0.0, %v215
  %v217 = vpop.f32.mrb[0].mxu0
  %v218 = vadd.f32 0.0, %v217
  %v219 = vpop.f32.mrb[0].mxu0
  %v220 = vadd.f32 0.0, %v219
  %221 = vmatprep.mubr.bf16.mxu0 0
  %222 = vmatmul.mubr.bf16.gmra.mrb[0].mxu0 %v152
  %v223 = vpop.f32.mrb[0].mxu0
  %v224 = vadd.f32 0.0, %v223
  %v225 = vpop.f32.mrb[0].mxu0
  %v226 = vadd.f32 0.0, %v225
  %v227 = vpop.f32.mrb[0].mxu0
  %v228 = vadd.f32 0.0, %v227
  %v229 = vpop.f32.mrb[0].mxu0
  %v230 = vadd.f32 0.0, %v229
  %231 = vmatprep.mubr.bf16.mxu0 0
  %232 = vmatmul.mubr.bf16.gmra.mrb[0].mxu0 %v155
  %v233 = vpop.f32.mrb[0].mxu0
  %v234 = vadd.f32 0.0, %v233
  %v235 = vpop.f32.mrb[0].mxu0
  %v236 = vadd.f32 0.0, %v235
  %v237 = vpop.f32.mrb[0].mxu0
  %v238 = vadd.f32 0.0, %v237
  %v239 = vpop.f32.mrb[0].mxu0
  %v240 = vadd.f32 0.0, %v239
  %241 = vmatprep.mubr.bf16.mxu0 0
  %242 = vmatmul.mubr.bf16.gmra.mrb[0].mxu0 %v158
  %v243 = vpop.f32.mrb[0].mxu0
  %v244 = vadd.f32 0.0, %v243
  %v245 = vpop.f32.mrb[0].mxu0
  %v246 = vadd.f32 0.0, %v245
  %v247 = vpop.f32.mrb[0].mxu0
  %v248 = vadd.f32 0.0, %v247
  %v249 = vpop.f32.mrb[0].mxu0
  %v250 = vadd.f32 0.0, %v249
  %251 = vmatprep.mubr.bf16.mxu0 0
  %252 = vmatmul.mubr.bf16.gmra.mrb[0].mxu0 %v161
  %v253 = vpop.f32.mrb[0].mxu0
  %v254 = vadd.f32 0.0, %v253
  %v255 = vpop.f32.mrb[0].mxu0
  %v256 = vadd.f32 0.0, %v255
  %v257 = vpop.f32.mrb[0].mxu0
  %v258 = vadd.f32 0.0, %v257
  %v259 = vpop.f32.mrb[0].mxu0
  %v260 = vadd.f32 0.0, %v259
  %261 = vmatprep.mubr.bf16.mxu0 0
  %262 = vmatmul.mubr.bf16.gmra.mrb[0].mxu0 %v164
  %v263 = vpop.f32.mrb[0].mxu0
  %v264 = vadd.f32 0.0, %v263
  %v265 = vpop.f32.mrb[0].mxu0
  %v266 = vadd.f32 0.0, %v265
  %v267 = vpop.f32.mrb[0].mxu0
  %v268 = vadd.f32 0.0, %v267
  %v269 = vpop.f32.mrb[0].mxu0
  %v270 = vadd.f32 0.0, %v269
  %271 = vmatprep.mubr.bf16.mxu0 0
  %272 = vmatmul.mubr.bf16.gmra.mrb[0].mxu0 %v167
  %v273 = vpop.f32.mrb[0].mxu0
  %v274 = vadd.f32 0.0, %v273
  %v275 = vpop.f32.mrb[0].mxu0
  %v276 = vadd.f32 0.0, %v275
  %v277 = vpop.f32.mrb[0].mxu0
  %v278 = vadd.f32 0.0, %v277
  %v279 = vpop.f32.mrb[0].mxu0
  %v280 = vadd.f32 0.0, %v279
  %281 = vdwg.mxu0
  %v282 = vpack.c.bf16 %v208, %v204
  %v283 = vpack.c.bf16 %v210, %v206
  %v284 = vpack.c.bf16 %v218, %v214
  %v285 = vpack.c.bf16 %v220, %v216
  %v286 = vpack.c.bf16 %v228, %v224
  %v287 = vpack.c.bf16 %v230, %v226
  %v288 = vpack.c.bf16 %v238, %v234
  %v289 = vpack.c.bf16 %v240, %v236
  %v290 = vpack.c.bf16 %v248, %v244
  %v291 = vpack.c.bf16 %v250, %v246
  %v292 = vpack.c.bf16 %v258, %v254
  %v293 = vpack.c.bf16 %v260, %v256
  %v294 = vpack.c.bf16 %v268, %v264
  %v295 = vpack.c.bf16 %v270, %v266
  %v296 = vpack.c.bf16 %v278, %v274
  %v297 = vpack.c.bf16 %v280, %v276
  %v314 = vunpack.c.l.b16 %v282
  %v315 = vunpack.c.l.b16 %v283
  %v316 = vunpack.c.h.b16 %v282
  %v317 = vunpack.c.h.b16 %v283
  %v318 = vunpack.c.l.b16 %v284
  %v319 = vunpack.c.l.b16 %v285
  %v320 = vunpack.c.h.b16 %v284
  %v321 = vunpack.c.h.b16 %v285
  %v322 = vunpack.c.l.b16 %v286
  %v323 = vunpack.c.l.b16 %v287
  %v324 = vunpack.c.h.b16 %v286
  %v325 = vunpack.c.h.b16 %v287
  %v326 = vunpack.c.l.b16 %v288
  %v327 = vunpack.c.l.b16 %v289
  %v328 = vunpack.c.h.b16 %v288
  %v329 = vunpack.c.h.b16 %v289
  %v330 = vunpack.c.l.b16 %v290
  %v331 = vunpack.c.l.b16 %v291
  %v332 = vunpack.c.h.b16 %v290
  %v333 = vunpack.c.h.b16 %v291
  %v334 = vunpack.c.l.b16 %v292
  %v335 = vunpack.c.l.b16 %v293
  %v336 = vunpack.c.h.b16 %v292
  %v337 = vunpack.c.h.b16 %v293
  %v338 = vunpack.c.l.b16 %v294
  %v339 = vunpack.c.l.b16 %v295
  %v340 = vunpack.c.h.b16 %v294
  %v341 = vunpack.c.h.b16 %v295
  %v342 = vunpack.c.l.b16 %v296
  %v343 = vunpack.c.l.b16 %v297
  %v344 = vunpack.c.h.b16 %v296
  %v345 = vunpack.c.h.b16 %v297
  %v346 = vpack.c.b16 %v315, %v314
  %v347 = vpack.c.b16 %v317, %v316
  %v348 = vpack.c.b16 %v319, %v318
  %v349 = vpack.c.b16 %v321, %v320
  %v350 = vpack.c.b16 %v323, %v322
  %v351 = vpack.c.b16 %v325, %v324
  %v352 = vpack.c.b16 %v327, %v326
  %v353 = vpack.c.b16 %v329, %v328
  %v354 = vpack.c.b16 %v331, %v330
  %v355 = vpack.c.b16 %v333, %v332
  %v356 = vpack.c.b16 %v335, %v334
  %v357 = vpack.c.b16 %v337, %v336
  %v358 = vpack.c.b16 %v339, %v338
  %v359 = vpack.c.b16 %v341, %v340
  %v360 = vpack.c.b16 %v343, %v342
  %v361 = vpack.c.b16 %v345, %v344
  %378 = vst [vmem:[%s4] sm:$0xff] %v346
  %379 = vst [vmem:[%s4 + $0x8] sm:$0xff] %v347
  %380 = vst [vmem:[%s4 + $0x10] sm:$0xff] %v348
  %381 = vst [vmem:[%s4 + $0x18] sm:$0xff] %v349
  %382 = vst [vmem:[%s4 + $0x20] sm:$0xff] %v350
  %383 = vst [vmem:[%s4 + $0x28] sm:$0xff] %v351
  %384 = vst [vmem:[%s4 + $0x30] sm:$0xff] %v352
  %385 = vst [vmem:[%s4 + $0x38] sm:$0xff] %v353
  %386 = vst [vmem:[%s4 + $0x40] sm:$0xff] %v354
  %387 = vst [vmem:[%s4 + $0x48] sm:$0xff] %v355
  %388 = vst [vmem:[%s4 + $0x50] sm:$0xff] %v356
  %389 = vst [vmem:[%s4 + $0x58] sm:$0xff] %v357
  %390 = vst [vmem:[%s4 + $0x60] sm:$0xff] %v358
  %391 = vst [vmem:[%s4 + $0x68] sm:$0xff] %v359
  %392 = vst [vmem:[%s4 + $0x70] sm:$0xff] %v360
  %393 = vst [vmem:[%s4 + $0x78] sm:$0xff] %v361
  // Predicated region
  $region18: #{generator_forward.14} parent=0 // pred_check
    _
  $region19: #{generator_forward.14} parent=0 // pred_check_branch
    %395 = sbr.rel (0) target = $region21
  $region20: #{generator_forward.14} parent=0 // pred_region
    _
  $region21: #{generator_forward.14} parent=0 // pred_fallthru
    _
  // Predicated region
  $region22: #{generator_forward.14} parent=0 // pred_check
    _
  $region23: #{generator_forward.14} parent=0 // pred_check_branch
    %397 = sbr.rel (0) target = $region25
  $region24: #{generator_forward.14} parent=0 // pred_region
    _
  $region25: #{generator_forward.14} parent=0 // pred_fallthru
    _

// kernel: generator_forward.15
$region0: #{generator_forward.15}
  #allocation0 [shape = 'u32[]', space=smem, size = 0x4, offset = 0x4, fixed_abs, tag = 'smem constant byte address 0x4 - core index']
  #allocation1 [shape = 'u32[144,128]{1,0:T(1,128)}', space=vmem, size = 0x12000, scoped, tag = 'internal scratch']
  #allocation2 [shape = 'f32[1,16]{1,0:T(1,128)}', space=vmem, size = 0x200, scoped, tag = 'scratch operand']
  #allocation3 [shape = 'f32[1,16]{1,0:T(1,128)}', space=vmem, size = 0x200, scoped, tag = 'scratch operand']
  %s0 = inlined_call_operand.vmem [shape: bf16[512,16], index: 0, kind: input, shape index: {}]
  %s1 = inlined_call_operand.vmem [shape: f32[1,16], index: 1, kind: output, shape index: {0}]
  %s2 = inlined_call_operand.vmem [shape: f32[1,16], index: 2, kind: output, shape index: {1}]
  %3 = xla_tuple %s1, %s2
  %s4 = sld [smem:[#allocation0]]
  $region30: #{generator_forward.15} parent=0
    _
  %s6 = ssub.s32 1, %s4
  %s7 = scalar_select 0, %s6, %s4
  // Predicated region
  $region2: #{generator_forward.15} parent=0 // pred_check
    _
  $region3: #{generator_forward.15} parent=0 // pred_check_branch
    %9 = sbr.rel (0) target = $region5
  $region4: #{generator_forward.15} parent=0 // pred_region
    _
  $region5: #{generator_forward.15} parent=0 // pred_fallthru
    _
  %p10 = scmp.eq.s32.totalorder 0, 0
  // Predicated region
  $region6: #{generator_forward.15} parent=0 // pred_check
    %p11 = pneg %p10
  $region7: #{generator_forward.15} parent=0 // pred_check_branch
    %13 = sbr.rel (%p11) target = $region9
  $region8: #{generator_forward.15} parent=0 // pred_region
    %vm14 = vcmask 122880
    %15 = vst.msk [vmem:[#allocation2] sm:$0x1] %vm14, 0.0
    %16 = vst.msk [vmem:[#allocation3] sm:$0x1] %vm14, 0.0
  $region9: #{generator_forward.15} parent=0 // pred_fallthru
    _
  %v17 = vld [vmem:[%s0] sm:$0xf]
  %v18 = vld [vmem:[%s0 + $0x4] sm:$0xf]
  %v19 = vld [vmem:[%s0 + $0x8] sm:$0xf]
  %v20 = vld [vmem:[%s0 + $0xc] sm:$0xf]
  %v21 = vld [vmem:[%s0 + $0x10] sm:$0xf]
  %v22 = vld [vmem:[%s0 + $0x14] sm:$0xf]
  %v23 = vld [vmem:[%s0 + $0x18] sm:$0xf]
  %v24 = vld [vmem:[%s0 + $0x1c] sm:$0xf]
  %v25 = vld [vmem:[%s0 + $0x20] sm:$0xf]
  %v26 = vld [vmem:[%s0 + $0x24] sm:$0xf]
  %v27 = vld [vmem:[%s0 + $0x28] sm:$0xf]
  %v28 = vld [vmem:[%s0 + $0x2c] sm:$0xf]
  %v29 = vld [vmem:[%s0 + $0x30] sm:$0xf]
  %v30 = vld [vmem:[%s0 + $0x34] sm:$0xf]
  %v31 = vld [vmem:[%s0 + $0x38] sm:$0xf]
  %v32 = vld [vmem:[%s0 + $0x3c] sm:$0xf]
  %v33 = vld [vmem:[%s0 + $0x40] sm:$0xf]
  %v34 = vld [vmem:[%s0 + $0x44] sm:$0xf]
  %v35 = vld [vmem:[%s0 + $0x48] sm:$0xf]
  %v36 = vld [vmem:[%s0 + $0x4c] sm:$0xf]
  %v37 = vld [vmem:[%s0 + $0x50] sm:$0xf]
  %v38 = vld [vmem:[%s0 + $0x54] sm:$0xf]
  %v39 = vld [vmem:[%s0 + $0x58] sm:$0xf]
  %v40 = vld [vmem:[%s0 + $0x5c] sm:$0xf]
  %v41 = vld [vmem:[%s0 + $0x60] sm:$0xf]
  %v42 = vld [vmem:[%s0 + $0x64] sm:$0xf]
  %v43 = vld [vmem:[%s0 + $0x68] sm:$0xf]
  %v44 = vld [vmem:[%s0 + $0x6c] sm:$0xf]
  %v45 = vld [vmem:[%s0 + $0x70] sm:$0xf]
  %v46 = vld [vmem:[%s0 + $0x74] sm:$0xf]
  %v47 = vld [vmem:[%s0 + $0x78] sm:$0xf]
  %v48 = vld [vmem:[%s0 + $0x7c] sm:$0xf]
  %v49 = vld [vmem:[%s0 + $0x80] sm:$0xf]
  %v50 = vld [vmem:[%s0 + $0x84] sm:$0xf]
  %v51 = vld [vmem:[%s0 + $0x88] sm:$0xf]
  %v52 = vld [vmem:[%s0 + $0x8c] sm:$0xf]
  %v53 = vld [vmem:[%s0 + $0x90] sm:$0xf]
  %v54 = vld [vmem:[%s0 + $0x94] sm:$0xf]
  %v55 = vld [vmem:[%s0 + $0x98] sm:$0xf]
  %v56 = vld [vmem:[%s0 + $0x9c] sm:$0xf]
  %v57 = vld [vmem:[%s0 + $0xa0] sm:$0xf]
  %v58 = vld [vmem:[%s0 + $0xa4] sm:$0xf]
  %v59 = vld [vmem:[%s0 + $0xa8] sm:$0xf]
  %v60 = vld [vmem:[%s0 + $0xac] sm:$0xf]
  %v61 = vld [vmem:[%s0 + $0xb0] sm:$0xf]
  %v62 = vld [vmem:[%s0 + $0xb4] sm:$0xf]
  %v63 = vld [vmem:[%s0 + $0xb8] sm:$0xf]
  %v64 = vld [vmem:[%s0 + $0xbc] sm:$0xf]
  %v65 = vld [vmem:[%s0 + $0xc0] sm:$0xf]
  %v66 = vld [vmem:[%s0 + $0xc4] sm:$0xf]
  %v67 = vld [vmem:[%s0 + $0xc8] sm:$0xf]
  %v68 = vld [vmem:[%s0 + $0xcc] sm:$0xf]
  %v69 = vld [vmem:[%s0 + $0xd0] sm:$0xf]
  %v70 = vld [vmem:[%s0 + $0xd4] sm:$0xf]
  %v71 = vld [vmem:[%s0 + $0xd8] sm:$0xf]
  %v72 = vld [vmem:[%s0 + $0xdc] sm:$0xf]
  %v73 = vld [vmem:[%s0 + $0xe0] sm:$0xf]
  %v74 = vld [vmem:[%s0 + $0xe4] sm:$0xf]
  %v75 = vld [vmem:[%s0 + $0xe8] sm:$0xf]
  %v76 = vld [vmem:[%s0 + $0xec] sm:$0xf]
  %v77 = vld [vmem:[%s0 + $0xf0] sm:$0xf]
  %v78 = vld [vmem:[%s0 + $0xf4] sm:$0xf]
  %v79 = vld [vmem:[%s0 + $0xf8] sm:$0xf]
  %v80 = vld [vmem:[%s0 + $0xfc] sm:$0xf]
  %v81 = vunpack.c.l.bf16 %v17
  %v82 = vunpack.c.l.bf16 %v18
  %v83 = vunpack.c.l.bf16 %v19
  %v84 = vunpack.c.l.bf16 %v20
  %v85 = vunpack.c.l.bf16 %v21
  %v86 = vunpack.c.l.bf16 %v22
  %v87 = vunpack.c.l.bf16 %v23
  %v88 = vunpack.c.l.bf16 %v24
  %v89 = vunpack.c.l.bf16 %v25
  %v90 = vunpack.c.l.bf16 %v26
  %v91 = vunpack.c.l.bf16 %v27
  %v92 = vunpack.c.l.bf16 %v28
  %v93 = vunpack.c.l.bf16 %v29
  %v94 = vunpack.c.l.bf16 %v30
  %v95 = vunpack.c.l.bf16 %v31
  %v96 = vunpack.c.l.bf16 %v32
  %v97 = vunpack.c.l.bf16 %v33
  %v98 = vunpack.c.l.bf16 %v34
  %v99 = vunpack.c.l.bf16 %v35
  %v100 = vunpack.c.l.bf16 %v36
  %v101 = vunpack.c.l.bf16 %v37
  %v102 = vunpack.c.l.bf16 %v38
  %v103 = vunpack.c.l.bf16 %v39
  %v104 = vunpack.c.l.bf16 %v40
  %v105 = vunpack.c.l.bf16 %v41
  %v106 = vunpack.c.l.bf16 %v42
  %v107 = vunpack.c.l.bf16 %v43
  %v108 = vunpack.c.l.bf16 %v44
  %v109 = vunpack.c.l.bf16 %v45
  %v110 = vunpack.c.l.bf16 %v46
  %v111 = vunpack.c.l.bf16 %v47
  %v112 = vunpack.c.l.bf16 %v48
  %v113 = vunpack.c.l.bf16 %v49
  %v114 = vunpack.c.l.bf16 %v50
  %v115 = vunpack.c.l.bf16 %v51
  %v116 = vunpack.c.l.bf16 %v52
  %v117 = vunpack.c.l.bf16 %v53
  %v118 = vunpack.c.l.bf16 %v54
  %v119 = vunpack.c.l.bf16 %v55
  %v120 = vunpack.c.l.bf16 %v56
  %v121 = vunpack.c.l.bf16 %v57
  %v122 = vunpack.c.l.bf16 %v58
  %v123 = vunpack.c.l.bf16 %v59
  %v124 = vunpack.c.l.bf16 %v60
  %v125 = vunpack.c.l.bf16 %v61
  %v126 = vunpack.c.l.bf16 %v62
  %v127 = vunpack.c.l.bf16 %v63
  %v128 = vunpack.c.l.bf16 %v64
  %v129 = vunpack.c.l.bf16 %v65
  %v130 = vunpack.c.l.bf16 %v66
  %v131 = vunpack.c.l.bf16 %v67
  %v132 = vunpack.c.l.bf16 %v68
  %v133 = vunpack.c.l.bf16 %v69
  %v134 = vunpack.c.l.bf16 %v70
  %v135 = vunpack.c.l.bf16 %v71
  %v136 = vunpack.c.l.bf16 %v72
  %v137 = vunpack.c.l.bf16 %v73
  %v138 = vunpack.c.l.bf16 %v74
  %v139 = vunpack.c.l.bf16 %v75
  %v140 = vunpack.c.l.bf16 %v76
  %v141 = vunpack.c.l.bf16 %v77
  %v142 = vunpack.c.l.bf16 %v78
  %v143 = vunpack.c.l.bf16 %v79
  %v144 = vunpack.c.l.bf16 %v80
  %v145 = vld [vmem:[#allocation2] sm:$0x1]
  %vm146 = vcmask 130048
  %v147 = vsel %vm146, %v81, 0.0
  %v148 = vsel %vm146, %v82, 0.0
  %v149 = vadd.f32 %v147, %v148
  %v150 = vsel %vm146, %v83, 0.0
  %v151 = vadd.f32 %v149, %v150
  %v152 = vsel %vm146, %v84, 0.0
  %v153 = vadd.f32 %v151, %v152
  %v154 = vsel %vm146, %v85, 0.0
  %v155 = vadd.f32 %v153, %v154
  %v156 = vsel %vm146, %v86, 0.0
  %v157 = vadd.f32 %v155, %v156
  %v158 = vsel %vm146, %v87, 0.0
  %v159 = vadd.f32 %v157, %v158
  %v160 = vsel %vm146, %v88, 0.0
  %v161 = vadd.f32 %v159, %v160
  %v162 = vsel %vm146, %v89, 0.0
  %v163 = vadd.f32 %v161, %v162
  %v164 = vsel %vm146, %v90, 0.0
  %v165 = vadd.f32 %v163, %v164
  %v166 = vsel %vm146, %v91, 0.0
  %v167 = vadd.f32 %v165, %v166
  %v168 = vsel %vm146, %v92, 0.0
  %v169 = vadd.f32 %v167, %v168
  %v170 = vsel %vm146, %v93, 0.0
  %v171 = vadd.f32 %v169, %v170
  %v172 = vsel %vm146, %v94, 0.0
  %v173 = vadd.f32 %v171, %v172
  %v174 = vsel %vm146, %v95, 0.0
  %v175 = vadd.f32 %v173, %v174
  %v176 = vsel %vm146, %v96, 0.0
  %v177 = vadd.f32 %v175, %v176
  %v178 = vsel %vm146, %v97, 0.0
  %v179 = vadd.f32 %v177, %v178
  %v180 = vsel %vm146, %v98, 0.0
  %v181 = vadd.f32 %v179, %v180
  %v182 = vsel %vm146, %v99, 0.0
  %v183 = vadd.f32 %v181, %v182
  %v184 = vsel %vm146, %v100, 0.0
  %v185 = vadd.f32 %v183, %v184
  %v186 = vsel %vm146, %v101, 0.0
  %v187 = vadd.f32 %v185, %v186
  %v188 = vsel %vm146, %v102, 0.0
  %v189 = vadd.f32 %v187, %v188
  %v190 = vsel %vm146, %v103, 0.0
  %v191 = vadd.f32 %v189, %v190
  %v192 = vsel %vm146, %v104, 0.0
  %v193 = vadd.f32 %v191, %v192
  %v194 = vsel %vm146, %v105, 0.0
  %v195 = vadd.f32 %v193, %v194
  %v196 = vsel %vm146, %v106, 0.0
  %v197 = vadd.f32 %v195, %v196
  %v198 = vsel %vm146, %v107, 0.0
  %v199 = vadd.f32 %v197, %v198
  %v200 = vsel %vm146, %v108, 0.0
  %v201 = vadd.f32 %v199, %v200
  %v202 = vsel %vm146, %v109, 0.0
  %v203 = vadd.f32 %v201, %v202
  %v204 = vsel %vm146, %v110, 0.0
  %v205 = vadd.f32 %v203, %v204
  %v206 = vsel %vm146, %v111, 0.0
  %v207 = vadd.f32 %v205, %v206
  %v208 = vsel %vm146, %v112, 0.0
  %v209 = vadd.f32 %v207, %v208
  %v210 = vsel %vm146, %v113, 0.0
  %v211 = vadd.f32 %v209, %v210
  %v212 = vsel %vm146, %v114, 0.0
  %v213 = vadd.f32 %v211, %v212
  %v214 = vsel %vm146, %v115, 0.0
  %v215 = vadd.f32 %v213, %v214
  %v216 = vsel %vm146, %v116, 0.0
  %v217 = vadd.f32 %v215, %v216
  %v218 = vsel %vm146, %v117, 0.0
  %v219 = vadd.f32 %v217, %v218
  %v220 = vsel %vm146, %v118, 0.0
  %v221 = vadd.f32 %v219, %v220
  %v222 = vsel %vm146, %v119, 0.0
  %v223 = vadd.f32 %v221, %v222
  %v224 = vsel %vm146, %v120, 0.0
  %v225 = vadd.f32 %v223, %v224
  %v226 = vsel %vm146, %v121, 0.0
  %v227 = vadd.f32 %v225, %v226
  %v228 = vsel %vm146, %v122, 0.0
  %v229 = vadd.f32 %v227, %v228
  %v230 = vsel %vm146, %v123, 0.0
  %v231 = vadd.f32 %v229, %v230
  %v232 = vsel %vm146, %v124, 0.0
  %v233 = vadd.f32 %v231, %v232
  %v234 = vsel %vm146, %v125, 0.0
  %v235 = vadd.f32 %v233, %v234
  %v236 = vsel %vm146, %v126, 0.0
  %v237 = vadd.f32 %v235, %v236
  %v238 = vsel %vm146, %v127, 0.0
  %v239 = vadd.f32 %v237, %v238
  %v240 = vsel %vm146, %v128, 0.0
  %v241 = vadd.f32 %v239, %v240
  %v242 = vsel %vm146, %v129, 0.0
  %v243 = vadd.f32 %v241, %v242
  %v244 = vsel %vm146, %v130, 0.0
  %v245 = vadd.f32 %v243, %v244
  %v246 = vsel %vm146, %v131, 0.0
  %v247 = vadd.f32 %v245, %v246
  %v248 = vsel %vm146, %v132, 0.0
  %v249 = vadd.f32 %v247, %v248
  %v250 = vsel %vm146, %v133, 0.0
  %v251 = vadd.f32 %v249, %v250
  %v252 = vsel %vm146, %v134, 0.0
  %v253 = vadd.f32 %v251, %v252
  %v254 = vsel %vm146, %v135, 0.0
  %v255 = vadd.f32 %v253, %v254
  %v256 = vsel %vm146, %v136, 0.0
  %v257 = vadd.f32 %v255, %v256
  %v258 = vsel %vm146, %v137, 0.0
  %v259 = vadd.f32 %v257, %v258
  %v260 = vsel %vm146, %v138, 0.0
  %v261 = vadd.f32 %v259, %v260
  %v262 = vsel %vm146, %v139, 0.0
  %v263 = vadd.f32 %v261, %v262
  %v264 = vsel %vm146, %v140, 0.0
  %v265 = vadd.f32 %v263, %v264
  %v266 = vsel %vm146, %v141, 0.0
  %v267 = vadd.f32 %v265, %v266
  %v268 = vsel %vm146, %v142, 0.0
  %v269 = vadd.f32 %v267, %v268
  %v270 = vsel %vm146, %v143, 0.0
  %v271 = vadd.f32 %v269, %v270
  %v272 = vsel %vm146, %v144, 0.0
  %v273 = vadd.f32 %v271, %v272
  %v274 = vrot.slane %v273, 4
  %v275 = vadd.f32 %v273, %v274
  %v276 = vrot.slane %v275, 2
  %v277 = vadd.f32 %v275, %v276
  %v278 = vrot.slane %v277, 1
  %v279 = vadd.f32 %v277, %v278
  %v280 = vadd.f32 %v145, %v279
  %vm281 = vcmask 122880
  %282 = vst.msk [vmem:[#allocation2] sm:$0x1] %vm281, %v280
  %v283 = vld [vmem:[#allocation3] sm:$0x1]
  %v284 = vmul.f32 %v81, %v81
  %v285 = vmul.f32 %v82, %v82
  %v286 = vmul.f32 %v83, %v83
  %v287 = vmul.f32 %v84, %v84
  %v288 = vmul.f32 %v85, %v85
  %v289 = vmul.f32 %v86, %v86
  %v290 = vmul.f32 %v87, %v87
  %v291 = vmul.f32 %v88, %v88
  %v292 = vmul.f32 %v89, %v89
  %v293 = vmul.f32 %v90, %v90
  %v294 = vmul.f32 %v91, %v91
  %v295 = vmul.f32 %v92, %v92
  %v296 = vmul.f32 %v93, %v93
  %v297 = vmul.f32 %v94, %v94
  %v298 = vmul.f32 %v95, %v95
  %v299 = vmul.f32 %v96, %v96
  %v300 = vmul.f32 %v97, %v97
  %v301 = vmul.f32 %v98, %v98
  %v302 = vmul.f32 %v99, %v99
  %v303 = vmul.f32 %v100, %v100
  %v304 = vmul.f32 %v101, %v101
  %v305 = vmul.f32 %v102, %v102
  %v306 = vmul.f32 %v103, %v103
  %v307 = vmul.f32 %v104, %v104
  %v308 = vmul.f32 %v105, %v105
  %v309 = vmul.f32 %v106, %v106
  %v310 = vmul.f32 %v107, %v107
  %v311 = vmul.f32 %v108, %v108
  %v312 = vmul.f32 %v109, %v109
  %v313 = vmul.f32 %v110, %v110
  %v314 = vmul.f32 %v111, %v111
  %v315 = vmul.f32 %v112, %v112
  %v316 = vmul.f32 %v113, %v113
  %v317 = vmul.f32 %v114, %v114
  %v318 = vmul.f32 %v115, %v115
  %v319 = vmul.f32 %v116, %v116
  %v320 = vmul.f32 %v117, %v117
  %v321 = vmul.f32 %v118, %v118
  %v322 = vmul.f32 %v119, %v119
  %v323 = vmul.f32 %v120, %v120
  %v324 = vmul.f32 %v121, %v121
  %v325 = vmul.f32 %v122, %v122
  %v326 = vmul.f32 %v123, %v123
  %v327 = vmul.f32 %v124, %v124
  %v328 = vmul.f32 %v125, %v125
  %v329 = vmul.f32 %v126, %v126
  %v330 = vmul.f32 %v127, %v127
  %v331 = vmul.f32 %v128, %v128
  %v332 = vmul.f32 %v129, %v129
  %v333 = vmul.f32 %v130, %v130
  %v334 = vmul.f32 %v131, %v131
  %v335 = vmul.f32 %v132, %v132
  %v336 = vmul.f32 %v133, %v133
  %v337 = vmul.f32 %v134, %v134
  %v338 = vmul.f32 %v135, %v135
  %v339 = vmul.f32 %v136, %v136
  %v340 = vmul.f32 %v137, %v137
  %v341 = vmul.f32 %v138, %v138
  %v342 = vmul.f32 %v139, %v139
  %v343 = vmul.f32 %v140, %v140
  %v344 = vmul.f32 %v141, %v141
  %v345 = vmul.f32 %v142, %v142
  %v346 = vmul.f32 %v143, %v143
  %v347 = vmul.f32 %v144, %v144
  %v348 = vsel %vm146, %v284, 0.0
  %v349 = vsel %vm146, %v285, 0.0
  %v350 = vadd.f32 %v348, %v349
  %v351 = vsel %vm146, %v286, 0.0
  %v352 = vadd.f32 %v350, %v351
  %v353 = vsel %vm146, %v287, 0.0
  %v354 = vadd.f32 %v352, %v353
  %v355 = vsel %vm146, %v288, 0.0
  %v356 = vadd.f32 %v354, %v355
  %v357 = vsel %vm146, %v289, 0.0
  %v358 = vadd.f32 %v356, %v357
  %v359 = vsel %vm146, %v290, 0.0
  %v360 = vadd.f32 %v358, %v359
  %v361 = vsel %vm146, %v291, 0.0
  %v362 = vadd.f32 %v360, %v361
  %v363 = vsel %vm146, %v292, 0.0
  %v364 = vadd.f32 %v362, %v363
  %v365 = vsel %vm146, %v293, 0.0
  %v366 = vadd.f32 %v364, %v365
  %v367 = vsel %vm146, %v294, 0.0
  %v368 = vadd.f32 %v366, %v367
  %v369 = vsel %vm146, %v295, 0.0
  %v370 = vadd.f32 %v368, %v369
  %v371 = vsel %vm146, %v296, 0.0
  %v372 = vadd.f32 %v370, %v371
  %v373 = vsel %vm146, %v297, 0.0
  %v374 = vadd.f32 %v372, %v373
  %v375 = vsel %vm146, %v298, 0.0
  %v376 = vadd.f32 %v374, %v375
  %v377 = vsel %vm146, %v299, 0.0
  %v378 = vadd.f32 %v376, %v377
  %v379 = vsel %vm146, %v300, 0.0
  %v380 = vadd.f32 %v378, %v379
  %v381 = vsel %vm146, %v301, 0.0
  %v382 = vadd.f32 %v380, %v381
  %v383 = vsel %vm146, %v302, 0.0
  %v384 = vadd.f32 %v382, %v383
  %v385 = vsel %vm146, %v303, 0.0
  %v386 = vadd.f32 %v384, %v385
  %v387 = vsel %vm146, %v304, 0.0
  %v388 = vadd.f32 %v386, %v387
  %v389 = vsel %vm146, %v305, 0.0
  %v390 = vadd.f32 %v388, %v389
  %v391 = vsel %vm146, %v306, 0.0
  %v392 = vadd.f32 %v390, %v391
  %v393 = vsel %vm146, %v307, 0.0
  %v394 = vadd.f32 %v392, %v393
  %v395 = vsel %vm146, %v308, 0.0
  %v396 = vadd.f32 %v394, %v395
  %v397 = vsel %vm146, %v309, 0.0
  %v398 = vadd.f32 %v396, %v397
  %v399 = vsel %vm146, %v310, 0.0
  %v400 = vadd.f32 %v398, %v399
  %v401 = vsel %vm146, %v311, 0.0
  %v402 = vadd.f32 %v400, %v401
  %v403 = vsel %vm146, %v312, 0.0
  %v404 = vadd.f32 %v402, %v403
  %v405 = vsel %vm146, %v313, 0.0
  %v406 = vadd.f32 %v404, %v405
  %v407 = vsel %vm146, %v314, 0.0
  %v408 = vadd.f32 %v406, %v407
  %v409 = vsel %vm146, %v315, 0.0
  %v410 = vadd.f32 %v408, %v409
  %v411 = vsel %vm146, %v316, 0.0
  %v412 = vadd.f32 %v410, %v411
  %v413 = vsel %vm146, %v317, 0.0
  %v414 = vadd.f32 %v412, %v413
  %v415 = vsel %vm146, %v318, 0.0
  %v416 = vadd.f32 %v414, %v415
  %v417 = vsel %vm146, %v319, 0.0
  %v418 = vadd.f32 %v416, %v417
  %v419 = vsel %vm146, %v320, 0.0
  %v420 = vadd.f32 %v418, %v419
  %v421 = vsel %vm146, %v321, 0.0
  %v422 = vadd.f32 %v420, %v421
  %v423 = vsel %vm146, %v322, 0.0
  %v424 = vadd.f32 %v422, %v423
  %v425 = vsel %vm146, %v323, 0.0
  %v426 = vadd.f32 %v424, %v425
  %v427 = vsel %vm146, %v324, 0.0
  %v428 = vadd.f32 %v426, %v427
  %v429 = vsel %vm146, %v325, 0.0
  %v430 = vadd.f32 %v428, %v429
  %v431 = vsel %vm146, %v326, 0.0
  %v432 = vadd.f32 %v430, %v431
  %v433 = vsel %vm146, %v327, 0.0
  %v434 = vadd.f32 %v432, %v433
  %v435 = vsel %vm146, %v328, 0.0
  %v436 = vadd.f32 %v434, %v435
  %v437 = vsel %vm146, %v329, 0.0
  %v438 = vadd.f32 %v436, %v437
  %v439 = vsel %vm146, %v330, 0.0
  %v440 = vadd.f32 %v438, %v439
  %v441 = vsel %vm146, %v331, 0.0
  %v442 = vadd.f32 %v440, %v441
  %v443 = vsel %vm146, %v332, 0.0
  %v444 = vadd.f32 %v442, %v443
  %v445 = vsel %vm146, %v333, 0.0
  %v446 = vadd.f32 %v444, %v445
  %v447 = vsel %vm146, %v334, 0.0
  %v448 = vadd.f32 %v446, %v447
  %v449 = vsel %vm146, %v335, 0.0
  %v450 = vadd.f32 %v448, %v449
  %v451 = vsel %vm146, %v336, 0.0
  %v452 = vadd.f32 %v450, %v451
  %v453 = vsel %vm146, %v337, 0.0
  %v454 = vadd.f32 %v452, %v453
  %v455 = vsel %vm146, %v338, 0.0
  %v456 = vadd.f32 %v454, %v455
  %v457 = vsel %vm146, %v339, 0.0
  %v458 = vadd.f32 %v456, %v457
  %v459 = vsel %vm146, %v340, 0.0
  %v460 = vadd.f32 %v458, %v459
  %v461 = vsel %vm146, %v341, 0.0
  %v462 = vadd.f32 %v460, %v461
  %v463 = vsel %vm146, %v342, 0.0
  %v464 = vadd.f32 %v462, %v463
  %v465 = vsel %vm146, %v343, 0.0
  %v466 = vadd.f32 %v464, %v465
  %v467 = vsel %vm146, %v344, 0.0
  %v468 = vadd.f32 %v466, %v467
  %v469 = vsel %vm146, %v345, 0.0
  %v470 = vadd.f32 %v468, %v469
  %v471 = vsel %vm146, %v346, 0.0
  %v472 = vadd.f32 %v470, %v471
  %v473 = vsel %vm146, %v347, 0.0
  %v474 = vadd.f32 %v472, %v473
  %v475 = vrot.slane %v474, 4
  %v476 = vadd.f32 %v474, %v475
  %v477 = vrot.slane %v476, 2
  %v478 = vadd.f32 %v476, %v477
  %v479 = vrot.slane %v478, 1
  %v480 = vadd.f32 %v478, %v479
  %v481 = vadd.f32 %v283, %v480
  %482 = vst.msk [vmem:[#allocation3] sm:$0x1] %vm281, %v481
  // Predicated region
  $region10: #{generator_forward.15} parent=0 // pred_check
    %p483 = pneg %p10
  $region11: #{generator_forward.15} parent=0 // pred_check_branch
    %485 = sbr.rel (%p483) target = $region13
  $region12: #{generator_forward.15} parent=0 // pred_region
    %v486 = vld [vmem:[#allocation2] sm:$0x1]
    %487 = vst.msk [vmem:[%s1] sm:$0x1] %vm281, %v486
    %v488 = vld [vmem:[#allocation3] sm:$0x1]
    %489 = vst.msk [vmem:[%s2] sm:$0x1] %vm281, %v488
  $region13: #{generator_forward.15} parent=0 // pred_fallthru
    _
  // Predicated region
  $region14: #{generator_forward.15} parent=0 // pred_check
    _
  $region15: #{generator_forward.15} parent=0 // pred_check_branch
    %491 = sbr.rel (0) target = $region17
  $region16: #{generator_forward.15} parent=0 // pred_region
    _
  $region17: #{generator_forward.15} parent=0 // pred_fallthru
    _
  // Predicated region
  $region18: #{generator_forward.15} parent=0 // pred_check
    _
  $region19: #{generator_forward.15} parent=0 // pred_check_branch
    %493 = sbr.rel (0) target = $region21
  $region20: #{generator_forward.15} parent=0 // pred_region
    _
  $region21: #{generator_forward.15} parent=0 // pred_fallthru
    _
  // Predicated region
  $region22: #{generator_forward.15} parent=0 // pred_check
    _
  $region23: #{generator_forward.15} parent=0 // pred_check_branch
    %495 = sbr.rel (0) target = $region25
  $region24: #{generator_forward.15} parent=0 // pred_region
    _
  $region25: #{generator_forward.15} parent=0 // pred_fallthru
    _
  // Predicated region
  $region26: #{generator_forward.15} parent=0 // pred_check
    _
  $region27: #{generator_forward.15} parent=0 // pred_check_branch
    %497 = sbr.rel (0) target = $region29
  $region28: #{generator_forward.15} parent=0 // pred_region
    _
  $region29: #{generator_forward.15} parent=0 // pred_fallthru
    _

// kernel: generator_forward.16
$region0: #{generator_forward.16}
  #allocation0 [shape = 'u32[]', space=smem, size = 0x4, offset = 0x4, fixed_abs, tag = 'smem constant byte address 0x4 - core index']
  #allocation1 [shape = 'u32[144,128]{1,0:T(1,128)}', space=vmem, size = 0x12000, scoped, tag = 'internal scratch']
  %s0 = inlined_call_operand.vmem [shape: bf16[512,16], index: 0, kind: input, shape index: {}]
  %s1 = inlined_call_operand.vmem [shape: f32[1,16], index: 1, kind: input, shape index: {}]
  %s2 = inlined_call_operand.vmem [shape: f32[1,16], index: 2, kind: input, shape index: {}]
  %s3 = inlined_call_operand.vmem [shape: bf16[16,128], index: 3, kind: input, shape index: {}]
  %s4 = inlined_call_operand.vmem [shape: bf16[512,128], index: 4, kind: output, shape index: {}]
  %s5 = sld [smem:[#allocation0]]
  $region26: #{generator_forward.16} parent=0
    _
  %s7 = ssub.s32 1, %s5
  %s8 = scalar_select 0, %s7, %s5
  // Predicated region
  $region2: #{generator_forward.16} parent=0 // pred_check
    _
  $region3: #{generator_forward.16} parent=0 // pred_check_branch
    %10 = sbr.rel (0) target = $region5
  $region4: #{generator_forward.16} parent=0 // pred_region
    _
  $region5: #{generator_forward.16} parent=0 // pred_fallthru
    _
  // Predicated region
  $region6: #{generator_forward.16} parent=0 // pred_check
    _
  $region7: #{generator_forward.16} parent=0 // pred_check_branch
    %12 = sbr.rel (0) target = $region9
  $region8: #{generator_forward.16} parent=0 // pred_region
    _
  $region9: #{generator_forward.16} parent=0 // pred_fallthru
    _
  // Predicated region
  $region10: #{generator_forward.16} parent=0 // pred_check
    _
  $region11: #{generator_forward.16} parent=0 // pred_check_branch
    %14 = sbr.rel (0) target = $region13
  $region12: #{generator_forward.16} parent=0 // pred_region
    _
  $region13: #{generator_forward.16} parent=0 // pred_fallthru
    _
  // Predicated region
  $region14: #{generator_forward.16} parent=0 // pred_check
    _
  $region15: #{generator_forward.16} parent=0 // pred_check_branch
    %16 = sbr.rel (0) target = $region17
  $region16: #{generator_forward.16} parent=0 // pred_region
    _
  $region17: #{generator_forward.16} parent=0 // pred_fallthru
    _
  %v18 = vld [vmem:[%s0] sm:$0xf]
  %v19 = vld [vmem:[%s0 + $0x4] sm:$0xf]
  %v20 = vld [vmem:[%s0 + $0x8] sm:$0xf]
  %v21 = vld [vmem:[%s0 + $0xc] sm:$0xf]
  %v22 = vld [vmem:[%s0 + $0x10] sm:$0xf]
  %v23 = vld [vmem:[%s0 + $0x14] sm:$0xf]
  %v24 = vld [vmem:[%s0 + $0x18] sm:$0xf]
  %v25 = vld [vmem:[%s0 + $0x1c] sm:$0xf]
  %v26 = vld [vmem:[%s0 + $0x20] sm:$0xf]
  %v27 = vld [vmem:[%s0 + $0x24] sm:$0xf]
  %v28 = vld [vmem:[%s0 + $0x28] sm:$0xf]
  %v29 = vld [vmem:[%s0 + $0x2c] sm:$0xf]
  %v30 = vld [vmem:[%s0 + $0x30] sm:$0xf]
  %v31 = vld [vmem:[%s0 + $0x34] sm:$0xf]
  %v32 = vld [vmem:[%s0 + $0x38] sm:$0xf]
  %v33 = vld [vmem:[%s0 + $0x3c] sm:$0xf]
  %v34 = vld [vmem:[%s0 + $0x40] sm:$0xf]
  %v35 = vld [vmem:[%s0 + $0x44] sm:$0xf]
  %v36 = vld [vmem:[%s0 + $0x48] sm:$0xf]
  %v37 = vld [vmem:[%s0 + $0x4c] sm:$0xf]
  %v38 = vld [vmem:[%s0 + $0x50] sm:$0xf]
  %v39 = vld [vmem:[%s0 + $0x54] sm:$0xf]
  %v40 = vld [vmem:[%s0 + $0x58] sm:$0xf]
  %v41 = vld [vmem:[%s0 + $0x5c] sm:$0xf]
  %v42 = vld [vmem:[%s0 + $0x60] sm:$0xf]
  %v43 = vld [vmem:[%s0 + $0x64] sm:$0xf]
  %v44 = vld [vmem:[%s0 + $0x68] sm:$0xf]
  %v45 = vld [vmem:[%s0 + $0x6c] sm:$0xf]
  %v46 = vld [vmem:[%s0 + $0x70] sm:$0xf]
  %v47 = vld [vmem:[%s0 + $0x74] sm:$0xf]
  %v48 = vld [vmem:[%s0 + $0x78] sm:$0xf]
  %v49 = vld [vmem:[%s0 + $0x7c] sm:$0xf]
  %v50 = vld [vmem:[%s0 + $0x80] sm:$0xf]
  %v51 = vld [vmem:[%s0 + $0x84] sm:$0xf]
  %v52 = vld [vmem:[%s0 + $0x88] sm:$0xf]
  %v53 = vld [vmem:[%s0 + $0x8c] sm:$0xf]
  %v54 = vld [vmem:[%s0 + $0x90] sm:$0xf]
  %v55 = vld [vmem:[%s0 + $0x94] sm:$0xf]
  %v56 = vld [vmem:[%s0 + $0x98] sm:$0xf]
  %v57 = vld [vmem:[%s0 + $0x9c] sm:$0xf]
  %v58 = vld [vmem:[%s0 + $0xa0] sm:$0xf]
  %v59 = vld [vmem:[%s0 + $0xa4] sm:$0xf]
  %v60 = vld [vmem:[%s0 + $0xa8] sm:$0xf]
  %v61 = vld [vmem:[%s0 + $0xac] sm:$0xf]
  %v62 = vld [vmem:[%s0 + $0xb0] sm:$0xf]
  %v63 = vld [vmem:[%s0 + $0xb4] sm:$0xf]
  %v64 = vld [vmem:[%s0 + $0xb8] sm:$0xf]
  %v65 = vld [vmem:[%s0 + $0xbc] sm:$0xf]
  %v66 = vld [vmem:[%s0 + $0xc0] sm:$0xf]
  %v67 = vld [vmem:[%s0 + $0xc4] sm:$0xf]
  %v68 = vld [vmem:[%s0 + $0xc8] sm:$0xf]
  %v69 = vld [vmem:[%s0 + $0xcc] sm:$0xf]
  %v70 = vld [vmem:[%s0 + $0xd0] sm:$0xf]
  %v71 = vld [vmem:[%s0 + $0xd4] sm:$0xf]
  %v72 = vld [vmem:[%s0 + $0xd8] sm:$0xf]
  %v73 = vld [vmem:[%s0 + $0xdc] sm:$0xf]
  %v74 = vld [vmem:[%s0 + $0xe0] sm:$0xf]
  %v75 = vld [vmem:[%s0 + $0xe4] sm:$0xf]
  %v76 = vld [vmem:[%s0 + $0xe8] sm:$0xf]
  %v77 = vld [vmem:[%s0 + $0xec] sm:$0xf]
  %v78 = vld [vmem:[%s0 + $0xf0] sm:$0xf]
  %v79 = vld [vmem:[%s0 + $0xf4] sm:$0xf]
  %v80 = vld [vmem:[%s0 + $0xf8] sm:$0xf]
  %v81 = vld [vmem:[%s0 + $0xfc] sm:$0xf]
  %v82 = vunpack.c.l.bf16 %v18
  %v83 = vunpack.c.l.bf16 %v19
  %v84 = vunpack.c.l.bf16 %v20
  %v85 = vunpack.c.l.bf16 %v21
  %v86 = vunpack.c.l.bf16 %v22
  %v87 = vunpack.c.l.bf16 %v23
  %v88 = vunpack.c.l.bf16 %v24
  %v89 = vunpack.c.l.bf16 %v25
  %v90 = vunpack.c.l.bf16 %v26
  %v91 = vunpack.c.l.bf16 %v27
  %v92 = vunpack.c.l.bf16 %v28
  %v93 = vunpack.c.l.bf16 %v29
  %v94 = vunpack.c.l.bf16 %v30
  %v95 = vunpack.c.l.bf16 %v31
  %v96 = vunpack.c.l.bf16 %v32
  %v97 = vunpack.c.l.bf16 %v33
  %v98 = vunpack.c.l.bf16 %v34
  %v99 = vunpack.c.l.bf16 %v35
  %v100 = vunpack.c.l.bf16 %v36
  %v101 = vunpack.c.l.bf16 %v37
  %v102 = vunpack.c.l.bf16 %v38
  %v103 = vunpack.c.l.bf16 %v39
  %v104 = vunpack.c.l.bf16 %v40
  %v105 = vunpack.c.l.bf16 %v41
  %v106 = vunpack.c.l.bf16 %v42
  %v107 = vunpack.c.l.bf16 %v43
  %v108 = vunpack.c.l.bf16 %v44
  %v109 = vunpack.c.l.bf16 %v45
  %v110 = vunpack.c.l.bf16 %v46
  %v111 = vunpack.c.l.bf16 %v47
  %v112 = vunpack.c.l.bf16 %v48
  %v113 = vunpack.c.l.bf16 %v49
  %v114 = vunpack.c.l.bf16 %v50
  %v115 = vunpack.c.l.bf16 %v51
  %v116 = vunpack.c.l.bf16 %v52
  %v117 = vunpack.c.l.bf16 %v53
  %v118 = vunpack.c.l.bf16 %v54
  %v119 = vunpack.c.l.bf16 %v55
  %v120 = vunpack.c.l.bf16 %v56
  %v121 = vunpack.c.l.bf16 %v57
  %v122 = vunpack.c.l.bf16 %v58
  %v123 = vunpack.c.l.bf16 %v59
  %v124 = vunpack.c.l.bf16 %v60
  %v125 = vunpack.c.l.bf16 %v61
  %v126 = vunpack.c.l.bf16 %v62
  %v127 = vunpack.c.l.bf16 %v63
  %v128 = vunpack.c.l.bf16 %v64
  %v129 = vunpack.c.l.bf16 %v65
  %v130 = vunpack.c.l.bf16 %v66
  %v131 = vunpack.c.l.bf16 %v67
  %v132 = vunpack.c.l.bf16 %v68
  %v133 = vunpack.c.l.bf16 %v69
  %v134 = vunpack.c.l.bf16 %v70
  %v135 = vunpack.c.l.bf16 %v71
  %v136 = vunpack.c.l.bf16 %v72
  %v137 = vunpack.c.l.bf16 %v73
  %v138 = vunpack.c.l.bf16 %v74
  %v139 = vunpack.c.l.bf16 %v75
  %v140 = vunpack.c.l.bf16 %v76
  %v141 = vunpack.c.l.bf16 %v77
  %v142 = vunpack.c.l.bf16 %v78
  %v143 = vunpack.c.l.bf16 %v79
  %v144 = vunpack.c.l.bf16 %v80
  %v145 = vunpack.c.l.bf16 %v81
  %v146 = vld [vmem:[%s1] sm:$0x1]
  %v148 = vlaneseq
  %v149 = vshrl.u32 %v148, 7
  %v150 = vsub.s32 0, %v149
  %v151 = vrot.slane %v146, %v150
  %v153 = vmul.f32 %v82, %v151
  %v154 = vmul.f32 %v83, %v151
  %v155 = vmul.f32 %v84, %v151
  %v156 = vmul.f32 %v85, %v151
  %v157 = vmul.f32 %v86, %v151
  %v158 = vmul.f32 %v87, %v151
  %v159 = vmul.f32 %v88, %v151
  %v160 = vmul.f32 %v89, %v151
  %v161 = vmul.f32 %v90, %v151
  %v162 = vmul.f32 %v91, %v151
  %v163 = vmul.f32 %v92, %v151
  %v164 = vmul.f32 %v93, %v151
  %v165 = vmul.f32 %v94, %v151
  %v166 = vmul.f32 %v95, %v151
  %v167 = vmul.f32 %v96, %v151
  %v168 = vmul.f32 %v97, %v151
  %v169 = vmul.f32 %v98, %v151
  %v170 = vmul.f32 %v99, %v151
  %v171 = vmul.f32 %v100, %v151
  %v172 = vmul.f32 %v101, %v151
  %v173 = vmul.f32 %v102, %v151
  %v174 = vmul.f32 %v103, %v151
  %v175 = vmul.f32 %v104, %v151
  %v176 = vmul.f32 %v105, %v151
  %v177 = vmul.f32 %v106, %v151
  %v178 = vmul.f32 %v107, %v151
  %v179 = vmul.f32 %v108, %v151
  %v180 = vmul.f32 %v109, %v151
  %v181 = vmul.f32 %v110, %v151
  %v182 = vmul.f32 %v111, %v151
  %v183 = vmul.f32 %v112, %v151
  %v184 = vmul.f32 %v113, %v151
  %v185 = vmul.f32 %v114, %v151
  %v186 = vmul.f32 %v115, %v151
  %v187 = vmul.f32 %v116, %v151
  %v188 = vmul.f32 %v117, %v151
  %v189 = vmul.f32 %v118, %v151
  %v190 = vmul.f32 %v119, %v151
  %v191 = vmul.f32 %v120, %v151
  %v192 = vmul.f32 %v121, %v151
  %v193 = vmul.f32 %v122, %v151
  %v194 = vmul.f32 %v123, %v151
  %v195 = vmul.f32 %v124, %v151
  %v196 = vmul.f32 %v125, %v151
  %v197 = vmul.f32 %v126, %v151
  %v198 = vmul.f32 %v127, %v151
  %v199 = vmul.f32 %v128, %v151
  %v200 = vmul.f32 %v129, %v151
  %v201 = vmul.f32 %v130, %v151
  %v202 = vmul.f32 %v131, %v151
  %v203 = vmul.f32 %v132, %v151
  %v204 = vmul.f32 %v133, %v151
  %v205 = vmul.f32 %v134, %v151
  %v206 = vmul.f32 %v135, %v151
  %v207 = vmul.f32 %v136, %v151
  %v208 = vmul.f32 %v137, %v151
  %v209 = vmul.f32 %v138, %v151
  %v210 = vmul.f32 %v139, %v151
  %v211 = vmul.f32 %v140, %v151
  %v212 = vmul.f32 %v141, %v151
  %v213 = vmul.f32 %v142, %v151
  %v214 = vmul.f32 %v143, %v151
  %v215 = vmul.f32 %v144, %v151
  %v216 = vmul.f32 %v145, %v151
  %v217 = vld [vmem:[%s2] sm:$0x1]
  %v219 = vlaneseq
  %v220 = vshrl.u32 %v219, 7
  %v221 = vsub.s32 0, %v220
  %v222 = vrot.slane %v217, %v221
  %v224 = vadd.f32 %v153, %v222
  %v225 = vadd.f32 %v154, %v222
  %v226 = vadd.f32 %v155, %v222
  %v227 = vadd.f32 %v156, %v222
  %v228 = vadd.f32 %v157, %v222
  %v229 = vadd.f32 %v158, %v222
  %v230 = vadd.f32 %v159, %v222
  %v231 = vadd.f32 %v160, %v222
  %v232 = vadd.f32 %v161, %v222
  %v233 = vadd.f32 %v162, %v222
  %v234 = vadd.f32 %v163, %v222
  %v235 = vadd.f32 %v164, %v222
  %v236 = vadd.f32 %v165, %v222
  %v237 = vadd.f32 %v166, %v222
  %v238 = vadd.f32 %v167, %v222
  %v239 = vadd.f32 %v168, %v222
  %v240 = vadd.f32 %v169, %v222
  %v241 = vadd.f32 %v170, %v222
  %v242 = vadd.f32 %v171, %v222
  %v243 = vadd.f32 %v172, %v222
  %v244 = vadd.f32 %v173, %v222
  %v245 = vadd.f32 %v174, %v222
  %v246 = vadd.f32 %v175, %v222
  %v247 = vadd.f32 %v176, %v222
  %v248 = vadd.f32 %v177, %v222
  %v249 = vadd.f32 %v178, %v222
  %v250 = vadd.f32 %v179, %v222
  %v251 = vadd.f32 %v180, %v222
  %v252 = vadd.f32 %v181, %v222
  %v253 = vadd.f32 %v182, %v222
  %v254 = vadd.f32 %v183, %v222
  %v255 = vadd.f32 %v184, %v222
  %v256 = vadd.f32 %v185, %v222
  %v257 = vadd.f32 %v186, %v222
  %v258 = vadd.f32 %v187, %v222
  %v259 = vadd.f32 %v188, %v222
  %v260 = vadd.f32 %v189, %v222
  %v261 = vadd.f32 %v190, %v222
  %v262 = vadd.f32 %v191, %v222
  %v263 = vadd.f32 %v192, %v222
  %v264 = vadd.f32 %v193, %v222
  %v265 = vadd.f32 %v194, %v222
  %v266 = vadd.f32 %v195, %v222
  %v267 = vadd.f32 %v196, %v222
  %v268 = vadd.f32 %v197, %v222
  %v269 = vadd.f32 %v198, %v222
  %v270 = vadd.f32 %v199, %v222
  %v271 = vadd.f32 %v200, %v222
  %v272 = vadd.f32 %v201, %v222
  %v273 = vadd.f32 %v202, %v222
  %v274 = vadd.f32 %v203, %v222
  %v275 = vadd.f32 %v204, %v222
  %v276 = vadd.f32 %v205, %v222
  %v277 = vadd.f32 %v206, %v222
  %v278 = vadd.f32 %v207, %v222
  %v279 = vadd.f32 %v208, %v222
  %v280 = vadd.f32 %v209, %v222
  %v281 = vadd.f32 %v210, %v222
  %v282 = vadd.f32 %v211, %v222
  %v283 = vadd.f32 %v212, %v222
  %v284 = vadd.f32 %v213, %v222
  %v285 = vadd.f32 %v214, %v222
  %v286 = vadd.f32 %v215, %v222
  %v287 = vadd.f32 %v216, %v222
  %v288 = vmax.f32 %v224, 0.0
  %v289 = vmax.f32 %v225, 0.0
  %v290 = vmax.f32 %v226, 0.0
  %v291 = vmax.f32 %v227, 0.0
  %v292 = vmax.f32 %v228, 0.0
  %v293 = vmax.f32 %v229, 0.0
  %v294 = vmax.f32 %v230, 0.0
  %v295 = vmax.f32 %v231, 0.0
  %v296 = vmax.f32 %v232, 0.0
  %v297 = vmax.f32 %v233, 0.0
  %v298 = vmax.f32 %v234, 0.0
  %v299 = vmax.f32 %v235, 0.0
  %v300 = vmax.f32 %v236, 0.0
  %v301 = vmax.f32 %v237, 0.0
  %v302 = vmax.f32 %v238, 0.0
  %v303 = vmax.f32 %v239, 0.0
  %v304 = vmax.f32 %v240, 0.0
  %v305 = vmax.f32 %v241, 0.0
  %v306 = vmax.f32 %v242, 0.0
  %v307 = vmax.f32 %v243, 0.0
  %v308 = vmax.f32 %v244, 0.0
  %v309 = vmax.f32 %v245, 0.0
  %v310 = vmax.f32 %v246, 0.0
  %v311 = vmax.f32 %v247, 0.0
  %v312 = vmax.f32 %v248, 0.0
  %v313 = vmax.f32 %v249, 0.0
  %v314 = vmax.f32 %v250, 0.0
  %v315 = vmax.f32 %v251, 0.0
  %v316 = vmax.f32 %v252, 0.0
  %v317 = vmax.f32 %v253, 0.0
  %v318 = vmax.f32 %v254, 0.0
  %v319 = vmax.f32 %v255, 0.0
  %v320 = vmax.f32 %v256, 0.0
  %v321 = vmax.f32 %v257, 0.0
  %v322 = vmax.f32 %v258, 0.0
  %v323 = vmax.f32 %v259, 0.0
  %v324 = vmax.f32 %v260, 0.0
  %v325 = vmax.f32 %v261, 0.0
  %v326 = vmax.f32 %v262, 0.0
  %v327 = vmax.f32 %v263, 0.0
  %v328 = vmax.f32 %v264, 0.0
  %v329 = vmax.f32 %v265, 0.0
  %v330 = vmax.f32 %v266, 0.0
  %v331 = vmax.f32 %v267, 0.0
  %v332 = vmax.f32 %v268, 0.0
  %v333 = vmax.f32 %v269, 0.0
  %v334 = vmax.f32 %v270, 0.0
  %v335 = vmax.f32 %v271, 0.0
  %v336 = vmax.f32 %v272, 0.0
  %v337 = vmax.f32 %v273, 0.0
  %v338 = vmax.f32 %v274, 0.0
  %v339 = vmax.f32 %v275, 0.0
  %v340 = vmax.f32 %v276, 0.0
  %v341 = vmax.f32 %v277, 0.0
  %v342 = vmax.f32 %v278, 0.0
  %v343 = vmax.f32 %v279, 0.0
  %v344 = vmax.f32 %v280, 0.0
  %v345 = vmax.f32 %v281, 0.0
  %v346 = vmax.f32 %v282, 0.0
  %v347 = vmax.f32 %v283, 0.0
  %v348 = vmax.f32 %v284, 0.0
  %v349 = vmax.f32 %v285, 0.0
  %v350 = vmax.f32 %v286, 0.0
  %v351 = vmax.f32 %v287, 0.0
  %v352 = vpack.c.bf16 %v289, %v288
  %v353 = vpack.c.bf16 %v291, %v290
  %v354 = vpack.c.bf16 %v293, %v292
  %v355 = vpack.c.bf16 %v295, %v294
  %v356 = vpack.c.bf16 %v297, %v296
  %v357 = vpack.c.bf16 %v299, %v298
  %v358 = vpack.c.bf16 %v301, %v300
  %v359 = vpack.c.bf16 %v303, %v302
  %v360 = vpack.c.bf16 %v305, %v304
  %v361 = vpack.c.bf16 %v307, %v306
  %v362 = vpack.c.bf16 %v309, %v308
  %v363 = vpack.c.bf16 %v311, %v310
  %v364 = vpack.c.bf16 %v313, %v312
  %v365 = vpack.c.bf16 %v315, %v314
  %v366 = vpack.c.bf16 %v317, %v316
  %v367 = vpack.c.bf16 %v319, %v318
  %v368 = vpack.c.bf16 %v321, %v320
  %v369 = vpack.c.bf16 %v323, %v322
  %v370 = vpack.c.bf16 %v325, %v324
  %v371 = vpack.c.bf16 %v327, %v326
  %v372 = vpack.c.bf16 %v329, %v328
  %v373 = vpack.c.bf16 %v331, %v330
  %v374 = vpack.c.bf16 %v333, %v332
  %v375 = vpack.c.bf16 %v335, %v334
  %v376 = vpack.c.bf16 %v337, %v336
  %v377 = vpack.c.bf16 %v339, %v338
  %v378 = vpack.c.bf16 %v341, %v340
  %v379 = vpack.c.bf16 %v343, %v342
  %v380 = vpack.c.bf16 %v345, %v344
  %v381 = vpack.c.bf16 %v347, %v346
  %v382 = vpack.c.bf16 %v349, %v348
  %v383 = vpack.c.bf16 %v351, %v350
  %v384 = vld [vmem:[%s3] sm:$0xf]
  %v385 = vld [vmem:[%s3 + $0x4] sm:$0xf]
  %v388 = vunpack.c.l.b16 %v384
  %v389 = vunpack.c.l.b16 %v385
  %v390 = vpack.c.b16 %v389, %v388
  %vm392 = vcmask 130048
  %v394 = vsel %vm392, %v352, 0
  %v397 = vsel %vm392, %v353, 0
  %v400 = vsel %vm392, %v354, 0
  %v403 = vsel %vm392, %v355, 0
  %v406 = vsel %vm392, %v356, 0
  %v409 = vsel %vm392, %v357, 0
  %v412 = vsel %vm392, %v358, 0
  %v415 = vsel %vm392, %v359, 0
  %v418 = vsel %vm392, %v360, 0
  %v421 = vsel %vm392, %v361, 0
  %v424 = vsel %vm392, %v362, 0
  %v427 = vsel %vm392, %v363, 0
  %v430 = vsel %vm392, %v364, 0
  %v433 = vsel %vm392, %v365, 0
  %v436 = vsel %vm392, %v366, 0
  %v439 = vsel %vm392, %v367, 0
  %v442 = vsel %vm392, %v368, 0
  %v445 = vsel %vm392, %v369, 0
  %v448 = vsel %vm392, %v370, 0
  %v451 = vsel %vm392, %v371, 0
  %v454 = vsel %vm392, %v372, 0
  %v457 = vsel %vm392, %v373, 0
  %v460 = vsel %vm392, %v374, 0
  %v463 = vsel %vm392, %v375, 0
  %v466 = vsel %vm392, %v376, 0
  %v469 = vsel %vm392, %v377, 0
  %v472 = vsel %vm392, %v378, 0
  %v475 = vsel %vm392, %v379, 0
  %v478 = vsel %vm392, %v380, 0
  %v481 = vsel %vm392, %v381, 0
  %v484 = vsel %vm392, %v382, 0
  %v487 = vsel %vm392, %v383, 0
  %489 = vmatprep.subr.bf16.mxu0 0
  %490 = vmatpush1.bf16.msra.mxu0 %v390
  %491 = vmatprep.subr.bf16.mxu0 0
  %492 = vmatpush1.bf16.msra.mxu0 0
  %493 = vmatprep.subr.bf16.mxu0 0
  %494 = vmatpush1.bf16.msra.mxu0 0
  %495 = vmatprep.subr.bf16.mxu0 0
  %496 = vmatpush1.bf16.msra.mxu0 0
  %497 = vmatprep.subr.bf16.mxu0 0
  %498 = vmatpush1.bf16.msra.mxu0 0
  %499 = vmatprep.subr.bf16.mxu0 0
  %500 = vmatpush1.bf16.msra.mxu0 0
  %501 = vmatprep.subr.bf16.mxu0 0
  %502 = vmatpush1.bf16.msra.mxu0 0
  %503 = vmatprep.subr.bf16.mxu0 0
  %504 = vmatpush1.bf16.msra.mxu0 0
  %505 = vmatprep.subr.bf16.mxu0 0
  %506 = vmatpush1.bf16.msra.mxu0 0
  %507 = vmatprep.subr.bf16.mxu0 0
  %508 = vmatpush1.bf16.msra.mxu0 0
  %509 = vmatprep.subr.bf16.mxu0 0
  %510 = vmatpush1.bf16.msra.mxu0 0
  %511 = vmatprep.subr.bf16.mxu0 0
  %512 = vmatpush1.bf16.msra.mxu0 0
  %513 = vmatprep.subr.bf16.mxu0 0
  %514 = vmatpush1.bf16.msra.mxu0 0
  %515 = vmatprep.subr.bf16.mxu0 0
  %516 = vmatpush1.bf16.msra.mxu0 0
  %517 = vmatprep.subr.bf16.mxu0 0
  %518 = vmatpush1.bf16.msra.mxu0 0
  %519 = vmatprep.subr.bf16.mxu0 0
  %520 = vmatpush1.bf16.msra.mxu0 0
  %521 = vmatprep.mubr.bf16.mxu0 0
  %522 = vmatmul.mubr.bf16.gmra.mrb[0].mxu0 %v394
  %v523 = vpop.f32.mrb[0].mxu0
  %v524 = vadd.f32 0.0, %v523
  %v525 = vpop.f32.mrb[0].mxu0
  %v526 = vpop.f32.mrb[0].mxu0
  %v527 = vadd.f32 0.0, %v526
  %v528 = vpop.f32.mrb[0].mxu0
  %529 = vmatprep.mubr.bf16.mxu0 0
  %530 = vmatmul.mubr.bf16.gmra.mrb[0].mxu0 %v397
  %v531 = vpop.f32.mrb[0].mxu0
  %v532 = vadd.f32 0.0, %v531
  %v533 = vpop.f32.mrb[0].mxu0
  %v534 = vpop.f32.mrb[0].mxu0
  %v535 = vadd.f32 0.0, %v534
  %v536 = vpop.f32.mrb[0].mxu0
  %537 = vmatprep.mubr.bf16.mxu0 0
  %538 = vmatmul.mubr.bf16.gmra.mrb[0].mxu0 %v400
  %v539 = vpop.f32.mrb[0].mxu0
  %v540 = vadd.f32 0.0, %v539
  %v541 = vpop.f32.mrb[0].mxu0
  %v542 = vpop.f32.mrb[0].mxu0
  %v543 = vadd.f32 0.0, %v542
  %v544 = vpop.f32.mrb[0].mxu0
  %545 = vmatprep.mubr.bf16.mxu0 0
  %546 = vmatmul.mubr.bf16.gmra.mrb[0].mxu0 %v403
  %v547 = vpop.f32.mrb[0].mxu0
  %v548 = vadd.f32 0.0, %v547
  %v549 = vpop.f32.mrb[0].mxu0
  %v550 = vpop.f32.mrb[0].mxu0
  %v551 = vadd.f32 0.0, %v550
  %v552 = vpop.f32.mrb[0].mxu0
  %553 = vmatprep.mubr.bf16.mxu0 0
  %554 = vmatmul.mubr.bf16.gmra.mrb[0].mxu0 %v406
  %v555 = vpop.f32.mrb[0].mxu0
  %v556 = vadd.f32 0.0, %v555
  %v557 = vpop.f32.mrb[0].mxu0
  %v558 = vpop.f32.mrb[0].mxu0
  %v559 = vadd.f32 0.0, %v558
  %v560 = vpop.f32.mrb[0].mxu0
  %561 = vmatprep.mubr.bf16.mxu0 0
  %562 = vmatmul.mubr.bf16.gmra.mrb[0].mxu0 %v409
  %v563 = vpop.f32.mrb[0].mxu0
  %v564 = vadd.f32 0.0, %v563
  %v565 = vpop.f32.mrb[0].mxu0
  %v566 = vpop.f32.mrb[0].mxu0
  %v567 = vadd.f32 0.0, %v566
  %v568 = vpop.f32.mrb[0].mxu0
  %569 = vmatprep.mubr.bf16.mxu0 0
  %570 = vmatmul.mubr.bf16.gmra.mrb[0].mxu0 %v412
  %v571 = vpop.f32.mrb[0].mxu0
  %v572 = vadd.f32 0.0, %v571
  %v573 = vpop.f32.mrb[0].mxu0
  %v574 = vpop.f32.mrb[0].mxu0
  %v575 = vadd.f32 0.0, %v574
  %v576 = vpop.f32.mrb[0].mxu0
  %577 = vmatprep.mubr.bf16.mxu0 0
  %578 = vmatmul.mubr.bf16.gmra.mrb[0].mxu0 %v415
  %v579 = vpop.f32.mrb[0].mxu0
  %v580 = vadd.f32 0.0, %v579
  %v581 = vpop.f32.mrb[0].mxu0
  %v582 = vpop.f32.mrb[0].mxu0
  %v583 = vadd.f32 0.0, %v582
  %v584 = vpop.f32.mrb[0].mxu0
  %585 = vmatprep.mubr.bf16.mxu0 0
  %586 = vmatmul.mubr.bf16.gmra.mrb[0].mxu0 %v418
  %v587 = vpop.f32.mrb[0].mxu0
  %v588 = vadd.f32 0.0, %v587
  %v589 = vpop.f32.mrb[0].mxu0
  %v590 = vpop.f32.mrb[0].mxu0
  %v591 = vadd.f32 0.0, %v590
  %v592 = vpop.f32.mrb[0].mxu0
  %593 = vmatprep.mubr.bf16.mxu0 0
  %594 = vmatmul.mubr.bf16.gmra.mrb[0].mxu0 %v421
  %v595 = vpop.f32.mrb[0].mxu0
  %v596 = vadd.f32 0.0, %v595
  %v597 = vpop.f32.mrb[0].mxu0
  %v598 = vpop.f32.mrb[0].mxu0
  %v599 = vadd.f32 0.0, %v598
  %v600 = vpop.f32.mrb[0].mxu0
  %601 = vmatprep.mubr.bf16.mxu0 0
  %602 = vmatmul.mubr.bf16.gmra.mrb[0].mxu0 %v424
  %v603 = vpop.f32.mrb[0].mxu0
  %v604 = vadd.f32 0.0, %v603
  %v605 = vpop.f32.mrb[0].mxu0
  %v606 = vpop.f32.mrb[0].mxu0
  %v607 = vadd.f32 0.0, %v606
  %v608 = vpop.f32.mrb[0].mxu0
  %609 = vmatprep.mubr.bf16.mxu0 0
  %610 = vmatmul.mubr.bf16.gmra.mrb[0].mxu0 %v427
  %v611 = vpop.f32.mrb[0].mxu0
  %v612 = vadd.f32 0.0, %v611
  %v613 = vpop.f32.mrb[0].mxu0
  %v614 = vpop.f32.mrb[0].mxu0
  %v615 = vadd.f32 0.0, %v614
  %v616 = vpop.f32.mrb[0].mxu0
  %617 = vmatprep.mubr.bf16.mxu0 0
  %618 = vmatmul.mubr.bf16.gmra.mrb[0].mxu0 %v430
  %v619 = vpop.f32.mrb[0].mxu0
  %v620 = vadd.f32 0.0, %v619
  %v621 = vpop.f32.mrb[0].mxu0
  %v622 = vpop.f32.mrb[0].mxu0
  %v623 = vadd.f32 0.0, %v622
  %v624 = vpop.f32.mrb[0].mxu0
  %625 = vmatprep.mubr.bf16.mxu0 0
  %626 = vmatmul.mubr.bf16.gmra.mrb[0].mxu0 %v433
  %v627 = vpop.f32.mrb[0].mxu0
  %v628 = vadd.f32 0.0, %v627
  %v629 = vpop.f32.mrb[0].mxu0
  %v630 = vpop.f32.mrb[0].mxu0
  %v631 = vadd.f32 0.0, %v630
  %v632 = vpop.f32.mrb[0].mxu0
  %633 = vmatprep.mubr.bf16.mxu0 0
  %634 = vmatmul.mubr.bf16.gmra.mrb[0].mxu0 %v436
  %v635 = vpop.f32.mrb[0].mxu0
  %v636 = vadd.f32 0.0, %v635
  %v637 = vpop.f32.mrb[0].mxu0
  %v638 = vpop.f32.mrb[0].mxu0
  %v639 = vadd.f32 0.0, %v638
  %v640 = vpop.f32.mrb[0].mxu0
  %641 = vmatprep.mubr.bf16.mxu0 0
  %642 = vmatmul.mubr.bf16.gmra.mrb[0].mxu0 %v439
  %v643 = vpop.f32.mrb[0].mxu0
  %v644 = vadd.f32 0.0, %v643
  %v645 = vpop.f32.mrb[0].mxu0
  %v646 = vpop.f32.mrb[0].mxu0
  %v647 = vadd.f32 0.0, %v646
  %v648 = vpop.f32.mrb[0].mxu0
  %649 = vmatprep.mubr.bf16.mxu0 0
  %650 = vmatmul.mubr.bf16.gmra.mrb[0].mxu0 %v442
  %v651 = vpop.f32.mrb[0].mxu0
  %v652 = vadd.f32 0.0, %v651
  %v653 = vpop.f32.mrb[0].mxu0
  %v654 = vpop.f32.mrb[0].mxu0
  %v655 = vadd.f32 0.0, %v654
  %v656 = vpop.f32.mrb[0].mxu0
  %657 = vmatprep.mubr.bf16.mxu0 0
  %658 = vmatmul.mubr.bf16.gmra.mrb[0].mxu0 %v445
  %v659 = vpop.f32.mrb[0].mxu0
  %v660 = vadd.f32 0.0, %v659
  %v661 = vpop.f32.mrb[0].mxu0
  %v662 = vpop.f32.mrb[0].mxu0
  %v663 = vadd.f32 0.0, %v662
  %v664 = vpop.f32.mrb[0].mxu0
  %665 = vmatprep.mubr.bf16.mxu0 0
  %666 = vmatmul.mubr.bf16.gmra.mrb[0].mxu0 %v448
  %v667 = vpop.f32.mrb[0].mxu0
  %v668 = vadd.f32 0.0, %v667
  %v669 = vpop.f32.mrb[0].mxu0
  %v670 = vpop.f32.mrb[0].mxu0
  %v671 = vadd.f32 0.0, %v670
  %v672 = vpop.f32.mrb[0].mxu0
  %673 = vmatprep.mubr.bf16.mxu0 0
  %674 = vmatmul.mubr.bf16.gmra.mrb[0].mxu0 %v451
  %v675 = vpop.f32.mrb[0].mxu0
  %v676 = vadd.f32 0.0, %v675
  %v677 = vpop.f32.mrb[0].mxu0
  %v678 = vpop.f32.mrb[0].mxu0
  %v679 = vadd.f32 0.0, %v678
  %v680 = vpop.f32.mrb[0].mxu0
  %681 = vmatprep.mubr.bf16.mxu0 0
  %682 = vmatmul.mubr.bf16.gmra.mrb[0].mxu0 %v454
  %v683 = vpop.f32.mrb[0].mxu0
  %v684 = vadd.f32 0.0, %v683
  %v685 = vpop.f32.mrb[0].mxu0
  %v686 = vpop.f32.mrb[0].mxu0
  %v687 = vadd.f32 0.0, %v686
  %v688 = vpop.f32.mrb[0].mxu0
  %689 = vmatprep.mubr.bf16.mxu0 0
  %690 = vmatmul.mubr.bf16.gmra.mrb[0].mxu0 %v457
  %v691 = vpop.f32.mrb[0].mxu0
  %v692 = vadd.f32 0.0, %v691
  %v693 = vpop.f32.mrb[0].mxu0
  %v694 = vpop.f32.mrb[0].mxu0
  %v695 = vadd.f32 0.0, %v694
  %v696 = vpop.f32.mrb[0].mxu0
  %697 = vmatprep.mubr.bf16.mxu0 0
  %698 = vmatmul.mubr.bf16.gmra.mrb[0].mxu0 %v460
  %v699 = vpop.f32.mrb[0].mxu0
  %v700 = vadd.f32 0.0, %v699
  %v701 = vpop.f32.mrb[0].mxu0
  %v702 = vpop.f32.mrb[0].mxu0
  %v703 = vadd.f32 0.0, %v702
  %v704 = vpop.f32.mrb[0].mxu0
  %705 = vmatprep.mubr.bf16.mxu0 0
  %706 = vmatmul.mubr.bf16.gmra.mrb[0].mxu0 %v463
  %v707 = vpop.f32.mrb[0].mxu0
  %v708 = vadd.f32 0.0, %v707
  %v709 = vpop.f32.mrb[0].mxu0
  %v710 = vpop.f32.mrb[0].mxu0
  %v711 = vadd.f32 0.0, %v710
  %v712 = vpop.f32.mrb[0].mxu0
  %713 = vmatprep.mubr.bf16.mxu0 0
  %714 = vmatmul.mubr.bf16.gmra.mrb[0].mxu0 %v466
  %v715 = vpop.f32.mrb[0].mxu0
  %v716 = vadd.f32 0.0, %v715
  %v717 = vpop.f32.mrb[0].mxu0
  %v718 = vpop.f32.mrb[0].mxu0
  %v719 = vadd.f32 0.0, %v718
  %v720 = vpop.f32.mrb[0].mxu0
  %721 = vmatprep.mubr.bf16.mxu0 0
  %722 = vmatmul.mubr.bf16.gmra.mrb[0].mxu0 %v469
  %v723 = vpop.f32.mrb[0].mxu0
  %v724 = vadd.f32 0.0, %v723
  %v725 = vpop.f32.mrb[0].mxu0
  %v726 = vpop.f32.mrb[0].mxu0
  %v727 = vadd.f32 0.0, %v726
  %v728 = vpop.f32.mrb[0].mxu0
  %729 = vmatprep.mubr.bf16.mxu0 0
  %730 = vmatmul.mubr.bf16.gmra.mrb[0].mxu0 %v472
  %v731 = vpop.f32.mrb[0].mxu0
  %v732 = vadd.f32 0.0, %v731
  %v733 = vpop.f32.mrb[0].mxu0
  %v734 = vpop.f32.mrb[0].mxu0
  %v735 = vadd.f32 0.0, %v734
  %v736 = vpop.f32.mrb[0].mxu0
  %737 = vmatprep.mubr.bf16.mxu0 0
  %738 = vmatmul.mubr.bf16.gmra.mrb[0].mxu0 %v475
  %v739 = vpop.f32.mrb[0].mxu0
  %v740 = vadd.f32 0.0, %v739
  %v741 = vpop.f32.mrb[0].mxu0
  %v742 = vpop.f32.mrb[0].mxu0
  %v743 = vadd.f32 0.0, %v742
  %v744 = vpop.f32.mrb[0].mxu0
  %745 = vmatprep.mubr.bf16.mxu0 0
  %746 = vmatmul.mubr.bf16.gmra.mrb[0].mxu0 %v478
  %v747 = vpop.f32.mrb[0].mxu0
  %v748 = vadd.f32 0.0, %v747
  %v749 = vpop.f32.mrb[0].mxu0
  %v750 = vpop.f32.mrb[0].mxu0
  %v751 = vadd.f32 0.0, %v750
  %v752 = vpop.f32.mrb[0].mxu0
  %753 = vmatprep.mubr.bf16.mxu0 0
  %754 = vmatmul.mubr.bf16.gmra.mrb[0].mxu0 %v481
  %v755 = vpop.f32.mrb[0].mxu0
  %v756 = vadd.f32 0.0, %v755
  %v757 = vpop.f32.mrb[0].mxu0
  %v758 = vpop.f32.mrb[0].mxu0
  %v759 = vadd.f32 0.0, %v758
  %v760 = vpop.f32.mrb[0].mxu0
  %761 = vmatprep.mubr.bf16.mxu0 0
  %762 = vmatmul.mubr.bf16.gmra.mrb[0].mxu0 %v484
  %v763 = vpop.f32.mrb[0].mxu0
  %v764 = vadd.f32 0.0, %v763
  %v765 = vpop.f32.mrb[0].mxu0
  %v766 = vpop.f32.mrb[0].mxu0
  %v767 = vadd.f32 0.0, %v766
  %v768 = vpop.f32.mrb[0].mxu0
  %769 = vmatprep.mubr.bf16.mxu0 0
  %770 = vmatmul.mubr.bf16.gmra.mrb[0].mxu0 %v487
  %v771 = vpop.f32.mrb[0].mxu0
  %v772 = vadd.f32 0.0, %v771
  %v773 = vpop.f32.mrb[0].mxu0
  %v774 = vpop.f32.mrb[0].mxu0
  %v775 = vadd.f32 0.0, %v774
  %v776 = vpop.f32.mrb[0].mxu0
  %777 = vdwg.mxu0
  %v778 = vpack.c.bf16 %v527, %v524
  %v779 = vpack.c.bf16 %v535, %v532
  %v780 = vpack.c.bf16 %v543, %v540
  %v781 = vpack.c.bf16 %v551, %v548
  %v782 = vpack.c.bf16 %v559, %v556
  %v783 = vpack.c.bf16 %v567, %v564
  %v784 = vpack.c.bf16 %v575, %v572
  %v785 = vpack.c.bf16 %v583, %v580
  %v786 = vpack.c.bf16 %v591, %v588
  %v787 = vpack.c.bf16 %v599, %v596
  %v788 = vpack.c.bf16 %v607, %v604
  %v789 = vpack.c.bf16 %v615, %v612
  %v790 = vpack.c.bf16 %v623, %v620
  %v791 = vpack.c.bf16 %v631, %v628
  %v792 = vpack.c.bf16 %v639, %v636
  %v793 = vpack.c.bf16 %v647, %v644
  %v794 = vpack.c.bf16 %v655, %v652
  %v795 = vpack.c.bf16 %v663, %v660
  %v796 = vpack.c.bf16 %v671, %v668
  %v797 = vpack.c.bf16 %v679, %v676
  %v798 = vpack.c.bf16 %v687, %v684
  %v799 = vpack.c.bf16 %v695, %v692
  %v800 = vpack.c.bf16 %v703, %v700
  %v801 = vpack.c.bf16 %v711, %v708
  %v802 = vpack.c.bf16 %v719, %v716
  %v803 = vpack.c.bf16 %v727, %v724
  %v804 = vpack.c.bf16 %v735, %v732
  %v805 = vpack.c.bf16 %v743, %v740
  %v806 = vpack.c.bf16 %v751, %v748
  %v807 = vpack.c.bf16 %v759, %v756
  %v808 = vpack.c.bf16 %v767, %v764
  %v809 = vpack.c.bf16 %v775, %v772
  %v842 = vunpack.c.l.b16 %v778
  %v843 = vunpack.c.h.b16 %v778
  %v844 = vunpack.c.l.b16 %v779
  %v845 = vunpack.c.h.b16 %v779
  %v846 = vunpack.c.l.b16 %v780
  %v847 = vunpack.c.h.b16 %v780
  %v848 = vunpack.c.l.b16 %v781
  %v849 = vunpack.c.h.b16 %v781
  %v850 = vunpack.c.l.b16 %v782
  %v851 = vunpack.c.h.b16 %v782
  %v852 = vunpack.c.l.b16 %v783
  %v853 = vunpack.c.h.b16 %v783
  %v854 = vunpack.c.l.b16 %v784
  %v855 = vunpack.c.h.b16 %v784
  %v856 = vunpack.c.l.b16 %v785
  %v857 = vunpack.c.h.b16 %v785
  %v858 = vunpack.c.l.b16 %v786
  %v859 = vunpack.c.h.b16 %v786
  %v860 = vunpack.c.l.b16 %v787
  %v861 = vunpack.c.h.b16 %v787
  %v862 = vunpack.c.l.b16 %v788
  %v863 = vunpack.c.h.b16 %v788
  %v864 = vunpack.c.l.b16 %v789
  %v865 = vunpack.c.h.b16 %v789
  %v866 = vunpack.c.l.b16 %v790
  %v867 = vunpack.c.h.b16 %v790
  %v868 = vunpack.c.l.b16 %v791
  %v869 = vunpack.c.h.b16 %v791
  %v870 = vunpack.c.l.b16 %v792
  %v871 = vunpack.c.h.b16 %v792
  %v872 = vunpack.c.l.b16 %v793
  %v873 = vunpack.c.h.b16 %v793
  %v874 = vunpack.c.l.b16 %v794
  %v875 = vunpack.c.h.b16 %v794
  %v876 = vunpack.c.l.b16 %v795
  %v877 = vunpack.c.h.b16 %v795
  %v878 = vunpack.c.l.b16 %v796
  %v879 = vunpack.c.h.b16 %v796
  %v880 = vunpack.c.l.b16 %v797
  %v881 = vunpack.c.h.b16 %v797
  %v882 = vunpack.c.l.b16 %v798
  %v883 = vunpack.c.h.b16 %v798
  %v884 = vunpack.c.l.b16 %v799
  %v885 = vunpack.c.h.b16 %v799
  %v886 = vunpack.c.l.b16 %v800
  %v887 = vunpack.c.h.b16 %v800
  %v888 = vunpack.c.l.b16 %v801
  %v889 = vunpack.c.h.b16 %v801
  %v890 = vunpack.c.l.b16 %v802
  %v891 = vunpack.c.h.b16 %v802
  %v892 = vunpack.c.l.b16 %v803
  %v893 = vunpack.c.h.b16 %v803
  %v894 = vunpack.c.l.b16 %v804
  %v895 = vunpack.c.h.b16 %v804
  %v896 = vunpack.c.l.b16 %v805
  %v897 = vunpack.c.h.b16 %v805
  %v898 = vunpack.c.l.b16 %v806
  %v899 = vunpack.c.h.b16 %v806
  %v900 = vunpack.c.l.b16 %v807
  %v901 = vunpack.c.h.b16 %v807
  %v902 = vunpack.c.l.b16 %v808
  %v903 = vunpack.c.h.b16 %v808
  %v904 = vunpack.c.l.b16 %v809
  %v905 = vunpack.c.h.b16 %v809
  %v906 = vpack.c.b16 %v842, %v842
  %v907 = vpack.c.b16 %v843, %v843
  %v908 = vpack.c.b16 %v844, %v844
  %v909 = vpack.c.b16 %v845, %v845
  %v910 = vpack.c.b16 %v846, %v846
  %v911 = vpack.c.b16 %v847, %v847
  %v912 = vpack.c.b16 %v848, %v848
  %v913 = vpack.c.b16 %v849, %v849
  %v914 = vpack.c.b16 %v850, %v850
  %v915 = vpack.c.b16 %v851, %v851
  %v916 = vpack.c.b16 %v852, %v852
  %v917 = vpack.c.b16 %v853, %v853
  %v918 = vpack.c.b16 %v854, %v854
  %v919 = vpack.c.b16 %v855, %v855
  %v920 = vpack.c.b16 %v856, %v856
  %v921 = vpack.c.b16 %v857, %v857
  %v922 = vpack.c.b16 %v858, %v858
  %v923 = vpack.c.b16 %v859, %v859
  %v924 = vpack.c.b16 %v860, %v860
  %v925 = vpack.c.b16 %v861, %v861
  %v926 = vpack.c.b16 %v862, %v862
  %v927 = vpack.c.b16 %v863, %v863
  %v928 = vpack.c.b16 %v864, %v864
  %v929 = vpack.c.b16 %v865, %v865
  %v930 = vpack.c.b16 %v866, %v866
  %v931 = vpack.c.b16 %v867, %v867
  %v932 = vpack.c.b16 %v868, %v868
  %v933 = vpack.c.b16 %v869, %v869
  %v934 = vpack.c.b16 %v870, %v870
  %v935 = vpack.c.b16 %v871, %v871
  %v936 = vpack.c.b16 %v872, %v872
  %v937 = vpack.c.b16 %v873, %v873
  %v938 = vpack.c.b16 %v874, %v874
  %v939 = vpack.c.b16 %v875, %v875
  %v940 = vpack.c.b16 %v876, %v876
  %v941 = vpack.c.b16 %v877, %v877
  %v942 = vpack.c.b16 %v878, %v878
  %v943 = vpack.c.b16 %v879, %v879
  %v944 = vpack.c.b16 %v880, %v880
  %v945 = vpack.c.b16 %v881, %v881
  %v946 = vpack.c.b16 %v882, %v882
  %v947 = vpack.c.b16 %v883, %v883
  %v948 = vpack.c.b16 %v884, %v884
  %v949 = vpack.c.b16 %v885, %v885
  %v950 = vpack.c.b16 %v886, %v886
  %v951 = vpack.c.b16 %v887, %v887
  %v952 = vpack.c.b16 %v888, %v888
  %v953 = vpack.c.b16 %v889, %v889
  %v954 = vpack.c.b16 %v890, %v890
  %v955 = vpack.c.b16 %v891, %v891
  %v956 = vpack.c.b16 %v892, %v892
  %v957 = vpack.c.b16 %v893, %v893
  %v958 = vpack.c.b16 %v894, %v894
  %v959 = vpack.c.b16 %v895, %v895
  %v960 = vpack.c.b16 %v896, %v896
  %v961 = vpack.c.b16 %v897, %v897
  %v962 = vpack.c.b16 %v898, %v898
  %v963 = vpack.c.b16 %v899, %v899
  %v964 = vpack.c.b16 %v900, %v900
  %v965 = vpack.c.b16 %v901, %v901
  %v966 = vpack.c.b16 %v902, %v902
  %v967 = vpack.c.b16 %v903, %v903
  %v968 = vpack.c.b16 %v904, %v904
  %v969 = vpack.c.b16 %v905, %v905
  %1034 = vst [vmem:[%s4] sm:$0xf] %v906
  %1035 = vst [vmem:[%s4 + $0x4] sm:$0xf] %v907
  %1036 = vst [vmem:[%s4 + $0x8] sm:$0xf] %v908
  %1037 = vst [vmem:[%s4 + $0xc] sm:$0xf] %v909
  %1038 = vst [vmem:[%s4 + $0x10] sm:$0xf] %v910
  %1039 = vst [vmem:[%s4 + $0x14] sm:$0xf] %v911
  %1040 = vst [vmem:[%s4 + $0x18] sm:$0xf] %v912
  %1041 = vst [vmem:[%s4 + $0x1c] sm:$0xf] %v913
  %1042 = vst [vmem:[%s4 + $0x20] sm:$0xf] %v914
  %1043 = vst [vmem:[%s4 + $0x24] sm:$0xf] %v915
  %1044 = vst [vmem:[%s4 + $0x28] sm:$0xf] %v916
  %1045 = vst [vmem:[%s4 + $0x2c] sm:$0xf] %v917
  %1046 = vst [vmem:[%s4 + $0x30] sm:$0xf] %v918
  %1047 = vst [vmem:[%s4 + $0x34] sm:$0xf] %v919
  %1048 = vst [vmem:[%s4 + $0x38] sm:$0xf] %v920
  %1049 = vst [vmem:[%s4 + $0x3c] sm:$0xf] %v921
  %1050 = vst [vmem:[%s4 + $0x40] sm:$0xf] %v922
  %1051 = vst [vmem:[%s4 + $0x44] sm:$0xf] %v923
  %1052 = vst [vmem:[%s4 + $0x48] sm:$0xf] %v924
  %1053 = vst [vmem:[%s4 + $0x4c] sm:$0xf] %v925
  %1054 = vst [vmem:[%s4 + $0x50] sm:$0xf] %v926
  %1055 = vst [vmem:[%s4 + $0x54] sm:$0xf] %v927
  %1056 = vst [vmem:[%s4 + $0x58] sm:$0xf] %v928
  %1057 = vst [vmem:[%s4 + $0x5c] sm:$0xf] %v929
  %1058 = vst [vmem:[%s4 + $0x60] sm:$0xf] %v930
  %1059 = vst [vmem:[%s4 + $0x64] sm:$0xf] %v931
  %1060 = vst [vmem:[%s4 + $0x68] sm:$0xf] %v932
  %1061 = vst [vmem:[%s4 + $0x6c] sm:$0xf] %v933
  %1062 = vst [vmem:[%s4 + $0x70] sm:$0xf] %v934
  %1063 = vst [vmem:[%s4 + $0x74] sm:$0xf] %v935
  %1064 = vst [vmem:[%s4 + $0x78] sm:$0xf] %v936
  %1065 = vst [vmem:[%s4 + $0x7c] sm:$0xf] %v937
  %1066 = vst [vmem:[%s4 + $0x80] sm:$0xf] %v938
  %1067 = vst [vmem:[%s4 + $0x84] sm:$0xf] %v939
  %1068 = vst [vmem:[%s4 + $0x88] sm:$0xf] %v940
  %1069 = vst [vmem:[%s4 + $0x8c] sm:$0xf] %v941
  %1070 = vst [vmem:[%s4 + $0x90] sm:$0xf] %v942
  %1071 = vst [vmem:[%s4 + $0x94] sm:$0xf] %v943
  %1072 = vst [vmem:[%s4 + $0x98] sm:$0xf] %v944
  %1073 = vst [vmem:[%s4 + $0x9c] sm:$0xf] %v945
  %1074 = vst [vmem:[%s4 + $0xa0] sm:$0xf] %v946
  %1075 = vst [vmem:[%s4 + $0xa4] sm:$0xf] %v947
  %1076 = vst [vmem:[%s4 + $0xa8] sm:$0xf] %v948
  %1077 = vst [vmem:[%s4 + $0xac] sm:$0xf] %v949
  %1078 = vst [vmem:[%s4 + $0xb0] sm:$0xf] %v950
  %1079 = vst [vmem:[%s4 + $0xb4] sm:$0xf] %v951
  %1080 = vst [vmem:[%s4 + $0xb8] sm:$0xf] %v952
  %1081 = vst [vmem:[%s4 + $0xbc] sm:$0xf] %v953
  %1082 = vst [vmem:[%s4 + $0xc0] sm:$0xf] %v954
  %1083 = vst [vmem:[%s4 + $0xc4] sm:$0xf] %v955
  %1084 = vst [vmem:[%s4 + $0xc8] sm:$0xf] %v956
  %1085 = vst [vmem:[%s4 + $0xcc] sm:$0xf] %v957
  %1086 = vst [vmem:[%s4 + $0xd0] sm:$0xf] %v958
  %1087 = vst [vmem:[%s4 + $0xd4] sm:$0xf] %v959
  %1088 = vst [vmem:[%s4 + $0xd8] sm:$0xf] %v960
  %1089 = vst [vmem:[%s4 + $0xdc] sm:$0xf] %v961
  %1090 = vst [vmem:[%s4 + $0xe0] sm:$0xf] %v962
  %1091 = vst [vmem:[%s4 + $0xe4] sm:$0xf] %v963
  %1092 = vst [vmem:[%s4 + $0xe8] sm:$0xf] %v964
  %1093 = vst [vmem:[%s4 + $0xec] sm:$0xf] %v965
  %1094 = vst [vmem:[%s4 + $0xf0] sm:$0xf] %v966
  %1095 = vst [vmem:[%s4 + $0xf4] sm:$0xf] %v967
  %1096 = vst [vmem:[%s4 + $0xf8] sm:$0xf] %v968
  %1097 = vst [vmem:[%s4 + $0xfc] sm:$0xf] %v969
  // Predicated region
  $region18: #{generator_forward.16} parent=0 // pred_check
    _
  $region19: #{generator_forward.16} parent=0 // pred_check_branch
    %1099 = sbr.rel (0) target = $region21
  $region20: #{generator_forward.16} parent=0 // pred_region
    _
  $region21: #{generator_forward.16} parent=0 // pred_fallthru
    _
  // Predicated region
  $region22: #{generator_forward.16} parent=0 // pred_check
    _
  $region23: #{generator_forward.16} parent=0 // pred_check_branch
    %1101 = sbr.rel (0) target = $region25
  $region24: #{generator_forward.16} parent=0 // pred_region
    _
  $region25: #{generator_forward.16} parent=0 // pred_fallthru
    _

// kernel: generator_forward.17
$region0: #{generator_forward.17}
  #allocation0 [shape = 'u32[]', space=smem, size = 0x4, offset = 0x4, fixed_abs, tag = 'smem constant byte address 0x4 - core index']
  #allocation1 [shape = 'u32[144,128]{1,0:T(1,128)}', space=vmem, size = 0x12000, scoped, tag = 'internal scratch']
  #allocation2 [shape = 'f32[1,8]{1,0:T(1,128)}', space=vmem, size = 0x200, scoped, tag = 'scratch operand']
  #allocation3 [shape = 'f32[1,8]{1,0:T(1,128)}', space=vmem, size = 0x200, scoped, tag = 'scratch operand']
  %s0 = inlined_call_operand.vmem [shape: bf16[2048,8], index: 0, kind: input, shape index: {}]
  %s1 = inlined_call_operand.vmem [shape: f32[1,8], index: 1, kind: output, shape index: {0}]
  %s2 = inlined_call_operand.vmem [shape: f32[1,8], index: 2, kind: output, shape index: {1}]
  %3 = xla_tuple %s1, %s2
  %s4 = sld [smem:[#allocation0]]
  $region53: #{generator_forward.17} parent=0
    _
  %s6 = ssub.s32 1, %s4
  %s7 = scalar_select 0, %s6, %s4
  loop: start=0, step=1, limit=4
  $region2: #{generator_forward.17} parent=0 // loop_pre_header
    _
  $region3: #{generator_forward.17} parent=0 // loop_header
    %s9 = sphi 0, %s13
    %p10 = scmp.ge.s32.totalorder %s9, 4
    %s19 = sphi 0, %s21
    %s22 = sphi 0, %s19
    %s23 = sphi 0, %s22
    %s39 = sphi 0, %s23
    %s43 = sphi 0, %s43
    %s45 = sphi 0, %s43
    %s46 = sphi 0, %s45
    %s60 = sphi 0, %s46
    %s64 = sphi 0, %s64
    %s66 = sphi 0, %s64
    %s67 = sphi 0, %s66
    %s81 = sphi 0, %s67
  $region4: #{generator_forward.17} parent=0 // loop_header_branch
    %12 = sbr.rel (%p10) target = $region8
  $region5: #{generator_forward.17} parent=0 // loop_body
    %s14 = ssub.s32 %s9, 1
    %s15 = ssub.s32 %s9, 2
    %s16 = sadd.s32 %s9, 1
    %s17 = ssub.s32 %s9, %s16
    %p18 = scmp.eq.s32.totalorder %s17, 0
    %s20 = sadd.s32 %s19, 1
    %s21 = scalar_select %p18, %s19, %s20
    %p24 = pneg %p18
    %p25 = scmp.eq.s32.totalorder %s9, 1
    %p26 = por %p24, %p25
    %p27 = scmp.ne.s32.totalorder %s19, %s22
    %p28 = scmp.eq.s32.totalorder %s9, 0
    %p29 = por %p27, %p28
    %p30 = scmp.ne.s32.totalorder %s19, %s22
    %p31 = scmp.eq.s32.totalorder %s14, 1
    %p32 = por %p30, %p31
    %p33 = scmp.ne.s32.totalorder %s22, %s23
    %p34 = scmp.eq.s32.totalorder %s14, 0
    %p35 = por %p33, %p34
    %p36 = scmp.ne.s32.totalorder %s22, %s23
    %p37 = scmp.eq.s32.totalorder %s15, 1
    %p38 = por %p36, %p37
    %p40 = scmp.ne.s32.totalorder %s23, %s39
    %p41 = scmp.eq.s32.totalorder %s15, 0
    %p42 = por %p40, %p41
    %s44 = sadd.s32 %s43, 1
    %p47 = scmp.eq.s32.totalorder %s9, 1
    %p48 = scmp.ne.s32.totalorder %s43, %s45
    %p49 = scmp.eq.s32.totalorder %s9, 0
    %p50 = por %p48, %p49
    %p51 = scmp.ne.s32.totalorder %s43, %s45
    %p52 = scmp.eq.s32.totalorder %s14, 1
    %p53 = por %p51, %p52
    %p54 = scmp.ne.s32.totalorder %s45, %s46
    %p55 = scmp.eq.s32.totalorder %s14, 0
    %p56 = por %p54, %p55
    %p57 = scmp.ne.s32.totalorder %s45, %s46
    %p58 = scmp.eq.s32.totalorder %s15, 1
    %p59 = por %p57, %p58
    %p61 = scmp.ne.s32.totalorder %s46, %s60
    %p62 = scmp.eq.s32.totalorder %s15, 0
    %p63 = por %p61, %p62
    %s65 = sadd.s32 %s64, 1
    %p68 = scmp.eq.s32.totalorder %s9, 1
    %p69 = scmp.ne.s32.totalorder %s64, %s66
    %p70 = scmp.eq.s32.totalorder %s9, 0
    %p71 = por %p69, %p70
    %p72 = scmp.ne.s32.totalorder %s64, %s66
    %p73 = scmp.eq.s32.totalorder %s14, 1
    %p74 = por %p72, %p73
    %p75 = scmp.ne.s32.totalorder %s66, %s67
    %p76 = scmp.eq.s32.totalorder %s14, 0
    %p77 = por %p75, %p76
    %p78 = scmp.ne.s32.totalorder %s66, %s67
    %p79 = scmp.eq.s32.totalorder %s15, 1
    %p80 = por %p78, %p79
    %p82 = scmp.ne.s32.totalorder %s67, %s81
    %p83 = scmp.eq.s32.totalorder %s15, 0
    %p84 = por %p82, %p83
    %p85 = scmp.le.s32.totalorder 1, %s9
    %p86 = scmp.lt.s32.totalorder %s9, 3
    %p87 = pnand %p85, %p86
    %p88 = pneg %p87
    // Predicated region
    $region9: #{generator_forward.17} parent=5 // pred_check
      _
    $region10: #{generator_forward.17} parent=5 // pred_check_branch
      %90 = sbr.rel (%p87) target = $region12
    $region11: #{generator_forward.17} parent=5 // pred_region
      %s91 = ssub.s32 %s9, 1
    $region12: #{generator_forward.17} parent=5 // pred_fallthru
      _
    %p92 = scmp.lt.s32.totalorder %s9, 2
    // Predicated region
    $region13: #{generator_forward.17} parent=5 // pred_check
      %p93 = pneg %p92
    $region14: #{generator_forward.17} parent=5 // pred_check_branch
      %95 = sbr.rel (%p93) target = $region16
    $region15: #{generator_forward.17} parent=5 // pred_region
      // Predicated region
      $region17: #{generator_forward.17} parent=15 // pred_check
        %p96 = pneg %p29
      $region18: #{generator_forward.17} parent=15 // pred_check_branch
        %98 = sbr.rel (%p96) target = $region20
      $region19: #{generator_forward.17} parent=15 // pred_region
        %s99 = smul.u32 128, %s9
        %p100 = scmp.lt.s32.totalorder %s99, 255
        %s101 = scalar_select %p100, %s99, 255
        %s102 = smul.addr %s101, 4
        %s103 = scalar_lea.vmem %s0, %s102
        %s104 = smul.u32 128, %s9
      $region20: #{generator_forward.17} parent=15 // pred_fallthru
        _
    $region16: #{generator_forward.17} parent=5 // pred_fallthru
      _
    %p105 = scmp.le.s32.totalorder 1, %s9
    %p106 = scmp.lt.s32.totalorder %s9, 3
    %p107 = pnand %p105, %p106
    %p108 = pneg %p107
    // Predicated region
    $region21: #{generator_forward.17} parent=5 // pred_check
      _
    $region22: #{generator_forward.17} parent=5 // pred_check_branch
      %110 = sbr.rel (%p107) target = $region24
    $region23: #{generator_forward.17} parent=5 // pred_region
      %s111 = ssub.s32 %s9, 1
      %s112 = smul.u32 128, %s14
      %p113 = scmp.lt.s32.totalorder %s112, 255
      %s114 = scalar_select %p113, %s112, 255
      %s115 = smul.addr %s114, 4
      %s116 = scalar_lea.vmem %s0, %s115
      %p117 = pneg %p35
      %p118 = pneg %p32
      %p119 = pneg %p56
      %p120 = pneg %p53
      %p121 = pneg %p77
      %p122 = pneg %p74
      %s123 = smul.u32 128, %s14
      %p124 = scmp.lt.s32.totalorder %s123, 255
      %s125 = scalar_select %p124, %s123, 255
      %s126 = smul.addr %s125, 4
      %s127 = scalar_lea.vmem %s0, %s126
      %s128 = smul.u32 128, %s14
      %p129 = scmp.eq.s32.totalorder %s14, 0
      // Predicated region
      $region25: #{generator_forward.17} parent=23 // pred_check
        %p130 = pneg %p129
      $region26: #{generator_forward.17} parent=23 // pred_check_branch
        %132 = sbr.rel (%p130) target = $region28
      $region27: #{generator_forward.17} parent=23 // pred_region
        %vm133 = vcmask 57344
        %134 = vst.msk [vmem:[#allocation2] sm:$0x1] %vm133, 0.0
        %135 = vst.msk [vmem:[#allocation3] sm:$0x1] %vm133, 0.0
      $region28: #{generator_forward.17} parent=23 // pred_fallthru
        _
      %v136 = vld [vmem:[%s127] sm:$0xf]
      %v137 = vld [vmem:[%s127 + $0x4] sm:$0xf]
      %v138 = vld [vmem:[%s127 + $0x8] sm:$0xf]
      %v139 = vld [vmem:[%s127 + $0xc] sm:$0xf]
      %v140 = vld [vmem:[%s127 + $0x10] sm:$0xf]
      %v141 = vld [vmem:[%s127 + $0x14] sm:$0xf]
      %v142 = vld [vmem:[%s127 + $0x18] sm:$0xf]
      %v143 = vld [vmem:[%s127 + $0x1c] sm:$0xf]
      %v144 = vld [vmem:[%s127 + $0x20] sm:$0xf]
      %v145 = vld [vmem:[%s127 + $0x24] sm:$0xf]
      %v146 = vld [vmem:[%s127 + $0x28] sm:$0xf]
      %v147 = vld [vmem:[%s127 + $0x2c] sm:$0xf]
      %v148 = vld [vmem:[%s127 + $0x30] sm:$0xf]
      %v149 = vld [vmem:[%s127 + $0x34] sm:$0xf]
      %v150 = vld [vmem:[%s127 + $0x38] sm:$0xf]
      %v151 = vld [vmem:[%s127 + $0x3c] sm:$0xf]
      %v152 = vld [vmem:[%s127 + $0x40] sm:$0xf]
      %v153 = vld [vmem:[%s127 + $0x44] sm:$0xf]
      %v154 = vld [vmem:[%s127 + $0x48] sm:$0xf]
      %v155 = vld [vmem:[%s127 + $0x4c] sm:$0xf]
      %v156 = vld [vmem:[%s127 + $0x50] sm:$0xf]
      %v157 = vld [vmem:[%s127 + $0x54] sm:$0xf]
      %v158 = vld [vmem:[%s127 + $0x58] sm:$0xf]
      %v159 = vld [vmem:[%s127 + $0x5c] sm:$0xf]
      %v160 = vld [vmem:[%s127 + $0x60] sm:$0xf]
      %v161 = vld [vmem:[%s127 + $0x64] sm:$0xf]
      %v162 = vld [vmem:[%s127 + $0x68] sm:$0xf]
      %v163 = vld [vmem:[%s127 + $0x6c] sm:$0xf]
      %v164 = vld [vmem:[%s127 + $0x70] sm:$0xf]
      %v165 = vld [vmem:[%s127 + $0x74] sm:$0xf]
      %v166 = vld [vmem:[%s127 + $0x78] sm:$0xf]
      %v167 = vld [vmem:[%s127 + $0x7c] sm:$0xf]
      %v168 = vld [vmem:[%s127 + $0x80] sm:$0xf]
      %v169 = vld [vmem:[%s127 + $0x84] sm:$0xf]
      %v170 = vld [vmem:[%s127 + $0x88] sm:$0xf]
      %v171 = vld [vmem:[%s127 + $0x8c] sm:$0xf]
      %v172 = vld [vmem:[%s127 + $0x90] sm:$0xf]
      %v173 = vld [vmem:[%s127 + $0x94] sm:$0xf]
      %v174 = vld [vmem:[%s127 + $0x98] sm:$0xf]
      %v175 = vld [vmem:[%s127 + $0x9c] sm:$0xf]
      %v176 = vld [vmem:[%s127 + $0xa0] sm:$0xf]
      %v177 = vld [vmem:[%s127 + $0xa4] sm:$0xf]
      %v178 = vld [vmem:[%s127 + $0xa8] sm:$0xf]
      %v179 = vld [vmem:[%s127 + $0xac] sm:$0xf]
      %v180 = vld [vmem:[%s127 + $0xb0] sm:$0xf]
      %v181 = vld [vmem:[%s127 + $0xb4] sm:$0xf]
      %v182 = vld [vmem:[%s127 + $0xb8] sm:$0xf]
      %v183 = vld [vmem:[%s127 + $0xbc] sm:$0xf]
      %v184 = vld [vmem:[%s127 + $0xc0] sm:$0xf]
      %v185 = vld [vmem:[%s127 + $0xc4] sm:$0xf]
      %v186 = vld [vmem:[%s127 + $0xc8] sm:$0xf]
      %v187 = vld [vmem:[%s127 + $0xcc] sm:$0xf]
      %v188 = vld [vmem:[%s127 + $0xd0] sm:$0xf]
      %v189 = vld [vmem:[%s127 + $0xd4] sm:$0xf]
      %v190 = vld [vmem:[%s127 + $0xd8] sm:$0xf]
      %v191 = vld [vmem:[%s127 + $0xdc] sm:$0xf]
      %v192 = vld [vmem:[%s127 + $0xe0] sm:$0xf]
      %v193 = vld [vmem:[%s127 + $0xe4] sm:$0xf]
      %v194 = vld [vmem:[%s127 + $0xe8] sm:$0xf]
      %v195 = vld [vmem:[%s127 + $0xec] sm:$0xf]
      %v196 = vld [vmem:[%s127 + $0xf0] sm:$0xf]
      %v197 = vld [vmem:[%s127 + $0xf4] sm:$0xf]
      %v198 = vld [vmem:[%s127 + $0xf8] sm:$0xf]
      %v199 = vld [vmem:[%s127 + $0xfc] sm:$0xf]
      %v200 = vld [vmem:[%s127 + $0x100] sm:$0xf]
      %v201 = vld [vmem:[%s127 + $0x104] sm:$0xf]
      %v202 = vld [vmem:[%s127 + $0x108] sm:$0xf]
      %v203 = vld [vmem:[%s127 + $0x10c] sm:$0xf]
      %v204 = vld [vmem:[%s127 + $0x110] sm:$0xf]
      %v205 = vld [vmem:[%s127 + $0x114] sm:$0xf]
      %v206 = vld [vmem:[%s127 + $0x118] sm:$0xf]
      %v207 = vld [vmem:[%s127 + $0x11c] sm:$0xf]
      %v208 = vld [vmem:[%s127 + $0x120] sm:$0xf]
      %v209 = vld [vmem:[%s127 + $0x124] sm:$0xf]
      %v210 = vld [vmem:[%s127 + $0x128] sm:$0xf]
      %v211 = vld [vmem:[%s127 + $0x12c] sm:$0xf]
      %v212 = vld [vmem:[%s127 + $0x130] sm:$0xf]
      %v213 = vld [vmem:[%s127 + $0x134] sm:$0xf]
      %v214 = vld [vmem:[%s127 + $0x138] sm:$0xf]
      %v215 = vld [vmem:[%s127 + $0x13c] sm:$0xf]
      %v216 = vld [vmem:[%s127 + $0x140] sm:$0xf]
      %v217 = vld [vmem:[%s127 + $0x144] sm:$0xf]
      %v218 = vld [vmem:[%s127 + $0x148] sm:$0xf]
      %v219 = vld [vmem:[%s127 + $0x14c] sm:$0xf]
      %v220 = vld [vmem:[%s127 + $0x150] sm:$0xf]
      %v221 = vld [vmem:[%s127 + $0x154] sm:$0xf]
      %v222 = vld [vmem:[%s127 + $0x158] sm:$0xf]
      %v223 = vld [vmem:[%s127 + $0x15c] sm:$0xf]
      %v224 = vld [vmem:[%s127 + $0x160] sm:$0xf]
      %v225 = vld [vmem:[%s127 + $0x164] sm:$0xf]
      %v226 = vld [vmem:[%s127 + $0x168] sm:$0xf]
      %v227 = vld [vmem:[%s127 + $0x16c] sm:$0xf]
      %v228 = vld [vmem:[%s127 + $0x170] sm:$0xf]
      %v229 = vld [vmem:[%s127 + $0x174] sm:$0xf]
      %v230 = vld [vmem:[%s127 + $0x178] sm:$0xf]
      %v231 = vld [vmem:[%s127 + $0x17c] sm:$0xf]
      %v232 = vld [vmem:[%s127 + $0x180] sm:$0xf]
      %v233 = vld [vmem:[%s127 + $0x184] sm:$0xf]
      %v234 = vld [vmem:[%s127 + $0x188] sm:$0xf]
      %v235 = vld [vmem:[%s127 + $0x18c] sm:$0xf]
      %v236 = vld [vmem:[%s127 + $0x190] sm:$0xf]
      %v237 = vld [vmem:[%s127 + $0x194] sm:$0xf]
      %v238 = vld [vmem:[%s127 + $0x198] sm:$0xf]
      %v239 = vld [vmem:[%s127 + $0x19c] sm:$0xf]
      %v240 = vld [vmem:[%s127 + $0x1a0] sm:$0xf]
      %v241 = vld [vmem:[%s127 + $0x1a4] sm:$0xf]
      %v242 = vld [vmem:[%s127 + $0x1a8] sm:$0xf]
      %v243 = vld [vmem:[%s127 + $0x1ac] sm:$0xf]
      %v244 = vld [vmem:[%s127 + $0x1b0] sm:$0xf]
      %v245 = vld [vmem:[%s127 + $0x1b4] sm:$0xf]
      %v246 = vld [vmem:[%s127 + $0x1b8] sm:$0xf]
      %v247 = vld [vmem:[%s127 + $0x1bc] sm:$0xf]
      %v248 = vld [vmem:[%s127 + $0x1c0] sm:$0xf]
      %v249 = vld [vmem:[%s127 + $0x1c4] sm:$0xf]
      %v250 = vld [vmem:[%s127 + $0x1c8] sm:$0xf]
      %v251 = vld [vmem:[%s127 + $0x1cc] sm:$0xf]
      %v252 = vld [vmem:[%s127 + $0x1d0] sm:$0xf]
      %v253 = vld [vmem:[%s127 + $0x1d4] sm:$0xf]
      %v254 = vld [vmem:[%s127 + $0x1d8] sm:$0xf]
      %v255 = vld [vmem:[%s127 + $0x1dc] sm:$0xf]
      %v256 = vld [vmem:[%s127 + $0x1e0] sm:$0xf]
      %v257 = vld [vmem:[%s127 + $0x1e4] sm:$0xf]
      %v258 = vld [vmem:[%s127 + $0x1e8] sm:$0xf]
      %v259 = vld [vmem:[%s127 + $0x1ec] sm:$0xf]
      %v260 = vld [vmem:[%s127 + $0x1f0] sm:$0xf]
      %v261 = vld [vmem:[%s127 + $0x1f4] sm:$0xf]
      %v262 = vld [vmem:[%s127 + $0x1f8] sm:$0xf]
      %v263 = vld [vmem:[%s127 + $0x1fc] sm:$0xf]
      %v264 = vunpack.c.l.bf16 %v136
      %v265 = vunpack.c.l.bf16 %v137
      %v266 = vunpack.c.l.bf16 %v138
      %v267 = vunpack.c.l.bf16 %v139
      %v268 = vunpack.c.l.bf16 %v140
      %v269 = vunpack.c.l.bf16 %v141
      %v270 = vunpack.c.l.bf16 %v142
      %v271 = vunpack.c.l.bf16 %v143
      %v272 = vunpack.c.l.bf16 %v144
      %v273 = vunpack.c.l.bf16 %v145
      %v274 = vunpack.c.l.bf16 %v146
      %v275 = vunpack.c.l.bf16 %v147
      %v276 = vunpack.c.l.bf16 %v148
      %v277 = vunpack.c.l.bf16 %v149
      %v278 = vunpack.c.l.bf16 %v150
      %v279 = vunpack.c.l.bf16 %v151
      %v280 = vunpack.c.l.bf16 %v152
      %v281 = vunpack.c.l.bf16 %v153
      %v282 = vunpack.c.l.bf16 %v154
      %v283 = vunpack.c.l.bf16 %v155
      %v284 = vunpack.c.l.bf16 %v156
      %v285 = vunpack.c.l.bf16 %v157
      %v286 = vunpack.c.l.bf16 %v158
      %v287 = vunpack.c.l.bf16 %v159
      %v288 = vunpack.c.l.bf16 %v160
      %v289 = vunpack.c.l.bf16 %v161
      %v290 = vunpack.c.l.bf16 %v162
      %v291 = vunpack.c.l.bf16 %v163
      %v292 = vunpack.c.l.bf16 %v164
      %v293 = vunpack.c.l.bf16 %v165
      %v294 = vunpack.c.l.bf16 %v166
      %v295 = vunpack.c.l.bf16 %v167
      %v296 = vunpack.c.l.bf16 %v168
      %v297 = vunpack.c.l.bf16 %v169
      %v298 = vunpack.c.l.bf16 %v170
      %v299 = vunpack.c.l.bf16 %v171
      %v300 = vunpack.c.l.bf16 %v172
      %v301 = vunpack.c.l.bf16 %v173
      %v302 = vunpack.c.l.bf16 %v174
      %v303 = vunpack.c.l.bf16 %v175
      %v304 = vunpack.c.l.bf16 %v176
      %v305 = vunpack.c.l.bf16 %v177
      %v306 = vunpack.c.l.bf16 %v178
      %v307 = vunpack.c.l.bf16 %v179
      %v308 = vunpack.c.l.bf16 %v180
      %v309 = vunpack.c.l.bf16 %v181
      %v310 = vunpack.c.l.bf16 %v182
      %v311 = vunpack.c.l.bf16 %v183
      %v312 = vunpack.c.l.bf16 %v184
      %v313 = vunpack.c.l.bf16 %v185
      %v314 = vunpack.c.l.bf16 %v186
      %v315 = vunpack.c.l.bf16 %v187
      %v316 = vunpack.c.l.bf16 %v188
      %v317 = vunpack.c.l.bf16 %v189
      %v318 = vunpack.c.l.bf16 %v190
      %v319 = vunpack.c.l.bf16 %v191
      %v320 = vunpack.c.l.bf16 %v192
      %v321 = vunpack.c.l.bf16 %v193
      %v322 = vunpack.c.l.bf16 %v194
      %v323 = vunpack.c.l.bf16 %v195
      %v324 = vunpack.c.l.bf16 %v196
      %v325 = vunpack.c.l.bf16 %v197
      %v326 = vunpack.c.l.bf16 %v198
      %v327 = vunpack.c.l.bf16 %v199
      %v328 = vunpack.c.l.bf16 %v200
      %v329 = vunpack.c.l.bf16 %v201
      %v330 = vunpack.c.l.bf16 %v202
      %v331 = vunpack.c.l.bf16 %v203
      %v332 = vunpack.c.l.bf16 %v204
      %v333 = vunpack.c.l.bf16 %v205
      %v334 = vunpack.c.l.bf16 %v206
      %v335 = vunpack.c.l.bf16 %v207
      %v336 = vunpack.c.l.bf16 %v208
      %v337 = vunpack.c.l.bf16 %v209
      %v338 = vunpack.c.l.bf16 %v210
      %v339 = vunpack.c.l.bf16 %v211
      %v340 = vunpack.c.l.bf16 %v212
      %v341 = vunpack.c.l.bf16 %v213
      %v342 = vunpack.c.l.bf16 %v214
      %v343 = vunpack.c.l.bf16 %v215
      %v344 = vunpack.c.l.bf16 %v216
      %v345 = vunpack.c.l.bf16 %v217
      %v346 = vunpack.c.l.bf16 %v218
      %v347 = vunpack.c.l.bf16 %v219
      %v348 = vunpack.c.l.bf16 %v220
      %v349 = vunpack.c.l.bf16 %v221
      %v350 = vunpack.c.l.bf16 %v222
      %v351 = vunpack.c.l.bf16 %v223
      %v352 = vunpack.c.l.bf16 %v224
      %v353 = vunpack.c.l.bf16 %v225
      %v354 = vunpack.c.l.bf16 %v226
      %v355 = vunpack.c.l.bf16 %v227
      %v356 = vunpack.c.l.bf16 %v228
      %v357 = vunpack.c.l.bf16 %v229
      %v358 = vunpack.c.l.bf16 %v230
      %v359 = vunpack.c.l.bf16 %v231
      %v360 = vunpack.c.l.bf16 %v232
      %v361 = vunpack.c.l.bf16 %v233
      %v362 = vunpack.c.l.bf16 %v234
      %v363 = vunpack.c.l.bf16 %v235
      %v364 = vunpack.c.l.bf16 %v236
      %v365 = vunpack.c.l.bf16 %v237
      %v366 = vunpack.c.l.bf16 %v238
      %v367 = vunpack.c.l.bf16 %v239
      %v368 = vunpack.c.l.bf16 %v240
      %v369 = vunpack.c.l.bf16 %v241
      %v370 = vunpack.c.l.bf16 %v242
      %v371 = vunpack.c.l.bf16 %v243
      %v372 = vunpack.c.l.bf16 %v244
      %v373 = vunpack.c.l.bf16 %v245
      %v374 = vunpack.c.l.bf16 %v246
      %v375 = vunpack.c.l.bf16 %v247
      %v376 = vunpack.c.l.bf16 %v248
      %v377 = vunpack.c.l.bf16 %v249
      %v378 = vunpack.c.l.bf16 %v250
      %v379 = vunpack.c.l.bf16 %v251
      %v380 = vunpack.c.l.bf16 %v252
      %v381 = vunpack.c.l.bf16 %v253
      %v382 = vunpack.c.l.bf16 %v254
      %v383 = vunpack.c.l.bf16 %v255
      %v384 = vunpack.c.l.bf16 %v256
      %v385 = vunpack.c.l.bf16 %v257
      %v386 = vunpack.c.l.bf16 %v258
      %v387 = vunpack.c.l.bf16 %v259
      %v388 = vunpack.c.l.bf16 %v260
      %v389 = vunpack.c.l.bf16 %v261
      %v390 = vunpack.c.l.bf16 %v262
      %v391 = vunpack.c.l.bf16 %v263
      %v392 = vld [vmem:[#allocation2] sm:$0x1]
      %vm393 = vcmask 64512
      %v394 = vsel %vm393, %v264, 0.0
      %v395 = vsel %vm393, %v265, 0.0
      %v396 = vadd.f32 %v394, %v395
      %v397 = vsel %vm393, %v266, 0.0
      %v398 = vadd.f32 %v396, %v397
      %v399 = vsel %vm393, %v267, 0.0
      %v400 = vadd.f32 %v398, %v399
      %v401 = vsel %vm393, %v268, 0.0
      %v402 = vadd.f32 %v400, %v401
      %v403 = vsel %vm393, %v269, 0.0
      %v404 = vadd.f32 %v402, %v403
      %v405 = vsel %vm393, %v270, 0.0
      %v406 = vadd.f32 %v404, %v405
      %v407 = vsel %vm393, %v271, 0.0
      %v408 = vadd.f32 %v406, %v407
      %v409 = vsel %vm393, %v272, 0.0
      %v410 = vadd.f32 %v408, %v409
      %v411 = vsel %vm393, %v273, 0.0
      %v412 = vadd.f32 %v410, %v411
      %v413 = vsel %vm393, %v274, 0.0
      %v414 = vadd.f32 %v412, %v413
      %v415 = vsel %vm393, %v275, 0.0
      %v416 = vadd.f32 %v414, %v415
      %v417 = vsel %vm393, %v276, 0.0
      %v418 = vadd.f32 %v416, %v417
      %v419 = vsel %vm393, %v277, 0.0
      %v420 = vadd.f32 %v418, %v419
      %v421 = vsel %vm393, %v278, 0.0
      %v422 = vadd.f32 %v420, %v421
      %v423 = vsel %vm393, %v279, 0.0
      %v424 = vadd.f32 %v422, %v423
      %v425 = vsel %vm393, %v280, 0.0
      %v426 = vadd.f32 %v424, %v425
      %v427 = vsel %vm393, %v281, 0.0
      %v428 = vadd.f32 %v426, %v427
      %v429 = vsel %vm393, %v282, 0.0
      %v430 = vadd.f32 %v428, %v429
      %v431 = vsel %vm393, %v283, 0.0
      %v432 = vadd.f32 %v430, %v431
      %v433 = vsel %vm393, %v284, 0.0
      %v434 = vadd.f32 %v432, %v433
      %v435 = vsel %vm393, %v285, 0.0
      %v436 = vadd.f32 %v434, %v435
      %v437 = vsel %vm393, %v286, 0.0
      %v438 = vadd.f32 %v436, %v437
      %v439 = vsel %vm393, %v287, 0.0
      %v440 = vadd.f32 %v438, %v439
      %v441 = vsel %vm393, %v288, 0.0
      %v442 = vadd.f32 %v440, %v441
      %v443 = vsel %vm393, %v289, 0.0
      %v444 = vadd.f32 %v442, %v443
      %v445 = vsel %vm393, %v290, 0.0
      %v446 = vadd.f32 %v444, %v445
      %v447 = vsel %vm393, %v291, 0.0
      %v448 = vadd.f32 %v446, %v447
      %v449 = vsel %vm393, %v292, 0.0
      %v450 = vadd.f32 %v448, %v449
      %v451 = vsel %vm393, %v293, 0.0
      %v452 = vadd.f32 %v450, %v451
      %v453 = vsel %vm393, %v294, 0.0
      %v454 = vadd.f32 %v452, %v453
      %v455 = vsel %vm393, %v295, 0.0
      %v456 = vadd.f32 %v454, %v455
      %v457 = vsel %vm393, %v296, 0.0
      %v458 = vadd.f32 %v456, %v457
      %v459 = vsel %vm393, %v297, 0.0
      %v460 = vadd.f32 %v458, %v459
      %v461 = vsel %vm393, %v298, 0.0
      %v462 = vadd.f32 %v460, %v461
      %v463 = vsel %vm393, %v299, 0.0
      %v464 = vadd.f32 %v462, %v463
      %v465 = vsel %vm393, %v300, 0.0
      %v466 = vadd.f32 %v464, %v465
      %v467 = vsel %vm393, %v301, 0.0
      %v468 = vadd.f32 %v466, %v467
      %v469 = vsel %vm393, %v302, 0.0
      %v470 = vadd.f32 %v468, %v469
      %v471 = vsel %vm393, %v303, 0.0
      %v472 = vadd.f32 %v470, %v471
      %v473 = vsel %vm393, %v304, 0.0
      %v474 = vadd.f32 %v472, %v473
      %v475 = vsel %vm393, %v305, 0.0
      %v476 = vadd.f32 %v474, %v475
      %v477 = vsel %vm393, %v306, 0.0
      %v478 = vadd.f32 %v476, %v477
      %v479 = vsel %vm393, %v307, 0.0
      %v480 = vadd.f32 %v478, %v479
      %v481 = vsel %vm393, %v308, 0.0
      %v482 = vadd.f32 %v480, %v481
      %v483 = vsel %vm393, %v309, 0.0
      %v484 = vadd.f32 %v482, %v483
      %v485 = vsel %vm393, %v310, 0.0
      %v486 = vadd.f32 %v484, %v485
      %v487 = vsel %vm393, %v311, 0.0
      %v488 = vadd.f32 %v486, %v487
      %v489 = vsel %vm393, %v312, 0.0
      %v490 = vadd.f32 %v488, %v489
      %v491 = vsel %vm393, %v313, 0.0
      %v492 = vadd.f32 %v490, %v491
      %v493 = vsel %vm393, %v314, 0.0
      %v494 = vadd.f32 %v492, %v493
      %v495 = vsel %vm393, %v315, 0.0
      %v496 = vadd.f32 %v494, %v495
      %v497 = vsel %vm393, %v316, 0.0
      %v498 = vadd.f32 %v496, %v497
      %v499 = vsel %vm393, %v317, 0.0
      %v500 = vadd.f32 %v498, %v499
      %v501 = vsel %vm393, %v318, 0.0
      %v502 = vadd.f32 %v500, %v501
      %v503 = vsel %vm393, %v319, 0.0
      %v504 = vadd.f32 %v502, %v503
      %v505 = vsel %vm393, %v320, 0.0
      %v506 = vadd.f32 %v504, %v505
      %v507 = vsel %vm393, %v321, 0.0
      %v508 = vadd.f32 %v506, %v507
      %v509 = vsel %vm393, %v322, 0.0
      %v510 = vadd.f32 %v508, %v509
      %v511 = vsel %vm393, %v323, 0.0
      %v512 = vadd.f32 %v510, %v511
      %v513 = vsel %vm393, %v324, 0.0
      %v514 = vadd.f32 %v512, %v513
      %v515 = vsel %vm393, %v325, 0.0
      %v516 = vadd.f32 %v514, %v515
      %v517 = vsel %vm393, %v326, 0.0
      %v518 = vadd.f32 %v516, %v517
      %v519 = vsel %vm393, %v327, 0.0
      %v520 = vadd.f32 %v518, %v519
      %v521 = vsel %vm393, %v328, 0.0
      %v522 = vadd.f32 %v520, %v521
      %v523 = vsel %vm393, %v329, 0.0
      %v524 = vadd.f32 %v522, %v523
      %v525 = vsel %vm393, %v330, 0.0
      %v526 = vadd.f32 %v524, %v525
      %v527 = vsel %vm393, %v331, 0.0
      %v528 = vadd.f32 %v526, %v527
      %v529 = vsel %vm393, %v332, 0.0
      %v530 = vadd.f32 %v528, %v529
      %v531 = vsel %vm393, %v333, 0.0
      %v532 = vadd.f32 %v530, %v531
      %v533 = vsel %vm393, %v334, 0.0
      %v534 = vadd.f32 %v532, %v533
      %v535 = vsel %vm393, %v335, 0.0
      %v536 = vadd.f32 %v534, %v535
      %v537 = vsel %vm393, %v336, 0.0
      %v538 = vadd.f32 %v536, %v537
      %v539 = vsel %vm393, %v337, 0.0
      %v540 = vadd.f32 %v538, %v539
      %v541 = vsel %vm393, %v338, 0.0
      %v542 = vadd.f32 %v540, %v541
      %v543 = vsel %vm393, %v339, 0.0
      %v544 = vadd.f32 %v542, %v543
      %v545 = vsel %vm393, %v340, 0.0
      %v546 = vadd.f32 %v544, %v545
      %v547 = vsel %vm393, %v341, 0.0
      %v548 = vadd.f32 %v546, %v547
      %v549 = vsel %vm393, %v342, 0.0
      %v550 = vadd.f32 %v548, %v549
      %v551 = vsel %vm393, %v343, 0.0
      %v552 = vadd.f32 %v550, %v551
      %v553 = vsel %vm393, %v344, 0.0
      %v554 = vadd.f32 %v552, %v553
      %v555 = vsel %vm393, %v345, 0.0
      %v556 = vadd.f32 %v554, %v555
      %v557 = vsel %vm393, %v346, 0.0
      %v558 = vadd.f32 %v556, %v557
      %v559 = vsel %vm393, %v347, 0.0
      %v560 = vadd.f32 %v558, %v559
      %v561 = vsel %vm393, %v348, 0.0
      %v562 = vadd.f32 %v560, %v561
      %v563 = vsel %vm393, %v349, 0.0
      %v564 = vadd.f32 %v562, %v563
      %v565 = vsel %vm393, %v350, 0.0
      %v566 = vadd.f32 %v564, %v565
      %v567 = vsel %vm393, %v351, 0.0
      %v568 = vadd.f32 %v566, %v567
      %v569 = vsel %vm393, %v352, 0.0
      %v570 = vadd.f32 %v568, %v569
      %v571 = vsel %vm393, %v353, 0.0
      %v572 = vadd.f32 %v570, %v571
      %v573 = vsel %vm393, %v354, 0.0
      %v574 = vadd.f32 %v572, %v573
      %v575 = vsel %vm393, %v355, 0.0
      %v576 = vadd.f32 %v574, %v575
      %v577 = vsel %vm393, %v356, 0.0
      %v578 = vadd.f32 %v576, %v577
      %v579 = vsel %vm393, %v357, 0.0
      %v580 = vadd.f32 %v578, %v579
      %v581 = vsel %vm393, %v358, 0.0
      %v582 = vadd.f32 %v580, %v581
      %v583 = vsel %vm393, %v359, 0.0
      %v584 = vadd.f32 %v582, %v583
      %v585 = vsel %vm393, %v360, 0.0
      %v586 = vadd.f32 %v584, %v585
      %v587 = vsel %vm393, %v361, 0.0
      %v588 = vadd.f32 %v586, %v587
      %v589 = vsel %vm393, %v362, 0.0
      %v590 = vadd.f32 %v588, %v589
      %v591 = vsel %vm393, %v363, 0.0
      %v592 = vadd.f32 %v590, %v591
      %v593 = vsel %vm393, %v364, 0.0
      %v594 = vadd.f32 %v592, %v593
      %v595 = vsel %vm393, %v365, 0.0
      %v596 = vadd.f32 %v594, %v595
      %v597 = vsel %vm393, %v366, 0.0
      %v598 = vadd.f32 %v596, %v597
      %v599 = vsel %vm393, %v367, 0.0
      %v600 = vadd.f32 %v598, %v599
      %v601 = vsel %vm393, %v368, 0.0
      %v602 = vadd.f32 %v600, %v601
      %v603 = vsel %vm393, %v369, 0.0
      %v604 = vadd.f32 %v602, %v603
      %v605 = vsel %vm393, %v370, 0.0
      %v606 = vadd.f32 %v604, %v605
      %v607 = vsel %vm393, %v371, 0.0
      %v608 = vadd.f32 %v606, %v607
      %v609 = vsel %vm393, %v372, 0.0
      %v610 = vadd.f32 %v608, %v609
      %v611 = vsel %vm393, %v373, 0.0
      %v612 = vadd.f32 %v610, %v611
      %v613 = vsel %vm393, %v374, 0.0
      %v614 = vadd.f32 %v612, %v613
      %v615 = vsel %vm393, %v375, 0.0
      %v616 = vadd.f32 %v614, %v615
      %v617 = vsel %vm393, %v376, 0.0
      %v618 = vadd.f32 %v616, %v617
      %v619 = vsel %vm393, %v377, 0.0
      %v620 = vadd.f32 %v618, %v619
      %v621 = vsel %vm393, %v378, 0.0
      %v622 = vadd.f32 %v620, %v621
      %v623 = vsel %vm393, %v379, 0.0
      %v624 = vadd.f32 %v622, %v623
      %v625 = vsel %vm393, %v380, 0.0
      %v626 = vadd.f32 %v624, %v625
      %v627 = vsel %vm393, %v381, 0.0
      %v628 = vadd.f32 %v626, %v627
      %v629 = vsel %vm393, %v382, 0.0
      %v630 = vadd.f32 %v628, %v629
      %v631 = vsel %vm393, %v383, 0.0
      %v632 = vadd.f32 %v630, %v631
      %v633 = vsel %vm393, %v384, 0.0
      %v634 = vadd.f32 %v632, %v633
      %v635 = vsel %vm393, %v385, 0.0
      %v636 = vadd.f32 %v634, %v635
      %v637 = vsel %vm393, %v386, 0.0
      %v638 = vadd.f32 %v636, %v637
      %v639 = vsel %vm393, %v387, 0.0
      %v640 = vadd.f32 %v638, %v639
      %v641 = vsel %vm393, %v388, 0.0
      %v642 = vadd.f32 %v640, %v641
      %v643 = vsel %vm393, %v389, 0.0
      %v644 = vadd.f32 %v642, %v643
      %v645 = vsel %vm393, %v390, 0.0
      %v646 = vadd.f32 %v644, %v645
      %v647 = vsel %vm393, %v391, 0.0
      %v648 = vadd.f32 %v646, %v647
      %v649 = vrot.slane %v648, 4
      %v650 = vadd.f32 %v648, %v649
      %v651 = vrot.slane %v650, 2
      %v652 = vadd.f32 %v650, %v651
      %v653 = vrot.slane %v652, 1
      %v654 = vadd.f32 %v652, %v653
      %v655 = vadd.f32 %v392, %v654
      %vm656 = vcmask 57344
      %657 = vst.msk [vmem:[#allocation2] sm:$0x1] %vm656, %v655
      %v658 = vld [vmem:[#allocation3] sm:$0x1]
      %v659 = vmul.f32 %v264, %v264
      %v660 = vmul.f32 %v265, %v265
      %v661 = vmul.f32 %v266, %v266
      %v662 = vmul.f32 %v267, %v267
      %v663 = vmul.f32 %v268, %v268
      %v664 = vmul.f32 %v269, %v269
      %v665 = vmul.f32 %v270, %v270
      %v666 = vmul.f32 %v271, %v271
      %v667 = vmul.f32 %v272, %v272
      %v668 = vmul.f32 %v273, %v273
      %v669 = vmul.f32 %v274, %v274
      %v670 = vmul.f32 %v275, %v275
      %v671 = vmul.f32 %v276, %v276
      %v672 = vmul.f32 %v277, %v277
      %v673 = vmul.f32 %v278, %v278
      %v674 = vmul.f32 %v279, %v279
      %v675 = vmul.f32 %v280, %v280
      %v676 = vmul.f32 %v281, %v281
      %v677 = vmul.f32 %v282, %v282
      %v678 = vmul.f32 %v283, %v283
      %v679 = vmul.f32 %v284, %v284
      %v680 = vmul.f32 %v285, %v285
      %v681 = vmul.f32 %v286, %v286
      %v682 = vmul.f32 %v287, %v287
      %v683 = vmul.f32 %v288, %v288
      %v684 = vmul.f32 %v289, %v289
      %v685 = vmul.f32 %v290, %v290
      %v686 = vmul.f32 %v291, %v291
      %v687 = vmul.f32 %v292, %v292
      %v688 = vmul.f32 %v293, %v293
      %v689 = vmul.f32 %v294, %v294
      %v690 = vmul.f32 %v295, %v295
      %v691 = vmul.f32 %v296, %v296
      %v692 = vmul.f32 %v297, %v297
      %v693 = vmul.f32 %v298, %v298
      %v694 = vmul.f32 %v299, %v299
      %v695 = vmul.f32 %v300, %v300
      %v696 = vmul.f32 %v301, %v301
      %v697 = vmul.f32 %v302, %v302
      %v698 = vmul.f32 %v303, %v303
      %v699 = vmul.f32 %v304, %v304
      %v700 = vmul.f32 %v305, %v305
      %v701 = vmul.f32 %v306, %v306
      %v702 = vmul.f32 %v307, %v307
      %v703 = vmul.f32 %v308, %v308
      %v704 = vmul.f32 %v309, %v309
      %v705 = vmul.f32 %v310, %v310
      %v706 = vmul.f32 %v311, %v311
      %v707 = vmul.f32 %v312, %v312
      %v708 = vmul.f32 %v313, %v313
      %v709 = vmul.f32 %v314, %v314
      %v710 = vmul.f32 %v315, %v315
      %v711 = vmul.f32 %v316, %v316
      %v712 = vmul.f32 %v317, %v317
      %v713 = vmul.f32 %v318, %v318
      %v714 = vmul.f32 %v319, %v319
      %v715 = vmul.f32 %v320, %v320
      %v716 = vmul.f32 %v321, %v321
      %v717 = vmul.f32 %v322, %v322
      %v718 = vmul.f32 %v323, %v323
      %v719 = vmul.f32 %v324, %v324
      %v720 = vmul.f32 %v325, %v325
      %v721 = vmul.f32 %v326, %v326
      %v722 = vmul.f32 %v327, %v327
      %v723 = vmul.f32 %v328, %v328
      %v724 = vmul.f32 %v329, %v329
      %v725 = vmul.f32 %v330, %v330
      %v726 = vmul.f32 %v331, %v331
      %v727 = vmul.f32 %v332, %v332
      %v728 = vmul.f32 %v333, %v333
      %v729 = vmul.f32 %v334, %v334
      %v730 = vmul.f32 %v335, %v335
      %v731 = vmul.f32 %v336, %v336
      %v732 = vmul.f32 %v337, %v337
      %v733 = vmul.f32 %v338, %v338
      %v734 = vmul.f32 %v339, %v339
      %v735 = vmul.f32 %v340, %v340
      %v736 = vmul.f32 %v341, %v341
      %v737 = vmul.f32 %v342, %v342
      %v738 = vmul.f32 %v343, %v343
      %v739 = vmul.f32 %v344, %v344
      %v740 = vmul.f32 %v345, %v345
      %v741 = vmul.f32 %v346, %v346
      %v742 = vmul.f32 %v347, %v347
      %v743 = vmul.f32 %v348, %v348
      %v744 = vmul.f32 %v349, %v349
      %v745 = vmul.f32 %v350, %v350
      %v746 = vmul.f32 %v351, %v351
      %v747 = vmul.f32 %v352, %v352
      %v748 = vmul.f32 %v353, %v353
      %v749 = vmul.f32 %v354, %v354
      %v750 = vmul.f32 %v355, %v355
      %v751 = vmul.f32 %v356, %v356
      %v752 = vmul.f32 %v357, %v357
      %v753 = vmul.f32 %v358, %v358
      %v754 = vmul.f32 %v359, %v359
      %v755 = vmul.f32 %v360, %v360
      %v756 = vmul.f32 %v361, %v361
      %v757 = vmul.f32 %v362, %v362
      %v758 = vmul.f32 %v363, %v363
      %v759 = vmul.f32 %v364, %v364
      %v760 = vmul.f32 %v365, %v365
      %v761 = vmul.f32 %v366, %v366
      %v762 = vmul.f32 %v367, %v367
      %v763 = vmul.f32 %v368, %v368
      %v764 = vmul.f32 %v369, %v369
      %v765 = vmul.f32 %v370, %v370
      %v766 = vmul.f32 %v371, %v371
      %v767 = vmul.f32 %v372, %v372
      %v768 = vmul.f32 %v373, %v373
      %v769 = vmul.f32 %v374, %v374
      %v770 = vmul.f32 %v375, %v375
      %v771 = vmul.f32 %v376, %v376
      %v772 = vmul.f32 %v377, %v377
      %v773 = vmul.f32 %v378, %v378
      %v774 = vmul.f32 %v379, %v379
      %v775 = vmul.f32 %v380, %v380
      %v776 = vmul.f32 %v381, %v381
      %v777 = vmul.f32 %v382, %v382
      %v778 = vmul.f32 %v383, %v383
      %v779 = vmul.f32 %v384, %v384
      %v780 = vmul.f32 %v385, %v385
      %v781 = vmul.f32 %v386, %v386
      %v782 = vmul.f32 %v387, %v387
      %v783 = vmul.f32 %v388, %v388
      %v784 = vmul.f32 %v389, %v389
      %v785 = vmul.f32 %v390, %v390
      %v786 = vmul.f32 %v391, %v391
      %v787 = vsel %vm393, %v659, 0.0
      %v788 = vsel %vm393, %v660, 0.0
      %v789 = vadd.f32 %v787, %v788
      %v790 = vsel %vm393, %v661, 0.0
      %v791 = vadd.f32 %v789, %v790
      %v792 = vsel %vm393, %v662, 0.0
      %v793 = vadd.f32 %v791, %v792
      %v794 = vsel %vm393, %v663, 0.0
      %v795 = vadd.f32 %v793, %v794
      %v796 = vsel %vm393, %v664, 0.0
      %v797 = vadd.f32 %v795, %v796
      %v798 = vsel %vm393, %v665, 0.0
      %v799 = vadd.f32 %v797, %v798
      %v800 = vsel %vm393, %v666, 0.0
      %v801 = vadd.f32 %v799, %v800
      %v802 = vsel %vm393, %v667, 0.0
      %v803 = vadd.f32 %v801, %v802
      %v804 = vsel %vm393, %v668, 0.0
      %v805 = vadd.f32 %v803, %v804
      %v806 = vsel %vm393, %v669, 0.0
      %v807 = vadd.f32 %v805, %v806
      %v808 = vsel %vm393, %v670, 0.0
      %v809 = vadd.f32 %v807, %v808
      %v810 = vsel %vm393, %v671, 0.0
      %v811 = vadd.f32 %v809, %v810
      %v812 = vsel %vm393, %v672, 0.0
      %v813 = vadd.f32 %v811, %v812
      %v814 = vsel %vm393, %v673, 0.0
      %v815 = vadd.f32 %v813, %v814
      %v816 = vsel %vm393, %v674, 0.0
      %v817 = vadd.f32 %v815, %v816
      %v818 = vsel %vm393, %v675, 0.0
      %v819 = vadd.f32 %v817, %v818
      %v820 = vsel %vm393, %v676, 0.0
      %v821 = vadd.f32 %v819, %v820
      %v822 = vsel %vm393, %v677, 0.0
      %v823 = vadd.f32 %v821, %v822
      %v824 = vsel %vm393, %v678, 0.0
      %v825 = vadd.f32 %v823, %v824
      %v826 = vsel %vm393, %v679, 0.0
      %v827 = vadd.f32 %v825, %v826
      %v828 = vsel %vm393, %v680, 0.0
      %v829 = vadd.f32 %v827, %v828
      %v830 = vsel %vm393, %v681, 0.0
      %v831 = vadd.f32 %v829, %v830
      %v832 = vsel %vm393, %v682, 0.0
      %v833 = vadd.f32 %v831, %v832
      %v834 = vsel %vm393, %v683, 0.0
      %v835 = vadd.f32 %v833, %v834
      %v836 = vsel %vm393, %v684, 0.0
      %v837 = vadd.f32 %v835, %v836
      %v838 = vsel %vm393, %v685, 0.0
      %v839 = vadd.f32 %v837, %v838
      %v840 = vsel %vm393, %v686, 0.0
      %v841 = vadd.f32 %v839, %v840
      %v842 = vsel %vm393, %v687, 0.0
      %v843 = vadd.f32 %v841, %v842
      %v844 = vsel %vm393, %v688, 0.0
      %v845 = vadd.f32 %v843, %v844
      %v846 = vsel %vm393, %v689, 0.0
      %v847 = vadd.f32 %v845, %v846
      %v848 = vsel %vm393, %v690, 0.0
      %v849 = vadd.f32 %v847, %v848
      %v850 = vsel %vm393, %v691, 0.0
      %v851 = vadd.f32 %v849, %v850
      %v852 = vsel %vm393, %v692, 0.0
      %v853 = vadd.f32 %v851, %v852
      %v854 = vsel %vm393, %v693, 0.0
      %v855 = vadd.f32 %v853, %v854
      %v856 = vsel %vm393, %v694, 0.0
      %v857 = vadd.f32 %v855, %v856
      %v858 = vsel %vm393, %v695, 0.0
      %v859 = vadd.f32 %v857, %v858
      %v860 = vsel %vm393, %v696, 0.0
      %v861 = vadd.f32 %v859, %v860
      %v862 = vsel %vm393, %v697, 0.0
      %v863 = vadd.f32 %v861, %v862
      %v864 = vsel %vm393, %v698, 0.0
      %v865 = vadd.f32 %v863, %v864
      %v866 = vsel %vm393, %v699, 0.0
      %v867 = vadd.f32 %v865, %v866
      %v868 = vsel %vm393, %v700, 0.0
      %v869 = vadd.f32 %v867, %v868
      %v870 = vsel %vm393, %v701, 0.0
      %v871 = vadd.f32 %v869, %v870
      %v872 = vsel %vm393, %v702, 0.0
      %v873 = vadd.f32 %v871, %v872
      %v874 = vsel %vm393, %v703, 0.0
      %v875 = vadd.f32 %v873, %v874
      %v876 = vsel %vm393, %v704, 0.0
      %v877 = vadd.f32 %v875, %v876
      %v878 = vsel %vm393, %v705, 0.0
      %v879 = vadd.f32 %v877, %v878
      %v880 = vsel %vm393, %v706, 0.0
      %v881 = vadd.f32 %v879, %v880
      %v882 = vsel %vm393, %v707, 0.0
      %v883 = vadd.f32 %v881, %v882
      %v884 = vsel %vm393, %v708, 0.0
      %v885 = vadd.f32 %v883, %v884
      %v886 = vsel %vm393, %v709, 0.0
      %v887 = vadd.f32 %v885, %v886
      %v888 = vsel %vm393, %v710, 0.0
      %v889 = vadd.f32 %v887, %v888
      %v890 = vsel %vm393, %v711, 0.0
      %v891 = vadd.f32 %v889, %v890
      %v892 = vsel %vm393, %v712, 0.0
      %v893 = vadd.f32 %v891, %v892
      %v894 = vsel %vm393, %v713, 0.0
      %v895 = vadd.f32 %v893, %v894
      %v896 = vsel %vm393, %v714, 0.0
      %v897 = vadd.f32 %v895, %v896
      %v898 = vsel %vm393, %v715, 0.0
      %v899 = vadd.f32 %v897, %v898
      %v900 = vsel %vm393, %v716, 0.0
      %v901 = vadd.f32 %v899, %v900
      %v902 = vsel %vm393, %v717, 0.0
      %v903 = vadd.f32 %v901, %v902
      %v904 = vsel %vm393, %v718, 0.0
      %v905 = vadd.f32 %v903, %v904
      %v906 = vsel %vm393, %v719, 0.0
      %v907 = vadd.f32 %v905, %v906
      %v908 = vsel %vm393, %v720, 0.0
      %v909 = vadd.f32 %v907, %v908
      %v910 = vsel %vm393, %v721, 0.0
      %v911 = vadd.f32 %v909, %v910
      %v912 = vsel %vm393, %v722, 0.0
      %v913 = vadd.f32 %v911, %v912
      %v914 = vsel %vm393, %v723, 0.0
      %v915 = vadd.f32 %v913, %v914
      %v916 = vsel %vm393, %v724, 0.0
      %v917 = vadd.f32 %v915, %v916
      %v918 = vsel %vm393, %v725, 0.0
      %v919 = vadd.f32 %v917, %v918
      %v920 = vsel %vm393, %v726, 0.0
      %v921 = vadd.f32 %v919, %v920
      %v922 = vsel %vm393, %v727, 0.0
      %v923 = vadd.f32 %v921, %v922
      %v924 = vsel %vm393, %v728, 0.0
      %v925 = vadd.f32 %v923, %v924
      %v926 = vsel %vm393, %v729, 0.0
      %v927 = vadd.f32 %v925, %v926
      %v928 = vsel %vm393, %v730, 0.0
      %v929 = vadd.f32 %v927, %v928
      %v930 = vsel %vm393, %v731, 0.0
      %v931 = vadd.f32 %v929, %v930
      %v932 = vsel %vm393, %v732, 0.0
      %v933 = vadd.f32 %v931, %v932
      %v934 = vsel %vm393, %v733, 0.0
      %v935 = vadd.f32 %v933, %v934
      %v936 = vsel %vm393, %v734, 0.0
      %v937 = vadd.f32 %v935, %v936
      %v938 = vsel %vm393, %v735, 0.0
      %v939 = vadd.f32 %v937, %v938
      %v940 = vsel %vm393, %v736, 0.0
      %v941 = vadd.f32 %v939, %v940
      %v942 = vsel %vm393, %v737, 0.0
      %v943 = vadd.f32 %v941, %v942
      %v944 = vsel %vm393, %v738, 0.0
      %v945 = vadd.f32 %v943, %v944
      %v946 = vsel %vm393, %v739, 0.0
      %v947 = vadd.f32 %v945, %v946
      %v948 = vsel %vm393, %v740, 0.0
      %v949 = vadd.f32 %v947, %v948
      %v950 = vsel %vm393, %v741, 0.0
      %v951 = vadd.f32 %v949, %v950
      %v952 = vsel %vm393, %v742, 0.0
      %v953 = vadd.f32 %v951, %v952
      %v954 = vsel %vm393, %v743, 0.0
      %v955 = vadd.f32 %v953, %v954
      %v956 = vsel %vm393, %v744, 0.0
      %v957 = vadd.f32 %v955, %v956
      %v958 = vsel %vm393, %v745, 0.0
      %v959 = vadd.f32 %v957, %v958
      %v960 = vsel %vm393, %v746, 0.0
      %v961 = vadd.f32 %v959, %v960
      %v962 = vsel %vm393, %v747, 0.0
      %v963 = vadd.f32 %v961, %v962
      %v964 = vsel %vm393, %v748, 0.0
      %v965 = vadd.f32 %v963, %v964
      %v966 = vsel %vm393, %v749, 0.0
      %v967 = vadd.f32 %v965, %v966
      %v968 = vsel %vm393, %v750, 0.0
      %v969 = vadd.f32 %v967, %v968
      %v970 = vsel %vm393, %v751, 0.0
      %v971 = vadd.f32 %v969, %v970
      %v972 = vsel %vm393, %v752, 0.0
      %v973 = vadd.f32 %v971, %v972
      %v974 = vsel %vm393, %v753, 0.0
      %v975 = vadd.f32 %v973, %v974
      %v976 = vsel %vm393, %v754, 0.0
      %v977 = vadd.f32 %v975, %v976
      %v978 = vsel %vm393, %v755, 0.0
      %v979 = vadd.f32 %v977, %v978
      %v980 = vsel %vm393, %v756, 0.0
      %v981 = vadd.f32 %v979, %v980
      %v982 = vsel %vm393, %v757, 0.0
      %v983 = vadd.f32 %v981, %v982
      %v984 = vsel %vm393, %v758, 0.0
      %v985 = vadd.f32 %v983, %v984
      %v986 = vsel %vm393, %v759, 0.0
      %v987 = vadd.f32 %v985, %v986
      %v988 = vsel %vm393, %v760, 0.0
      %v989 = vadd.f32 %v987, %v988
      %v990 = vsel %vm393, %v761, 0.0
      %v991 = vadd.f32 %v989, %v990
      %v992 = vsel %vm393, %v762, 0.0
      %v993 = vadd.f32 %v991, %v992
      %v994 = vsel %vm393, %v763, 0.0
      %v995 = vadd.f32 %v993, %v994
      %v996 = vsel %vm393, %v764, 0.0
      %v997 = vadd.f32 %v995, %v996
      %v998 = vsel %vm393, %v765, 0.0
      %v999 = vadd.f32 %v997, %v998
      %v1000 = vsel %vm393, %v766, 0.0
      %v1001 = vadd.f32 %v999, %v1000
      %v1002 = vsel %vm393, %v767, 0.0
      %v1003 = vadd.f32 %v1001, %v1002
      %v1004 = vsel %vm393, %v768, 0.0
      %v1005 = vadd.f32 %v1003, %v1004
      %v1006 = vsel %vm393, %v769, 0.0
      %v1007 = vadd.f32 %v1005, %v1006
      %v1008 = vsel %vm393, %v770, 0.0
      %v1009 = vadd.f32 %v1007, %v1008
      %v1010 = vsel %vm393, %v771, 0.0
      %v1011 = vadd.f32 %v1009, %v1010
      %v1012 = vsel %vm393, %v772, 0.0
      %v1013 = vadd.f32 %v1011, %v1012
      %v1014 = vsel %vm393, %v773, 0.0
      %v1015 = vadd.f32 %v1013, %v1014
      %v1016 = vsel %vm393, %v774, 0.0
      %v1017 = vadd.f32 %v1015, %v1016
      %v1018 = vsel %vm393, %v775, 0.0
      %v1019 = vadd.f32 %v1017, %v1018
      %v1020 = vsel %vm393, %v776, 0.0
      %v1021 = vadd.f32 %v1019, %v1020
      %v1022 = vsel %vm393, %v777, 0.0
      %v1023 = vadd.f32 %v1021, %v1022
      %v1024 = vsel %vm393, %v778, 0.0
      %v1025 = vadd.f32 %v1023, %v1024
      %v1026 = vsel %vm393, %v779, 0.0
      %v1027 = vadd.f32 %v1025, %v1026
      %v1028 = vsel %vm393, %v780, 0.0
      %v1029 = vadd.f32 %v1027, %v1028
      %v1030 = vsel %vm393, %v781, 0.0
      %v1031 = vadd.f32 %v1029, %v1030
      %v1032 = vsel %vm393, %v782, 0.0
      %v1033 = vadd.f32 %v1031, %v1032
      %v1034 = vsel %vm393, %v783, 0.0
      %v1035 = vadd.f32 %v1033, %v1034
      %v1036 = vsel %vm393, %v784, 0.0
      %v1037 = vadd.f32 %v1035, %v1036
      %v1038 = vsel %vm393, %v785, 0.0
      %v1039 = vadd.f32 %v1037, %v1038
      %v1040 = vsel %vm393, %v786, 0.0
      %v1041 = vadd.f32 %v1039, %v1040
      %v1042 = vrot.slane %v1041, 4
      %v1043 = vadd.f32 %v1041, %v1042
      %v1044 = vrot.slane %v1043, 2
      %v1045 = vadd.f32 %v1043, %v1044
      %v1046 = vrot.slane %v1045, 1
      %v1047 = vadd.f32 %v1045, %v1046
      %v1048 = vadd.f32 %v658, %v1047
      %1049 = vst.msk [vmem:[#allocation3] sm:$0x1] %vm656, %v1048
      %p1050 = scmp.eq.s32.totalorder %s14, 1
      // Predicated region
      $region29: #{generator_forward.17} parent=23 // pred_check
        %p1051 = pneg %p1050
      $region30: #{generator_forward.17} parent=23 // pred_check_branch
        %1053 = sbr.rel (%p1051) target = $region32
      $region31: #{generator_forward.17} parent=23 // pred_region
        %v1054 = vld [vmem:[#allocation2] sm:$0x1]
        %1055 = vst.msk [vmem:[%s1] sm:$0x1] %vm656, %v1054
        %v1056 = vld [vmem:[#allocation3] sm:$0x1]
        %1057 = vst.msk [vmem:[%s2] sm:$0x1] %vm656, %v1056
      $region32: #{generator_forward.17} parent=23 // pred_fallthru
        _
      // Predicated region
      $region33: #{generator_forward.17} parent=23 // pred_check
        %p1058 = pneg %p53
      $region34: #{generator_forward.17} parent=23 // pred_check_branch
        %1060 = sbr.rel (%p1058) target = $region36
      $region35: #{generator_forward.17} parent=23 // pred_region
        _
      $region36: #{generator_forward.17} parent=23 // pred_fallthru
        _
      // Predicated region
      $region37: #{generator_forward.17} parent=23 // pred_check
        %p1061 = pneg %p74
      $region38: #{generator_forward.17} parent=23 // pred_check_branch
        %1063 = sbr.rel (%p1061) target = $region40
      $region39: #{generator_forward.17} parent=23 // pred_region
        _
      $region40: #{generator_forward.17} parent=23 // pred_fallthru
        _
      // Predicated region
      $region41: #{generator_forward.17} parent=23 // pred_check
        %p1064 = pneg %p53
      $region42: #{generator_forward.17} parent=23 // pred_check_branch
        %1066 = sbr.rel (%p1064) target = $region44
      $region43: #{generator_forward.17} parent=23 // pred_region
        _
      $region44: #{generator_forward.17} parent=23 // pred_fallthru
        _
      // Predicated region
      $region45: #{generator_forward.17} parent=23 // pred_check
        %p1067 = pneg %p74
      $region46: #{generator_forward.17} parent=23 // pred_check_branch
        %1069 = sbr.rel (%p1067) target = $region48
      $region47: #{generator_forward.17} parent=23 // pred_region
        _
      $region48: #{generator_forward.17} parent=23 // pred_fallthru
        _
    $region24: #{generator_forward.17} parent=5 // pred_fallthru
      _
    %p1070 = scmp.le.s32.totalorder 2, %s9
    // Predicated region
    $region49: #{generator_forward.17} parent=5 // pred_check
      %p1071 = pneg %p1070
    $region50: #{generator_forward.17} parent=5 // pred_check_branch
      %1073 = sbr.rel (%p1071) target = $region52
    $region51: #{generator_forward.17} parent=5 // pred_region
      %s1074 = ssub.s32 %s9, 2
    $region52: #{generator_forward.17} parent=5 // pred_fallthru
      _
  $region6: #{generator_forward.17} parent=0 // loop_footer
    %s13 = sadd.s32 1, %s9
  $region7: #{generator_forward.17} parent=0 // loop_footer_branch
    %8 = sbr.rel target = $region3
  $region8: #{generator_forward.17} parent=0 // loop_exit
    _

// kernel: generator_forward.18
$region0: #{generator_forward.18}
  #allocation0 [shape = 'u32[]', space=smem, size = 0x4, offset = 0x4, fixed_abs, tag = 'smem constant byte address 0x4 - core index']
  #allocation1 [shape = 'u32[144,128]{1,0:T(1,128)}', space=vmem, size = 0x12000, scoped, tag = 'internal scratch']
  %s0 = inlined_call_operand.vmem [shape: bf16[2048,8], index: 0, kind: input, shape index: {}]
  %s1 = inlined_call_operand.vmem [shape: f32[1,8], index: 1, kind: input, shape index: {}]
  %s2 = inlined_call_operand.vmem [shape: f32[1,8], index: 2, kind: input, shape index: {}]
  %s3 = inlined_call_operand.vmem [shape: bf16[8,128], index: 3, kind: input, shape index: {}]
  %s4 = inlined_call_operand.vmem [shape: bf16[2048,128], index: 4, kind: output, shape index: {}]
  %s5 = sld [smem:[#allocation0]]
  $region49: #{generator_forward.18} parent=0
    _
  %s7 = ssub.s32 1, %s5
  %s8 = scalar_select 0, %s7, %s5
  loop: start=0, step=1, limit=6
  $region2: #{generator_forward.18} parent=0 // loop_pre_header
    _
  $region3: #{generator_forward.18} parent=0 // loop_header
    %s10 = sphi 0, %s14
    %p11 = scmp.ge.s32.totalorder %s10, 6
    %s20 = sphi 0, %s22
    %s23 = sphi 0, %s20
    %s24 = sphi 0, %s23
    %s40 = sphi 0, %s24
    %s44 = sphi 0, %s44
    %s46 = sphi 0, %s44
    %s47 = sphi 0, %s46
    %s61 = sphi 0, %s47
    %s65 = sphi 0, %s65
    %s67 = sphi 0, %s65
    %s68 = sphi 0, %s67
    %s82 = sphi 0, %s68
    %s86 = sphi 0, %s86
    %s88 = sphi 0, %s86
    %s89 = sphi 0, %s88
    %s103 = sphi 0, %s89
    %s109 = sphi 0, %s111
    %s112 = sphi 0, %s109
    %s113 = sphi 0, %s112
    %s129 = sphi 0, %s113
  $region4: #{generator_forward.18} parent=0 // loop_header_branch
    %13 = sbr.rel (%p11) target = $region8
  $region5: #{generator_forward.18} parent=0 // loop_body
    %s15 = ssub.s32 %s10, 1
    %s16 = ssub.s32 %s10, 2
    %s17 = sadd.s32 %s10, 1
    %s18 = ssub.s32 %s10, %s17
    %p19 = scmp.eq.s32.totalorder %s18, 0
    %s21 = sadd.s32 %s20, 1
    %s22 = scalar_select %p19, %s20, %s21
    %p25 = pneg %p19
    %p26 = scmp.eq.s32.totalorder %s10, 3
    %p27 = por %p25, %p26
    %p28 = scmp.ne.s32.totalorder %s20, %s23
    %p29 = scmp.eq.s32.totalorder %s10, 0
    %p30 = por %p28, %p29
    %p31 = scmp.ne.s32.totalorder %s20, %s23
    %p32 = scmp.eq.s32.totalorder %s15, 3
    %p33 = por %p31, %p32
    %p34 = scmp.ne.s32.totalorder %s23, %s24
    %p35 = scmp.eq.s32.totalorder %s15, 0
    %p36 = por %p34, %p35
    %p37 = scmp.ne.s32.totalorder %s23, %s24
    %p38 = scmp.eq.s32.totalorder %s16, 3
    %p39 = por %p37, %p38
    %p41 = scmp.ne.s32.totalorder %s24, %s40
    %p42 = scmp.eq.s32.totalorder %s16, 0
    %p43 = por %p41, %p42
    %s45 = sadd.s32 %s44, 1
    %p48 = scmp.eq.s32.totalorder %s10, 3
    %p49 = scmp.ne.s32.totalorder %s44, %s46
    %p50 = scmp.eq.s32.totalorder %s10, 0
    %p51 = por %p49, %p50
    %p52 = scmp.ne.s32.totalorder %s44, %s46
    %p53 = scmp.eq.s32.totalorder %s15, 3
    %p54 = por %p52, %p53
    %p55 = scmp.ne.s32.totalorder %s46, %s47
    %p56 = scmp.eq.s32.totalorder %s15, 0
    %p57 = por %p55, %p56
    %p58 = scmp.ne.s32.totalorder %s46, %s47
    %p59 = scmp.eq.s32.totalorder %s16, 3
    %p60 = por %p58, %p59
    %p62 = scmp.ne.s32.totalorder %s47, %s61
    %p63 = scmp.eq.s32.totalorder %s16, 0
    %p64 = por %p62, %p63
    %s66 = sadd.s32 %s65, 1
    %p69 = scmp.eq.s32.totalorder %s10, 3
    %p70 = scmp.ne.s32.totalorder %s65, %s67
    %p71 = scmp.eq.s32.totalorder %s10, 0
    %p72 = por %p70, %p71
    %p73 = scmp.ne.s32.totalorder %s65, %s67
    %p74 = scmp.eq.s32.totalorder %s15, 3
    %p75 = por %p73, %p74
    %p76 = scmp.ne.s32.totalorder %s67, %s68
    %p77 = scmp.eq.s32.totalorder %s15, 0
    %p78 = por %p76, %p77
    %p79 = scmp.ne.s32.totalorder %s67, %s68
    %p80 = scmp.eq.s32.totalorder %s16, 3
    %p81 = por %p79, %p80
    %p83 = scmp.ne.s32.totalorder %s68, %s82
    %p84 = scmp.eq.s32.totalorder %s16, 0
    %p85 = por %p83, %p84
    %s87 = sadd.s32 %s86, 1
    %p90 = scmp.eq.s32.totalorder %s10, 3
    %p91 = scmp.ne.s32.totalorder %s86, %s88
    %p92 = scmp.eq.s32.totalorder %s10, 0
    %p93 = por %p91, %p92
    %p94 = scmp.ne.s32.totalorder %s86, %s88
    %p95 = scmp.eq.s32.totalorder %s15, 3
    %p96 = por %p94, %p95
    %p97 = scmp.ne.s32.totalorder %s88, %s89
    %p98 = scmp.eq.s32.totalorder %s15, 0
    %p99 = por %p97, %p98
    %p100 = scmp.ne.s32.totalorder %s88, %s89
    %p101 = scmp.eq.s32.totalorder %s16, 3
    %p102 = por %p100, %p101
    %p104 = scmp.ne.s32.totalorder %s89, %s103
    %p105 = scmp.eq.s32.totalorder %s16, 0
    %p106 = por %p104, %p105
    %s107 = ssub.s32 %s10, %s17
    %p108 = scmp.eq.s32.totalorder %s107, 0
    %s110 = sadd.s32 %s109, 1
    %s111 = scalar_select %p108, %s109, %s110
    %p114 = pneg %p108
    %p115 = scmp.eq.s32.totalorder %s10, 3
    %p116 = por %p114, %p115
    %p117 = scmp.ne.s32.totalorder %s109, %s112
    %p118 = scmp.eq.s32.totalorder %s10, 0
    %p119 = por %p117, %p118
    %p120 = scmp.ne.s32.totalorder %s109, %s112
    %p121 = scmp.eq.s32.totalorder %s15, 3
    %p122 = por %p120, %p121
    %p123 = scmp.ne.s32.totalorder %s112, %s113
    %p124 = scmp.eq.s32.totalorder %s15, 0
    %p125 = por %p123, %p124
    %p126 = scmp.ne.s32.totalorder %s112, %s113
    %p127 = scmp.eq.s32.totalorder %s16, 3
    %p128 = por %p126, %p127
    %p130 = scmp.ne.s32.totalorder %s113, %s129
    %p131 = scmp.eq.s32.totalorder %s16, 0
    %p132 = por %p130, %p131
    %p133 = scmp.le.s32.totalorder 1, %s10
    %p134 = scmp.lt.s32.totalorder %s10, 5
    %p135 = pnand %p133, %p134
    %p136 = pneg %p135
    // Predicated region
    $region9: #{generator_forward.18} parent=5 // pred_check
      _
    $region10: #{generator_forward.18} parent=5 // pred_check_branch
      %138 = sbr.rel (%p135) target = $region12
    $region11: #{generator_forward.18} parent=5 // pred_region
      %s139 = ssub.s32 %s10, 1
      // Predicated region
      $region13: #{generator_forward.18} parent=11 // pred_check
        %p140 = pneg %p57
      $region14: #{generator_forward.18} parent=11 // pred_check_branch
        %142 = sbr.rel (%p140) target = $region16
      $region15: #{generator_forward.18} parent=11 // pred_region
        _
      $region16: #{generator_forward.18} parent=11 // pred_fallthru
        _
      // Predicated region
      $region17: #{generator_forward.18} parent=11 // pred_check
        %p143 = pneg %p78
      $region18: #{generator_forward.18} parent=11 // pred_check_branch
        %145 = sbr.rel (%p143) target = $region20
      $region19: #{generator_forward.18} parent=11 // pred_region
        _
      $region20: #{generator_forward.18} parent=11 // pred_fallthru
        _
      // Predicated region
      $region21: #{generator_forward.18} parent=11 // pred_check
        %p146 = pneg %p99
      $region22: #{generator_forward.18} parent=11 // pred_check_branch
        %148 = sbr.rel (%p146) target = $region24
      $region23: #{generator_forward.18} parent=11 // pred_region
        _
      $region24: #{generator_forward.18} parent=11 // pred_fallthru
        _
    $region12: #{generator_forward.18} parent=5 // pred_fallthru
      _
    %p149 = scmp.lt.s32.totalorder %s10, 4
    // Predicated region
    $region25: #{generator_forward.18} parent=5 // pred_check
      %p150 = pneg %p149
    $region26: #{generator_forward.18} parent=5 // pred_check_branch
      %152 = sbr.rel (%p150) target = $region28
    $region27: #{generator_forward.18} parent=5 // pred_region
      // Predicated region
      $region29: #{generator_forward.18} parent=27 // pred_check
        %p153 = pneg %p30
      $region30: #{generator_forward.18} parent=27 // pred_check_branch
        %155 = sbr.rel (%p153) target = $region32
      $region31: #{generator_forward.18} parent=27 // pred_region
        %s156 = smul.u32 64, %s10
        %p157 = scmp.lt.s32.totalorder %s156, 255
        %s158 = scalar_select %p157, %s156, 255
        %s159 = smul.addr %s158, 4
        %s160 = scalar_lea.vmem %s0, %s159
        %s161 = smul.u32 64, %s10
      $region32: #{generator_forward.18} parent=27 // pred_fallthru
        _
    $region28: #{generator_forward.18} parent=5 // pred_fallthru
      _
    %p162 = scmp.le.s32.totalorder 1, %s10
    %p163 = scmp.lt.s32.totalorder %s10, 5
    %p164 = pnand %p162, %p163
    %p165 = pneg %p164
    // Predicated region
    $region33: #{generator_forward.18} parent=5 // pred_check
      _
    $region34: #{generator_forward.18} parent=5 // pred_check_branch
      %167 = sbr.rel (%p164) target = $region36
    $region35: #{generator_forward.18} parent=5 // pred_region
      %s168 = ssub.s32 %s10, 1
      %s169 = smul.u32 64, %s15
      %p170 = scmp.lt.s32.totalorder %s169, 255
      %s171 = scalar_select %p170, %s169, 255
      %s172 = smul.addr %s171, 4
      %s173 = scalar_lea.vmem %s0, %s172
      %p174 = pneg %p36
      %p175 = pneg %p33
      %p176 = pneg %p57
      %p177 = pneg %p54
      %p178 = pneg %p78
      %p179 = pneg %p75
      %p180 = pneg %p99
      %p181 = pneg %p96
      %p182 = pneg %p125
      %p183 = pneg %p122
      %s184 = smul.u32 64, %s15
      %p185 = scmp.lt.s32.totalorder %s184, 255
      %s186 = scalar_select %p185, %s184, 255
      %s187 = smul.addr %s186, 4
      %s188 = scalar_lea.vmem %s4, %s187
      %s189 = smul.u32 64, %s15
      %p190 = scmp.lt.s32.totalorder %s189, 255
      %s191 = scalar_select %p190, %s189, 255
      %s192 = smul.addr %s191, 4
      %s193 = scalar_lea.vmem %s0, %s192
      %s194 = smul.u32 64, %s15
      %s195 = smul.u32 64, %s15
      %p196 = scmp.lt.s32.totalorder %s195, 255
      %s197 = scalar_select %p196, %s195, 255
      %s198 = smul.addr %s197, 4
      %s199 = scalar_lea.vmem %s4, %s198
      %s200 = smul.u32 64, %s15
      %v202 = vld [vmem:[%s193] sm:$0xf]
      %v203 = vld [vmem:[%s193 + $0x4] sm:$0xf]
      %v204 = vld [vmem:[%s193 + $0x8] sm:$0xf]
      %v205 = vld [vmem:[%s193 + $0xc] sm:$0xf]
      %v206 = vld [vmem:[%s193 + $0x10] sm:$0xf]
      %v207 = vld [vmem:[%s193 + $0x14] sm:$0xf]
      %v208 = vld [vmem:[%s193 + $0x18] sm:$0xf]
      %v209 = vld [vmem:[%s193 + $0x1c] sm:$0xf]
      %v210 = vld [vmem:[%s193 + $0x20] sm:$0xf]
      %v211 = vld [vmem:[%s193 + $0x24] sm:$0xf]
      %v212 = vld [vmem:[%s193 + $0x28] sm:$0xf]
      %v213 = vld [vmem:[%s193 + $0x2c] sm:$0xf]
      %v214 = vld [vmem:[%s193 + $0x30] sm:$0xf]
      %v215 = vld [vmem:[%s193 + $0x34] sm:$0xf]
      %v216 = vld [vmem:[%s193 + $0x38] sm:$0xf]
      %v217 = vld [vmem:[%s193 + $0x3c] sm:$0xf]
      %v218 = vld [vmem:[%s193 + $0x40] sm:$0xf]
      %v219 = vld [vmem:[%s193 + $0x44] sm:$0xf]
      %v220 = vld [vmem:[%s193 + $0x48] sm:$0xf]
      %v221 = vld [vmem:[%s193 + $0x4c] sm:$0xf]
      %v222 = vld [vmem:[%s193 + $0x50] sm:$0xf]
      %v223 = vld [vmem:[%s193 + $0x54] sm:$0xf]
      %v224 = vld [vmem:[%s193 + $0x58] sm:$0xf]
      %v225 = vld [vmem:[%s193 + $0x5c] sm:$0xf]
      %v226 = vld [vmem:[%s193 + $0x60] sm:$0xf]
      %v227 = vld [vmem:[%s193 + $0x64] sm:$0xf]
      %v228 = vld [vmem:[%s193 + $0x68] sm:$0xf]
      %v229 = vld [vmem:[%s193 + $0x6c] sm:$0xf]
      %v230 = vld [vmem:[%s193 + $0x70] sm:$0xf]
      %v231 = vld [vmem:[%s193 + $0x74] sm:$0xf]
      %v232 = vld [vmem:[%s193 + $0x78] sm:$0xf]
      %v233 = vld [vmem:[%s193 + $0x7c] sm:$0xf]
      %v234 = vld [vmem:[%s193 + $0x80] sm:$0xf]
      %v235 = vld [vmem:[%s193 + $0x84] sm:$0xf]
      %v236 = vld [vmem:[%s193 + $0x88] sm:$0xf]
      %v237 = vld [vmem:[%s193 + $0x8c] sm:$0xf]
      %v238 = vld [vmem:[%s193 + $0x90] sm:$0xf]
      %v239 = vld [vmem:[%s193 + $0x94] sm:$0xf]
      %v240 = vld [vmem:[%s193 + $0x98] sm:$0xf]
      %v241 = vld [vmem:[%s193 + $0x9c] sm:$0xf]
      %v242 = vld [vmem:[%s193 + $0xa0] sm:$0xf]
      %v243 = vld [vmem:[%s193 + $0xa4] sm:$0xf]
      %v244 = vld [vmem:[%s193 + $0xa8] sm:$0xf]
      %v245 = vld [vmem:[%s193 + $0xac] sm:$0xf]
      %v246 = vld [vmem:[%s193 + $0xb0] sm:$0xf]
      %v247 = vld [vmem:[%s193 + $0xb4] sm:$0xf]
      %v248 = vld [vmem:[%s193 + $0xb8] sm:$0xf]
      %v249 = vld [vmem:[%s193 + $0xbc] sm:$0xf]
      %v250 = vld [vmem:[%s193 + $0xc0] sm:$0xf]
      %v251 = vld [vmem:[%s193 + $0xc4] sm:$0xf]
      %v252 = vld [vmem:[%s193 + $0xc8] sm:$0xf]
      %v253 = vld [vmem:[%s193 + $0xcc] sm:$0xf]
      %v254 = vld [vmem:[%s193 + $0xd0] sm:$0xf]
      %v255 = vld [vmem:[%s193 + $0xd4] sm:$0xf]
      %v256 = vld [vmem:[%s193 + $0xd8] sm:$0xf]
      %v257 = vld [vmem:[%s193 + $0xdc] sm:$0xf]
      %v258 = vld [vmem:[%s193 + $0xe0] sm:$0xf]
      %v259 = vld [vmem:[%s193 + $0xe4] sm:$0xf]
      %v260 = vld [vmem:[%s193 + $0xe8] sm:$0xf]
      %v261 = vld [vmem:[%s193 + $0xec] sm:$0xf]
      %v262 = vld [vmem:[%s193 + $0xf0] sm:$0xf]
      %v263 = vld [vmem:[%s193 + $0xf4] sm:$0xf]
      %v264 = vld [vmem:[%s193 + $0xf8] sm:$0xf]
      %v265 = vld [vmem:[%s193 + $0xfc] sm:$0xf]
      %v266 = vunpack.c.l.bf16 %v202
      %v267 = vunpack.c.l.bf16 %v203
      %v268 = vunpack.c.l.bf16 %v204
      %v269 = vunpack.c.l.bf16 %v205
      %v270 = vunpack.c.l.bf16 %v206
      %v271 = vunpack.c.l.bf16 %v207
      %v272 = vunpack.c.l.bf16 %v208
      %v273 = vunpack.c.l.bf16 %v209
      %v274 = vunpack.c.l.bf16 %v210
      %v275 = vunpack.c.l.bf16 %v211
      %v276 = vunpack.c.l.bf16 %v212
      %v277 = vunpack.c.l.bf16 %v213
      %v278 = vunpack.c.l.bf16 %v214
      %v279 = vunpack.c.l.bf16 %v215
      %v280 = vunpack.c.l.bf16 %v216
      %v281 = vunpack.c.l.bf16 %v217
      %v282 = vunpack.c.l.bf16 %v218
      %v283 = vunpack.c.l.bf16 %v219
      %v284 = vunpack.c.l.bf16 %v220
      %v285 = vunpack.c.l.bf16 %v221
      %v286 = vunpack.c.l.bf16 %v222
      %v287 = vunpack.c.l.bf16 %v223
      %v288 = vunpack.c.l.bf16 %v224
      %v289 = vunpack.c.l.bf16 %v225
      %v290 = vunpack.c.l.bf16 %v226
      %v291 = vunpack.c.l.bf16 %v227
      %v292 = vunpack.c.l.bf16 %v228
      %v293 = vunpack.c.l.bf16 %v229
      %v294 = vunpack.c.l.bf16 %v230
      %v295 = vunpack.c.l.bf16 %v231
      %v296 = vunpack.c.l.bf16 %v232
      %v297 = vunpack.c.l.bf16 %v233
      %v298 = vunpack.c.l.bf16 %v234
      %v299 = vunpack.c.l.bf16 %v235
      %v300 = vunpack.c.l.bf16 %v236
      %v301 = vunpack.c.l.bf16 %v237
      %v302 = vunpack.c.l.bf16 %v238
      %v303 = vunpack.c.l.bf16 %v239
      %v304 = vunpack.c.l.bf16 %v240
      %v305 = vunpack.c.l.bf16 %v241
      %v306 = vunpack.c.l.bf16 %v242
      %v307 = vunpack.c.l.bf16 %v243
      %v308 = vunpack.c.l.bf16 %v244
      %v309 = vunpack.c.l.bf16 %v245
      %v310 = vunpack.c.l.bf16 %v246
      %v311 = vunpack.c.l.bf16 %v247
      %v312 = vunpack.c.l.bf16 %v248
      %v313 = vunpack.c.l.bf16 %v249
      %v314 = vunpack.c.l.bf16 %v250
      %v315 = vunpack.c.l.bf16 %v251
      %v316 = vunpack.c.l.bf16 %v252
      %v317 = vunpack.c.l.bf16 %v253
      %v318 = vunpack.c.l.bf16 %v254
      %v319 = vunpack.c.l.bf16 %v255
      %v320 = vunpack.c.l.bf16 %v256
      %v321 = vunpack.c.l.bf16 %v257
      %v322 = vunpack.c.l.bf16 %v258
      %v323 = vunpack.c.l.bf16 %v259
      %v324 = vunpack.c.l.bf16 %v260
      %v325 = vunpack.c.l.bf16 %v261
      %v326 = vunpack.c.l.bf16 %v262
      %v327 = vunpack.c.l.bf16 %v263
      %v328 = vunpack.c.l.bf16 %v264
      %v329 = vunpack.c.l.bf16 %v265
      %v330 = vld [vmem:[%s1] sm:$0x1]
      %v332 = vlaneseq
      %v333 = vshrl.u32 %v332, 7
      %v334 = vsub.s32 0, %v333
      %v335 = vrot.slane %v330, %v334
      %v337 = vmul.f32 %v266, %v335
      %v338 = vmul.f32 %v267, %v335
      %v339 = vmul.f32 %v268, %v335
      %v340 = vmul.f32 %v269, %v335
      %v341 = vmul.f32 %v270, %v335
      %v342 = vmul.f32 %v271, %v335
      %v343 = vmul.f32 %v272, %v335
      %v344 = vmul.f32 %v273, %v335
      %v345 = vmul.f32 %v274, %v335
      %v346 = vmul.f32 %v275, %v335
      %v347 = vmul.f32 %v276, %v335
      %v348 = vmul.f32 %v277, %v335
      %v349 = vmul.f32 %v278, %v335
      %v350 = vmul.f32 %v279, %v335
      %v351 = vmul.f32 %v280, %v335
      %v352 = vmul.f32 %v281, %v335
      %v353 = vmul.f32 %v282, %v335
      %v354 = vmul.f32 %v283, %v335
      %v355 = vmul.f32 %v284, %v335
      %v356 = vmul.f32 %v285, %v335
      %v357 = vmul.f32 %v286, %v335
      %v358 = vmul.f32 %v287, %v335
      %v359 = vmul.f32 %v288, %v335
      %v360 = vmul.f32 %v289, %v335
      %v361 = vmul.f32 %v290, %v335
      %v362 = vmul.f32 %v291, %v335
      %v363 = vmul.f32 %v292, %v335
      %v364 = vmul.f32 %v293, %v335
      %v365 = vmul.f32 %v294, %v335
      %v366 = vmul.f32 %v295, %v335
      %v367 = vmul.f32 %v296, %v335
      %v368 = vmul.f32 %v297, %v335
      %v369 = vmul.f32 %v298, %v335
      %v370 = vmul.f32 %v299, %v335
      %v371 = vmul.f32 %v300, %v335
      %v372 = vmul.f32 %v301, %v335
      %v373 = vmul.f32 %v302, %v335
      %v374 = vmul.f32 %v303, %v335
      %v375 = vmul.f32 %v304, %v335
      %v376 = vmul.f32 %v305, %v335
      %v377 = vmul.f32 %v306, %v335
      %v378 = vmul.f32 %v307, %v335
      %v379 = vmul.f32 %v308, %v335
      %v380 = vmul.f32 %v309, %v335
      %v381 = vmul.f32 %v310, %v335
      %v382 = vmul.f32 %v311, %v335
      %v383 = vmul.f32 %v312, %v335
      %v384 = vmul.f32 %v313, %v335
      %v385 = vmul.f32 %v314, %v335
      %v386 = vmul.f32 %v315, %v335
      %v387 = vmul.f32 %v316, %v335
      %v388 = vmul.f32 %v317, %v335
      %v389 = vmul.f32 %v318, %v335
      %v390 = vmul.f32 %v319, %v335
      %v391 = vmul.f32 %v320, %v335
      %v392 = vmul.f32 %v321, %v335
      %v393 = vmul.f32 %v322, %v335
      %v394 = vmul.f32 %v323, %v335
      %v395 = vmul.f32 %v324, %v335
      %v396 = vmul.f32 %v325, %v335
      %v397 = vmul.f32 %v326, %v335
      %v398 = vmul.f32 %v327, %v335
      %v399 = vmul.f32 %v328, %v335
      %v400 = vmul.f32 %v329, %v335
      %v401 = vld [vmem:[%s2] sm:$0x1]
      %v403 = vlaneseq
      %v404 = vshrl.u32 %v403, 7
      %v405 = vsub.s32 0, %v404
      %v406 = vrot.slane %v401, %v405
      %v408 = vadd.f32 %v337, %v406
      %v409 = vadd.f32 %v338, %v406
      %v410 = vadd.f32 %v339, %v406
      %v411 = vadd.f32 %v340, %v406
      %v412 = vadd.f32 %v341, %v406
      %v413 = vadd.f32 %v342, %v406
      %v414 = vadd.f32 %v343, %v406
      %v415 = vadd.f32 %v344, %v406
      %v416 = vadd.f32 %v345, %v406
      %v417 = vadd.f32 %v346, %v406
      %v418 = vadd.f32 %v347, %v406
      %v419 = vadd.f32 %v348, %v406
      %v420 = vadd.f32 %v349, %v406
      %v421 = vadd.f32 %v350, %v406
      %v422 = vadd.f32 %v351, %v406
      %v423 = vadd.f32 %v352, %v406
      %v424 = vadd.f32 %v353, %v406
      %v425 = vadd.f32 %v354, %v406
      %v426 = vadd.f32 %v355, %v406
      %v427 = vadd.f32 %v356, %v406
      %v428 = vadd.f32 %v357, %v406
      %v429 = vadd.f32 %v358, %v406
      %v430 = vadd.f32 %v359, %v406
      %v431 = vadd.f32 %v360, %v406
      %v432 = vadd.f32 %v361, %v406
      %v433 = vadd.f32 %v362, %v406
      %v434 = vadd.f32 %v363, %v406
      %v435 = vadd.f32 %v364, %v406
      %v436 = vadd.f32 %v365, %v406
      %v437 = vadd.f32 %v366, %v406
      %v438 = vadd.f32 %v367, %v406
      %v439 = vadd.f32 %v368, %v406
      %v440 = vadd.f32 %v369, %v406
      %v441 = vadd.f32 %v370, %v406
      %v442 = vadd.f32 %v371, %v406
      %v443 = vadd.f32 %v372, %v406
      %v444 = vadd.f32 %v373, %v406
      %v445 = vadd.f32 %v374, %v406
      %v446 = vadd.f32 %v375, %v406
      %v447 = vadd.f32 %v376, %v406
      %v448 = vadd.f32 %v377, %v406
      %v449 = vadd.f32 %v378, %v406
      %v450 = vadd.f32 %v379, %v406
      %v451 = vadd.f32 %v380, %v406
      %v452 = vadd.f32 %v381, %v406
      %v453 = vadd.f32 %v382, %v406
      %v454 = vadd.f32 %v383, %v406
      %v455 = vadd.f32 %v384, %v406
      %v456 = vadd.f32 %v385, %v406
      %v457 = vadd.f32 %v386, %v406
      %v458 = vadd.f32 %v387, %v406
      %v459 = vadd.f32 %v388, %v406
      %v460 = vadd.f32 %v389, %v406
      %v461 = vadd.f32 %v390, %v406
      %v462 = vadd.f32 %v391, %v406
      %v463 = vadd.f32 %v392, %v406
      %v464 = vadd.f32 %v393, %v406
      %v465 = vadd.f32 %v394, %v406
      %v466 = vadd.f32 %v395, %v406
      %v467 = vadd.f32 %v396, %v406
      %v468 = vadd.f32 %v397, %v406
      %v469 = vadd.f32 %v398, %v406
      %v470 = vadd.f32 %v399, %v406
      %v471 = vadd.f32 %v400, %v406
      %v472 = vmax.f32 %v408, 0.0
      %v473 = vmax.f32 %v409, 0.0
      %v474 = vmax.f32 %v410, 0.0
      %v475 = vmax.f32 %v411, 0.0
      %v476 = vmax.f32 %v412, 0.0
      %v477 = vmax.f32 %v413, 0.0
      %v478 = vmax.f32 %v414, 0.0
      %v479 = vmax.f32 %v415, 0.0
      %v480 = vmax.f32 %v416, 0.0
      %v481 = vmax.f32 %v417, 0.0
      %v482 = vmax.f32 %v418, 0.0
      %v483 = vmax.f32 %v419, 0.0
      %v484 = vmax.f32 %v420, 0.0
      %v485 = vmax.f32 %v421, 0.0
      %v486 = vmax.f32 %v422, 0.0
      %v487 = vmax.f32 %v423, 0.0
      %v488 = vmax.f32 %v424, 0.0
      %v489 = vmax.f32 %v425, 0.0
      %v490 = vmax.f32 %v426, 0.0
      %v491 = vmax.f32 %v427, 0.0
      %v492 = vmax.f32 %v428, 0.0
      %v493 = vmax.f32 %v429, 0.0
      %v494 = vmax.f32 %v430, 0.0
      %v495 = vmax.f32 %v431, 0.0
      %v496 = vmax.f32 %v432, 0.0
      %v497 = vmax.f32 %v433, 0.0
      %v498 = vmax.f32 %v434, 0.0
      %v499 = vmax.f32 %v435, 0.0
      %v500 = vmax.f32 %v436, 0.0
      %v501 = vmax.f32 %v437, 0.0
      %v502 = vmax.f32 %v438, 0.0
      %v503 = vmax.f32 %v439, 0.0
      %v504 = vmax.f32 %v440, 0.0
      %v505 = vmax.f32 %v441, 0.0
      %v506 = vmax.f32 %v442, 0.0
      %v507 = vmax.f32 %v443, 0.0
      %v508 = vmax.f32 %v444, 0.0
      %v509 = vmax.f32 %v445, 0.0
      %v510 = vmax.f32 %v446, 0.0
      %v511 = vmax.f32 %v447, 0.0
      %v512 = vmax.f32 %v448, 0.0
      %v513 = vmax.f32 %v449, 0.0
      %v514 = vmax.f32 %v450, 0.0
      %v515 = vmax.f32 %v451, 0.0
      %v516 = vmax.f32 %v452, 0.0
      %v517 = vmax.f32 %v453, 0.0
      %v518 = vmax.f32 %v454, 0.0
      %v519 = vmax.f32 %v455, 0.0
      %v520 = vmax.f32 %v456, 0.0
      %v521 = vmax.f32 %v457, 0.0
      %v522 = vmax.f32 %v458, 0.0
      %v523 = vmax.f32 %v459, 0.0
      %v524 = vmax.f32 %v460, 0.0
      %v525 = vmax.f32 %v461, 0.0
      %v526 = vmax.f32 %v462, 0.0
      %v527 = vmax.f32 %v463, 0.0
      %v528 = vmax.f32 %v464, 0.0
      %v529 = vmax.f32 %v465, 0.0
      %v530 = vmax.f32 %v466, 0.0
      %v531 = vmax.f32 %v467, 0.0
      %v532 = vmax.f32 %v468, 0.0
      %v533 = vmax.f32 %v469, 0.0
      %v534 = vmax.f32 %v470, 0.0
      %v535 = vmax.f32 %v471, 0.0
      %v536 = vpack.c.bf16 %v473, %v472
      %v537 = vpack.c.bf16 %v475, %v474
      %v538 = vpack.c.bf16 %v477, %v476
      %v539 = vpack.c.bf16 %v479, %v478
      %v540 = vpack.c.bf16 %v481, %v480
      %v541 = vpack.c.bf16 %v483, %v482
      %v542 = vpack.c.bf16 %v485, %v484
      %v543 = vpack.c.bf16 %v487, %v486
      %v544 = vpack.c.bf16 %v489, %v488
      %v545 = vpack.c.bf16 %v491, %v490
      %v546 = vpack.c.bf16 %v493, %v492
      %v547 = vpack.c.bf16 %v495, %v494
      %v548 = vpack.c.bf16 %v497, %v496
      %v549 = vpack.c.bf16 %v499, %v498
      %v550 = vpack.c.bf16 %v501, %v500
      %v551 = vpack.c.bf16 %v503, %v502
      %v552 = vpack.c.bf16 %v505, %v504
      %v553 = vpack.c.bf16 %v507, %v506
      %v554 = vpack.c.bf16 %v509, %v508
      %v555 = vpack.c.bf16 %v511, %v510
      %v556 = vpack.c.bf16 %v513, %v512
      %v557 = vpack.c.bf16 %v515, %v514
      %v558 = vpack.c.bf16 %v517, %v516
      %v559 = vpack.c.bf16 %v519, %v518
      %v560 = vpack.c.bf16 %v521, %v520
      %v561 = vpack.c.bf16 %v523, %v522
      %v562 = vpack.c.bf16 %v525, %v524
      %v563 = vpack.c.bf16 %v527, %v526
      %v564 = vpack.c.bf16 %v529, %v528
      %v565 = vpack.c.bf16 %v531, %v530
      %v566 = vpack.c.bf16 %v533, %v532
      %v567 = vpack.c.bf16 %v535, %v534
      %v568 = vld [vmem:[%s3] sm:$0xf]
      %vm569 = vcmask 64512
      %v571 = vsel %vm569, %v536, 0
      %v574 = vsel %vm569, %v537, 0
      %v577 = vsel %vm569, %v538, 0
      %v580 = vsel %vm569, %v539, 0
      %v583 = vsel %vm569, %v540, 0
      %v586 = vsel %vm569, %v541, 0
      %v589 = vsel %vm569, %v542, 0
      %v592 = vsel %vm569, %v543, 0
      %v595 = vsel %vm569, %v544, 0
      %v598 = vsel %vm569, %v545, 0
      %v601 = vsel %vm569, %v546, 0
      %v604 = vsel %vm569, %v547, 0
      %v607 = vsel %vm569, %v548, 0
      %v610 = vsel %vm569, %v549, 0
      %v613 = vsel %vm569, %v550, 0
      %v616 = vsel %vm569, %v551, 0
      %v619 = vsel %vm569, %v552, 0
      %v622 = vsel %vm569, %v553, 0
      %v625 = vsel %vm569, %v554, 0
      %v628 = vsel %vm569, %v555, 0
      %v631 = vsel %vm569, %v556, 0
      %v634 = vsel %vm569, %v557, 0
      %v637 = vsel %vm569, %v558, 0
      %v640 = vsel %vm569, %v559, 0
      %v643 = vsel %vm569, %v560, 0
      %v646 = vsel %vm569, %v561, 0
      %v649 = vsel %vm569, %v562, 0
      %v652 = vsel %vm569, %v563, 0
      %v655 = vsel %vm569, %v564, 0
      %v658 = vsel %vm569, %v565, 0
      %v661 = vsel %vm569, %v566, 0
      %v664 = vsel %vm569, %v567, 0
      %vm666 = vcmask 1043456
      %v668 = vsel %vm666, %v568, 0
      %670 = vmatprep.subr.bf16.mxu0 0
      %671 = vmatpush1.bf16.msra.mxu0 %v668
      %672 = vmatprep.subr.bf16.mxu0 0
      %673 = vmatpush1.bf16.msra.mxu0 0
      %674 = vmatprep.subr.bf16.mxu0 0
      %675 = vmatpush1.bf16.msra.mxu0 0
      %676 = vmatprep.subr.bf16.mxu0 0
      %677 = vmatpush1.bf16.msra.mxu0 0
      %678 = vmatprep.subr.bf16.mxu0 0
      %679 = vmatpush1.bf16.msra.mxu0 0
      %680 = vmatprep.subr.bf16.mxu0 0
      %681 = vmatpush1.bf16.msra.mxu0 0
      %682 = vmatprep.subr.bf16.mxu0 0
      %683 = vmatpush1.bf16.msra.mxu0 0
      %684 = vmatprep.subr.bf16.mxu0 0
      %685 = vmatpush1.bf16.msra.mxu0 0
      %686 = vmatprep.subr.bf16.mxu0 0
      %687 = vmatpush1.bf16.msra.mxu0 0
      %688 = vmatprep.subr.bf16.mxu0 0
      %689 = vmatpush1.bf16.msra.mxu0 0
      %690 = vmatprep.subr.bf16.mxu0 0
      %691 = vmatpush1.bf16.msra.mxu0 0
      %692 = vmatprep.subr.bf16.mxu0 0
      %693 = vmatpush1.bf16.msra.mxu0 0
      %694 = vmatprep.subr.bf16.mxu0 0
      %695 = vmatpush1.bf16.msra.mxu0 0
      %696 = vmatprep.subr.bf16.mxu0 0
      %697 = vmatpush1.bf16.msra.mxu0 0
      %698 = vmatprep.subr.bf16.mxu0 0
      %699 = vmatpush1.bf16.msra.mxu0 0
      %700 = vmatprep.subr.bf16.mxu0 0
      %701 = vmatpush1.bf16.msra.mxu0 0
      %702 = vmatprep.mubr.bf16.mxu0 0
      %703 = vmatmul.mubr.bf16.gmra.mrb[0].mxu0 %v571
      %v704 = vpop.f32.mrb[0].mxu0
      %v705 = vadd.f32 0.0, %v704
      %v706 = vpop.f32.mrb[0].mxu0
      %v707 = vpop.f32.mrb[0].mxu0
      %v708 = vadd.f32 0.0, %v707
      %v709 = vpop.f32.mrb[0].mxu0
      %710 = vmatprep.mubr.bf16.mxu0 0
      %711 = vmatmul.mubr.bf16.gmra.mrb[0].mxu0 %v574
      %v712 = vpop.f32.mrb[0].mxu0
      %v713 = vadd.f32 0.0, %v712
      %v714 = vpop.f32.mrb[0].mxu0
      %v715 = vpop.f32.mrb[0].mxu0
      %v716 = vadd.f32 0.0, %v715
      %v717 = vpop.f32.mrb[0].mxu0
      %718 = vmatprep.mubr.bf16.mxu0 0
      %719 = vmatmul.mubr.bf16.gmra.mrb[0].mxu0 %v577
      %v720 = vpop.f32.mrb[0].mxu0
      %v721 = vadd.f32 0.0, %v720
      %v722 = vpop.f32.mrb[0].mxu0
      %v723 = vpop.f32.mrb[0].mxu0
      %v724 = vadd.f32 0.0, %v723
      %v725 = vpop.f32.mrb[0].mxu0
      %726 = vmatprep.mubr.bf16.mxu0 0
      %727 = vmatmul.mubr.bf16.gmra.mrb[0].mxu0 %v580
      %v728 = vpop.f32.mrb[0].mxu0
      %v729 = vadd.f32 0.0, %v728
      %v730 = vpop.f32.mrb[0].mxu0
      %v731 = vpop.f32.mrb[0].mxu0
      %v732 = vadd.f32 0.0, %v731
      %v733 = vpop.f32.mrb[0].mxu0
      %734 = vmatprep.mubr.bf16.mxu0 0
      %735 = vmatmul.mubr.bf16.gmra.mrb[0].mxu0 %v583
      %v736 = vpop.f32.mrb[0].mxu0
      %v737 = vadd.f32 0.0, %v736
      %v738 = vpop.f32.mrb[0].mxu0
      %v739 = vpop.f32.mrb[0].mxu0
      %v740 = vadd.f32 0.0, %v739
      %v741 = vpop.f32.mrb[0].mxu0
      %742 = vmatprep.mubr.bf16.mxu0 0
      %743 = vmatmul.mubr.bf16.gmra.mrb[0].mxu0 %v586
      %v744 = vpop.f32.mrb[0].mxu0
      %v745 = vadd.f32 0.0, %v744
      %v746 = vpop.f32.mrb[0].mxu0
      %v747 = vpop.f32.mrb[0].mxu0
      %v748 = vadd.f32 0.0, %v747
      %v749 = vpop.f32.mrb[0].mxu0
      %750 = vmatprep.mubr.bf16.mxu0 0
      %751 = vmatmul.mubr.bf16.gmra.mrb[0].mxu0 %v589
      %v752 = vpop.f32.mrb[0].mxu0
      %v753 = vadd.f32 0.0, %v752
      %v754 = vpop.f32.mrb[0].mxu0
      %v755 = vpop.f32.mrb[0].mxu0
      %v756 = vadd.f32 0.0, %v755
      %v757 = vpop.f32.mrb[0].mxu0
      %758 = vmatprep.mubr.bf16.mxu0 0
      %759 = vmatmul.mubr.bf16.gmra.mrb[0].mxu0 %v592
      %v760 = vpop.f32.mrb[0].mxu0
      %v761 = vadd.f32 0.0, %v760
      %v762 = vpop.f32.mrb[0].mxu0
      %v763 = vpop.f32.mrb[0].mxu0
      %v764 = vadd.f32 0.0, %v763
      %v765 = vpop.f32.mrb[0].mxu0
      %766 = vmatprep.mubr.bf16.mxu0 0
      %767 = vmatmul.mubr.bf16.gmra.mrb[0].mxu0 %v595
      %v768 = vpop.f32.mrb[0].mxu0
      %v769 = vadd.f32 0.0, %v768
      %v770 = vpop.f32.mrb[0].mxu0
      %v771 = vpop.f32.mrb[0].mxu0
      %v772 = vadd.f32 0.0, %v771
      %v773 = vpop.f32.mrb[0].mxu0
      %774 = vmatprep.mubr.bf16.mxu0 0
      %775 = vmatmul.mubr.bf16.gmra.mrb[0].mxu0 %v598
      %v776 = vpop.f32.mrb[0].mxu0
      %v777 = vadd.f32 0.0, %v776
      %v778 = vpop.f32.mrb[0].mxu0
      %v779 = vpop.f32.mrb[0].mxu0
      %v780 = vadd.f32 0.0, %v779
      %v781 = vpop.f32.mrb[0].mxu0
      %782 = vmatprep.mubr.bf16.mxu0 0
      %783 = vmatmul.mubr.bf16.gmra.mrb[0].mxu0 %v601
      %v784 = vpop.f32.mrb[0].mxu0
      %v785 = vadd.f32 0.0, %v784
      %v786 = vpop.f32.mrb[0].mxu0
      %v787 = vpop.f32.mrb[0].mxu0
      %v788 = vadd.f32 0.0, %v787
      %v789 = vpop.f32.mrb[0].mxu0
      %790 = vmatprep.mubr.bf16.mxu0 0
      %791 = vmatmul.mubr.bf16.gmra.mrb[0].mxu0 %v604
      %v792 = vpop.f32.mrb[0].mxu0
      %v793 = vadd.f32 0.0, %v792
      %v794 = vpop.f32.mrb[0].mxu0
      %v795 = vpop.f32.mrb[0].mxu0
      %v796 = vadd.f32 0.0, %v795
      %v797 = vpop.f32.mrb[0].mxu0
      %798 = vmatprep.mubr.bf16.mxu0 0
      %799 = vmatmul.mubr.bf16.gmra.mrb[0].mxu0 %v607
      %v800 = vpop.f32.mrb[0].mxu0
      %v801 = vadd.f32 0.0, %v800
      %v802 = vpop.f32.mrb[0].mxu0
      %v803 = vpop.f32.mrb[0].mxu0
      %v804 = vadd.f32 0.0, %v803
      %v805 = vpop.f32.mrb[0].mxu0
      %806 = vmatprep.mubr.bf16.mxu0 0
      %807 = vmatmul.mubr.bf16.gmra.mrb[0].mxu0 %v610
      %v808 = vpop.f32.mrb[0].mxu0
      %v809 = vadd.f32 0.0, %v808
      %v810 = vpop.f32.mrb[0].mxu0
      %v811 = vpop.f32.mrb[0].mxu0
      %v812 = vadd.f32 0.0, %v811
      %v813 = vpop.f32.mrb[0].mxu0
      %814 = vmatprep.mubr.bf16.mxu0 0
      %815 = vmatmul.mubr.bf16.gmra.mrb[0].mxu0 %v613
      %v816 = vpop.f32.mrb[0].mxu0
      %v817 = vadd.f32 0.0, %v816
      %v818 = vpop.f32.mrb[0].mxu0
      %v819 = vpop.f32.mrb[0].mxu0
      %v820 = vadd.f32 0.0, %v819
      %v821 = vpop.f32.mrb[0].mxu0
      %822 = vmatprep.mubr.bf16.mxu0 0
      %823 = vmatmul.mubr.bf16.gmra.mrb[0].mxu0 %v616
      %v824 = vpop.f32.mrb[0].mxu0
      %v825 = vadd.f32 0.0, %v824
      %v826 = vpop.f32.mrb[0].mxu0
      %v827 = vpop.f32.mrb[0].mxu0
      %v828 = vadd.f32 0.0, %v827
      %v829 = vpop.f32.mrb[0].mxu0
      %830 = vmatprep.mubr.bf16.mxu0 0
      %831 = vmatmul.mubr.bf16.gmra.mrb[0].mxu0 %v619
      %v832 = vpop.f32.mrb[0].mxu0
      %v833 = vadd.f32 0.0, %v832
      %v834 = vpop.f32.mrb[0].mxu0
      %v835 = vpop.f32.mrb[0].mxu0
      %v836 = vadd.f32 0.0, %v835
      %v837 = vpop.f32.mrb[0].mxu0
      %838 = vmatprep.mubr.bf16.mxu0 0
      %839 = vmatmul.mubr.bf16.gmra.mrb[0].mxu0 %v622
      %v840 = vpop.f32.mrb[0].mxu0
      %v841 = vadd.f32 0.0, %v840
      %v842 = vpop.f32.mrb[0].mxu0
      %v843 = vpop.f32.mrb[0].mxu0
      %v844 = vadd.f32 0.0, %v843
      %v845 = vpop.f32.mrb[0].mxu0
      %846 = vmatprep.mubr.bf16.mxu0 0
      %847 = vmatmul.mubr.bf16.gmra.mrb[0].mxu0 %v625
      %v848 = vpop.f32.mrb[0].mxu0
      %v849 = vadd.f32 0.0, %v848
      %v850 = vpop.f32.mrb[0].mxu0
      %v851 = vpop.f32.mrb[0].mxu0
      %v852 = vadd.f32 0.0, %v851
      %v853 = vpop.f32.mrb[0].mxu0
      %854 = vmatprep.mubr.bf16.mxu0 0
      %855 = vmatmul.mubr.bf16.gmra.mrb[0].mxu0 %v628
      %v856 = vpop.f32.mrb[0].mxu0
      %v857 = vadd.f32 0.0, %v856
      %v858 = vpop.f32.mrb[0].mxu0
      %v859 = vpop.f32.mrb[0].mxu0
      %v860 = vadd.f32 0.0, %v859
      %v861 = vpop.f32.mrb[0].mxu0
      %862 = vmatprep.mubr.bf16.mxu0 0
      %863 = vmatmul.mubr.bf16.gmra.mrb[0].mxu0 %v631
      %v864 = vpop.f32.mrb[0].mxu0
      %v865 = vadd.f32 0.0, %v864
      %v866 = vpop.f32.mrb[0].mxu0
      %v867 = vpop.f32.mrb[0].mxu0
      %v868 = vadd.f32 0.0, %v867
      %v869 = vpop.f32.mrb[0].mxu0
      %870 = vmatprep.mubr.bf16.mxu0 0
      %871 = vmatmul.mubr.bf16.gmra.mrb[0].mxu0 %v634
      %v872 = vpop.f32.mrb[0].mxu0
      %v873 = vadd.f32 0.0, %v872
      %v874 = vpop.f32.mrb[0].mxu0
      %v875 = vpop.f32.mrb[0].mxu0
      %v876 = vadd.f32 0.0, %v875
      %v877 = vpop.f32.mrb[0].mxu0
      %878 = vmatprep.mubr.bf16.mxu0 0
      %879 = vmatmul.mubr.bf16.gmra.mrb[0].mxu0 %v637
      %v880 = vpop.f32.mrb[0].mxu0
      %v881 = vadd.f32 0.0, %v880
      %v882 = vpop.f32.mrb[0].mxu0
      %v883 = vpop.f32.mrb[0].mxu0
      %v884 = vadd.f32 0.0, %v883
      %v885 = vpop.f32.mrb[0].mxu0
      %886 = vmatprep.mubr.bf16.mxu0 0
      %887 = vmatmul.mubr.bf16.gmra.mrb[0].mxu0 %v640
      %v888 = vpop.f32.mrb[0].mxu0
      %v889 = vadd.f32 0.0, %v888
      %v890 = vpop.f32.mrb[0].mxu0
      %v891 = vpop.f32.mrb[0].mxu0
      %v892 = vadd.f32 0.0, %v891
      %v893 = vpop.f32.mrb[0].mxu0
      %894 = vmatprep.mubr.bf16.mxu0 0
      %895 = vmatmul.mubr.bf16.gmra.mrb[0].mxu0 %v643
      %v896 = vpop.f32.mrb[0].mxu0
      %v897 = vadd.f32 0.0, %v896
      %v898 = vpop.f32.mrb[0].mxu0
      %v899 = vpop.f32.mrb[0].mxu0
      %v900 = vadd.f32 0.0, %v899
      %v901 = vpop.f32.mrb[0].mxu0
      %902 = vmatprep.mubr.bf16.mxu0 0
      %903 = vmatmul.mubr.bf16.gmra.mrb[0].mxu0 %v646
      %v904 = vpop.f32.mrb[0].mxu0
      %v905 = vadd.f32 0.0, %v904
      %v906 = vpop.f32.mrb[0].mxu0
      %v907 = vpop.f32.mrb[0].mxu0
      %v908 = vadd.f32 0.0, %v907
      %v909 = vpop.f32.mrb[0].mxu0
      %910 = vmatprep.mubr.bf16.mxu0 0
      %911 = vmatmul.mubr.bf16.gmra.mrb[0].mxu0 %v649
      %v912 = vpop.f32.mrb[0].mxu0
      %v913 = vadd.f32 0.0, %v912
      %v914 = vpop.f32.mrb[0].mxu0
      %v915 = vpop.f32.mrb[0].mxu0
      %v916 = vadd.f32 0.0, %v915
      %v917 = vpop.f32.mrb[0].mxu0
      %918 = vmatprep.mubr.bf16.mxu0 0
      %919 = vmatmul.mubr.bf16.gmra.mrb[0].mxu0 %v652
      %v920 = vpop.f32.mrb[0].mxu0
      %v921 = vadd.f32 0.0, %v920
      %v922 = vpop.f32.mrb[0].mxu0
      %v923 = vpop.f32.mrb[0].mxu0
      %v924 = vadd.f32 0.0, %v923
      %v925 = vpop.f32.mrb[0].mxu0
      %926 = vmatprep.mubr.bf16.mxu0 0
      %927 = vmatmul.mubr.bf16.gmra.mrb[0].mxu0 %v655
      %v928 = vpop.f32.mrb[0].mxu0
      %v929 = vadd.f32 0.0, %v928
      %v930 = vpop.f32.mrb[0].mxu0
      %v931 = vpop.f32.mrb[0].mxu0
      %v932 = vadd.f32 0.0, %v931
      %v933 = vpop.f32.mrb[0].mxu0
      %934 = vmatprep.mubr.bf16.mxu0 0
      %935 = vmatmul.mubr.bf16.gmra.mrb[0].mxu0 %v658
      %v936 = vpop.f32.mrb[0].mxu0
      %v937 = vadd.f32 0.0, %v936
      %v938 = vpop.f32.mrb[0].mxu0
      %v939 = vpop.f32.mrb[0].mxu0
      %v940 = vadd.f32 0.0, %v939
      %v941 = vpop.f32.mrb[0].mxu0
      %942 = vmatprep.mubr.bf16.mxu0 0
      %943 = vmatmul.mubr.bf16.gmra.mrb[0].mxu0 %v661
      %v944 = vpop.f32.mrb[0].mxu0
      %v945 = vadd.f32 0.0, %v944
      %v946 = vpop.f32.mrb[0].mxu0
      %v947 = vpop.f32.mrb[0].mxu0
      %v948 = vadd.f32 0.0, %v947
      %v949 = vpop.f32.mrb[0].mxu0
      %950 = vmatprep.mubr.bf16.mxu0 0
      %951 = vmatmul.mubr.bf16.gmra.mrb[0].mxu0 %v664
      %v952 = vpop.f32.mrb[0].mxu0
      %v953 = vadd.f32 0.0, %v952
      %v954 = vpop.f32.mrb[0].mxu0
      %v955 = vpop.f32.mrb[0].mxu0
      %v956 = vadd.f32 0.0, %v955
      %v957 = vpop.f32.mrb[0].mxu0
      %958 = vdwg.mxu0
      %v959 = vpack.c.bf16 %v708, %v705
      %v960 = vpack.c.bf16 %v716, %v713
      %v961 = vpack.c.bf16 %v724, %v721
      %v962 = vpack.c.bf16 %v732, %v729
      %v963 = vpack.c.bf16 %v740, %v737
      %v964 = vpack.c.bf16 %v748, %v745
      %v965 = vpack.c.bf16 %v756, %v753
      %v966 = vpack.c.bf16 %v764, %v761
      %v967 = vpack.c.bf16 %v772, %v769
      %v968 = vpack.c.bf16 %v780, %v777
      %v969 = vpack.c.bf16 %v788, %v785
      %v970 = vpack.c.bf16 %v796, %v793
      %v971 = vpack.c.bf16 %v804, %v801
      %v972 = vpack.c.bf16 %v812, %v809
      %v973 = vpack.c.bf16 %v820, %v817
      %v974 = vpack.c.bf16 %v828, %v825
      %v975 = vpack.c.bf16 %v836, %v833
      %v976 = vpack.c.bf16 %v844, %v841
      %v977 = vpack.c.bf16 %v852, %v849
      %v978 = vpack.c.bf16 %v860, %v857
      %v979 = vpack.c.bf16 %v868, %v865
      %v980 = vpack.c.bf16 %v876, %v873
      %v981 = vpack.c.bf16 %v884, %v881
      %v982 = vpack.c.bf16 %v892, %v889
      %v983 = vpack.c.bf16 %v900, %v897
      %v984 = vpack.c.bf16 %v908, %v905
      %v985 = vpack.c.bf16 %v916, %v913
      %v986 = vpack.c.bf16 %v924, %v921
      %v987 = vpack.c.bf16 %v932, %v929
      %v988 = vpack.c.bf16 %v940, %v937
      %v989 = vpack.c.bf16 %v948, %v945
      %v990 = vpack.c.bf16 %v956, %v953
      %v1023 = vunpack.c.l.b16 %v959
      %v1024 = vunpack.c.h.b16 %v959
      %v1025 = vunpack.c.l.b16 %v960
      %v1026 = vunpack.c.h.b16 %v960
      %v1027 = vunpack.c.l.b16 %v961
      %v1028 = vunpack.c.h.b16 %v961
      %v1029 = vunpack.c.l.b16 %v962
      %v1030 = vunpack.c.h.b16 %v962
      %v1031 = vunpack.c.l.b16 %v963
      %v1032 = vunpack.c.h.b16 %v963
      %v1033 = vunpack.c.l.b16 %v964
      %v1034 = vunpack.c.h.b16 %v964
      %v1035 = vunpack.c.l.b16 %v965
      %v1036 = vunpack.c.h.b16 %v965
      %v1037 = vunpack.c.l.b16 %v966
      %v1038 = vunpack.c.h.b16 %v966
      %v1039 = vunpack.c.l.b16 %v967
      %v1040 = vunpack.c.h.b16 %v967
      %v1041 = vunpack.c.l.b16 %v968
      %v1042 = vunpack.c.h.b16 %v968
      %v1043 = vunpack.c.l.b16 %v969
      %v1044 = vunpack.c.h.b16 %v969
      %v1045 = vunpack.c.l.b16 %v970
      %v1046 = vunpack.c.h.b16 %v970
      %v1047 = vunpack.c.l.b16 %v971
      %v1048 = vunpack.c.h.b16 %v971
      %v1049 = vunpack.c.l.b16 %v972
      %v1050 = vunpack.c.h.b16 %v972
      %v1051 = vunpack.c.l.b16 %v973
      %v1052 = vunpack.c.h.b16 %v973
      %v1053 = vunpack.c.l.b16 %v974
      %v1054 = vunpack.c.h.b16 %v974
      %v1055 = vunpack.c.l.b16 %v975
      %v1056 = vunpack.c.h.b16 %v975
      %v1057 = vunpack.c.l.b16 %v976
      %v1058 = vunpack.c.h.b16 %v976
      %v1059 = vunpack.c.l.b16 %v977
      %v1060 = vunpack.c.h.b16 %v977
      %v1061 = vunpack.c.l.b16 %v978
      %v1062 = vunpack.c.h.b16 %v978
      %v1063 = vunpack.c.l.b16 %v979
      %v1064 = vunpack.c.h.b16 %v979
      %v1065 = vunpack.c.l.b16 %v980
      %v1066 = vunpack.c.h.b16 %v980
      %v1067 = vunpack.c.l.b16 %v981
      %v1068 = vunpack.c.h.b16 %v981
      %v1069 = vunpack.c.l.b16 %v982
      %v1070 = vunpack.c.h.b16 %v982
      %v1071 = vunpack.c.l.b16 %v983
      %v1072 = vunpack.c.h.b16 %v983
      %v1073 = vunpack.c.l.b16 %v984
      %v1074 = vunpack.c.h.b16 %v984
      %v1075 = vunpack.c.l.b16 %v985
      %v1076 = vunpack.c.h.b16 %v985
      %v1077 = vunpack.c.l.b16 %v986
      %v1078 = vunpack.c.h.b16 %v986
      %v1079 = vunpack.c.l.b16 %v987
      %v1080 = vunpack.c.h.b16 %v987
      %v1081 = vunpack.c.l.b16 %v988
      %v1082 = vunpack.c.h.b16 %v988
      %v1083 = vunpack.c.l.b16 %v989
      %v1084 = vunpack.c.h.b16 %v989
      %v1085 = vunpack.c.l.b16 %v990
      %v1086 = vunpack.c.h.b16 %v990
      %v1087 = vpack.c.b16 %v1023, %v1023
      %v1088 = vpack.c.b16 %v1024, %v1024
      %v1089 = vpack.c.b16 %v1025, %v1025
      %v1090 = vpack.c.b16 %v1026, %v1026
      %v1091 = vpack.c.b16 %v1027, %v1027
      %v1092 = vpack.c.b16 %v1028, %v1028
      %v1093 = vpack.c.b16 %v1029, %v1029
      %v1094 = vpack.c.b16 %v1030, %v1030
      %v1095 = vpack.c.b16 %v1031, %v1031
      %v1096 = vpack.c.b16 %v1032, %v1032
      %v1097 = vpack.c.b16 %v1033, %v1033
      %v1098 = vpack.c.b16 %v1034, %v1034
      %v1099 = vpack.c.b16 %v1035, %v1035
      %v1100 = vpack.c.b16 %v1036, %v1036
      %v1101 = vpack.c.b16 %v1037, %v1037
      %v1102 = vpack.c.b16 %v1038, %v1038
      %v1103 = vpack.c.b16 %v1039, %v1039
      %v1104 = vpack.c.b16 %v1040, %v1040
      %v1105 = vpack.c.b16 %v1041, %v1041
      %v1106 = vpack.c.b16 %v1042, %v1042
      %v1107 = vpack.c.b16 %v1043, %v1043
      %v1108 = vpack.c.b16 %v1044, %v1044
      %v1109 = vpack.c.b16 %v1045, %v1045
      %v1110 = vpack.c.b16 %v1046, %v1046
      %v1111 = vpack.c.b16 %v1047, %v1047
      %v1112 = vpack.c.b16 %v1048, %v1048
      %v1113 = vpack.c.b16 %v1049, %v1049
      %v1114 = vpack.c.b16 %v1050, %v1050
      %v1115 = vpack.c.b16 %v1051, %v1051
      %v1116 = vpack.c.b16 %v1052, %v1052
      %v1117 = vpack.c.b16 %v1053, %v1053
      %v1118 = vpack.c.b16 %v1054, %v1054
      %v1119 = vpack.c.b16 %v1055, %v1055
      %v1120 = vpack.c.b16 %v1056, %v1056
      %v1121 = vpack.c.b16 %v1057, %v1057
      %v1122 = vpack.c.b16 %v1058, %v1058
      %v1123 = vpack.c.b16 %v1059, %v1059
      %v1124 = vpack.c.b16 %v1060, %v1060
      %v1125 = vpack.c.b16 %v1061, %v1061
      %v1126 = vpack.c.b16 %v1062, %v1062
      %v1127 = vpack.c.b16 %v1063, %v1063
      %v1128 = vpack.c.b16 %v1064, %v1064
      %v1129 = vpack.c.b16 %v1065, %v1065
      %v1130 = vpack.c.b16 %v1066, %v1066
      %v1131 = vpack.c.b16 %v1067, %v1067
      %v1132 = vpack.c.b16 %v1068, %v1068
      %v1133 = vpack.c.b16 %v1069, %v1069
      %v1134 = vpack.c.b16 %v1070, %v1070
      %v1135 = vpack.c.b16 %v1071, %v1071
      %v1136 = vpack.c.b16 %v1072, %v1072
      %v1137 = vpack.c.b16 %v1073, %v1073
      %v1138 = vpack.c.b16 %v1074, %v1074
      %v1139 = vpack.c.b16 %v1075, %v1075
      %v1140 = vpack.c.b16 %v1076, %v1076
      %v1141 = vpack.c.b16 %v1077, %v1077
      %v1142 = vpack.c.b16 %v1078, %v1078
      %v1143 = vpack.c.b16 %v1079, %v1079
      %v1144 = vpack.c.b16 %v1080, %v1080
      %v1145 = vpack.c.b16 %v1081, %v1081
      %v1146 = vpack.c.b16 %v1082, %v1082
      %v1147 = vpack.c.b16 %v1083, %v1083
      %v1148 = vpack.c.b16 %v1084, %v1084
      %v1149 = vpack.c.b16 %v1085, %v1085
      %v1150 = vpack.c.b16 %v1086, %v1086
      %1215 = vst [vmem:[%s199] sm:$0xf] %v1087
      %1216 = vst [vmem:[%s199 + $0x4] sm:$0xf] %v1088
      %1217 = vst [vmem:[%s199 + $0x8] sm:$0xf] %v1089
      %1218 = vst [vmem:[%s199 + $0xc] sm:$0xf] %v1090
      %1219 = vst [vmem:[%s199 + $0x10] sm:$0xf] %v1091
      %1220 = vst [vmem:[%s199 + $0x14] sm:$0xf] %v1092
      %1221 = vst [vmem:[%s199 + $0x18] sm:$0xf] %v1093
      %1222 = vst [vmem:[%s199 + $0x1c] sm:$0xf] %v1094
      %1223 = vst [vmem:[%s199 + $0x20] sm:$0xf] %v1095
      %1224 = vst [vmem:[%s199 + $0x24] sm:$0xf] %v1096
      %1225 = vst [vmem:[%s199 + $0x28] sm:$0xf] %v1097
      %1226 = vst [vmem:[%s199 + $0x2c] sm:$0xf] %v1098
      %1227 = vst [vmem:[%s199 + $0x30] sm:$0xf] %v1099
      %1228 = vst [vmem:[%s199 + $0x34] sm:$0xf] %v1100
      %1229 = vst [vmem:[%s199 + $0x38] sm:$0xf] %v1101
      %1230 = vst [vmem:[%s199 + $0x3c] sm:$0xf] %v1102
      %1231 = vst [vmem:[%s199 + $0x40] sm:$0xf] %v1103
      %1232 = vst [vmem:[%s199 + $0x44] sm:$0xf] %v1104
      %1233 = vst [vmem:[%s199 + $0x48] sm:$0xf] %v1105
      %1234 = vst [vmem:[%s199 + $0x4c] sm:$0xf] %v1106
      %1235 = vst [vmem:[%s199 + $0x50] sm:$0xf] %v1107
      %1236 = vst [vmem:[%s199 + $0x54] sm:$0xf] %v1108
      %1237 = vst [vmem:[%s199 + $0x58] sm:$0xf] %v1109
      %1238 = vst [vmem:[%s199 + $0x5c] sm:$0xf] %v1110
      %1239 = vst [vmem:[%s199 + $0x60] sm:$0xf] %v1111
      %1240 = vst [vmem:[%s199 + $0x64] sm:$0xf] %v1112
      %1241 = vst [vmem:[%s199 + $0x68] sm:$0xf] %v1113
      %1242 = vst [vmem:[%s199 + $0x6c] sm:$0xf] %v1114
      %1243 = vst [vmem:[%s199 + $0x70] sm:$0xf] %v1115
      %1244 = vst [vmem:[%s199 + $0x74] sm:$0xf] %v1116
      %1245 = vst [vmem:[%s199 + $0x78] sm:$0xf] %v1117
      %1246 = vst [vmem:[%s199 + $0x7c] sm:$0xf] %v1118
      %1247 = vst [vmem:[%s199 + $0x80] sm:$0xf] %v1119
      %1248 = vst [vmem:[%s199 + $0x84] sm:$0xf] %v1120
      %1249 = vst [vmem:[%s199 + $0x88] sm:$0xf] %v1121
      %1250 = vst [vmem:[%s199 + $0x8c] sm:$0xf] %v1122
      %1251 = vst [vmem:[%s199 + $0x90] sm:$0xf] %v1123
      %1252 = vst [vmem:[%s199 + $0x94] sm:$0xf] %v1124
      %1253 = vst [vmem:[%s199 + $0x98] sm:$0xf] %v1125
      %1254 = vst [vmem:[%s199 + $0x9c] sm:$0xf] %v1126
      %1255 = vst [vmem:[%s199 + $0xa0] sm:$0xf] %v1127
      %1256 = vst [vmem:[%s199 + $0xa4] sm:$0xf] %v1128
      %1257 = vst [vmem:[%s199 + $0xa8] sm:$0xf] %v1129
      %1258 = vst [vmem:[%s199 + $0xac] sm:$0xf] %v1130
      %1259 = vst [vmem:[%s199 + $0xb0] sm:$0xf] %v1131
      %1260 = vst [vmem:[%s199 + $0xb4] sm:$0xf] %v1132
      %1261 = vst [vmem:[%s199 + $0xb8] sm:$0xf] %v1133
      %1262 = vst [vmem:[%s199 + $0xbc] sm:$0xf] %v1134
      %1263 = vst [vmem:[%s199 + $0xc0] sm:$0xf] %v1135
      %1264 = vst [vmem:[%s199 + $0xc4] sm:$0xf] %v1136
      %1265 = vst [vmem:[%s199 + $0xc8] sm:$0xf] %v1137
      %1266 = vst [vmem:[%s199 + $0xcc] sm:$0xf] %v1138
      %1267 = vst [vmem:[%s199 + $0xd0] sm:$0xf] %v1139
      %1268 = vst [vmem:[%s199 + $0xd4] sm:$0xf] %v1140
      %1269 = vst [vmem:[%s199 + $0xd8] sm:$0xf] %v1141
      %1270 = vst [vmem:[%s199 + $0xdc] sm:$0xf] %v1142
      %1271 = vst [vmem:[%s199 + $0xe0] sm:$0xf] %v1143
      %1272 = vst [vmem:[%s199 + $0xe4] sm:$0xf] %v1144
      %1273 = vst [vmem:[%s199 + $0xe8] sm:$0xf] %v1145
      %1274 = vst [vmem:[%s199 + $0xec] sm:$0xf] %v1146
      %1275 = vst [vmem:[%s199 + $0xf0] sm:$0xf] %v1147
      %1276 = vst [vmem:[%s199 + $0xf4] sm:$0xf] %v1148
      %1277 = vst [vmem:[%s199 + $0xf8] sm:$0xf] %v1149
      %1278 = vst [vmem:[%s199 + $0xfc] sm:$0xf] %v1150
      %s1279 = smul.u32 64, %s15
      %p1280 = scmp.lt.s32.totalorder %s1279, 255
      %s1281 = scalar_select %p1280, %s1279, 255
      %s1282 = smul.addr %s1281, 4
      %s1283 = scalar_lea.vmem %s4, %s1282
      // Predicated region
      $region37: #{generator_forward.18} parent=35 // pred_check
        %p1284 = pneg %p122
      $region38: #{generator_forward.18} parent=35 // pred_check_branch
        %1286 = sbr.rel (%p1284) target = $region40
      $region39: #{generator_forward.18} parent=35 // pred_region
        %s1287 = smul.u32 64, %s15
      $region40: #{generator_forward.18} parent=35 // pred_fallthru
        _
    $region36: #{generator_forward.18} parent=5 // pred_fallthru
      _
    %p1288 = scmp.le.s32.totalorder 2, %s10
    // Predicated region
    $region41: #{generator_forward.18} parent=5 // pred_check
      %p1289 = pneg %p1288
    $region42: #{generator_forward.18} parent=5 // pred_check_branch
      %1291 = sbr.rel (%p1289) target = $region44
    $region43: #{generator_forward.18} parent=5 // pred_region
      %s1292 = ssub.s32 %s10, 2
      // Predicated region
      $region45: #{generator_forward.18} parent=43 // pred_check
        %p1293 = pneg %p128
      $region46: #{generator_forward.18} parent=43 // pred_check_branch
        %1295 = sbr.rel (%p1293) target = $region48
      $region47: #{generator_forward.18} parent=43 // pred_region
        %s1296 = smul.u32 64, %s16
        %p1297 = scmp.lt.s32.totalorder %s1296, 255
        %s1298 = scalar_select %p1297, %s1296, 255
        %s1299 = smul.addr %s1298, 4
        %s1300 = scalar_lea.vmem %s4, %s1299
      $region48: #{generator_forward.18} parent=43 // pred_fallthru
        _
    $region44: #{generator_forward.18} parent=5 // pred_fallthru
      _
  $region6: #{generator_forward.18} parent=0 // loop_footer
    %s14 = sadd.s32 1, %s10
  $region7: #{generator_forward.18} parent=0 // loop_footer_branch
    %9 = sbr.rel target = $region3
  $region8: #{generator_forward.18} parent=0 // loop_exit
    _

// kernel: generator_forward.19
$region0: #{generator_forward.19}
  #allocation0 [shape = 'u32[]', space=smem, size = 0x4, offset = 0x4, fixed_abs, tag = 'smem constant byte address 0x4 - core index']
  #allocation1 [shape = 'u32[144,128]{1,0:T(1,128)}', space=vmem, size = 0x12000, scoped, tag = 'internal scratch']
  %s0 = inlined_call_operand.vmem [shape: f32[128,512], index: 0, kind: input, shape index: {}]
  %s1 = inlined_call_operand.vmem [shape: f32[128,512], index: 1, kind: output, shape index: {}]
  %s2 = sld [smem:[#allocation0]]
  $region14: #{generator_forward.19} parent=0
    _
  %s4 = ssub.s32 1, %s2
  %s5 = scalar_select 0, %s4, %s2
  // Predicated region
  $region2: #{generator_forward.19} parent=0 // pred_check
    _
  $region3: #{generator_forward.19} parent=0 // pred_check_branch
    %7 = sbr.rel (0) target = $region5
  $region4: #{generator_forward.19} parent=0 // pred_region
    _
  $region5: #{generator_forward.19} parent=0 // pred_fallthru
    _
  %v8 = vld [vmem:[%s0] sm:$0xff]
  %v9 = vld [vmem:[%s0 + $0x8] sm:$0xff]
  %v10 = vld [vmem:[%s0 + $0x10] sm:$0xff]
  %v11 = vld [vmem:[%s0 + $0x18] sm:$0xff]
  %v12 = vld [vmem:[%s0 + $0x20] sm:$0xff]
  %v13 = vld [vmem:[%s0 + $0x28] sm:$0xff]
  %v14 = vld [vmem:[%s0 + $0x30] sm:$0xff]
  %v15 = vld [vmem:[%s0 + $0x38] sm:$0xff]
  %v16 = vld [vmem:[%s0 + $0x40] sm:$0xff]
  %v17 = vld [vmem:[%s0 + $0x48] sm:$0xff]
  %v18 = vld [vmem:[%s0 + $0x50] sm:$0xff]
  %v19 = vld [vmem:[%s0 + $0x58] sm:$0xff]
  %v20 = vld [vmem:[%s0 + $0x60] sm:$0xff]
  %v21 = vld [vmem:[%s0 + $0x68] sm:$0xff]
  %v22 = vld [vmem:[%s0 + $0x70] sm:$0xff]
  %v23 = vld [vmem:[%s0 + $0x78] sm:$0xff]
  %v24 = vld [vmem:[%s0 + $0x80] sm:$0xff]
  %v25 = vld [vmem:[%s0 + $0x88] sm:$0xff]
  %v26 = vld [vmem:[%s0 + $0x90] sm:$0xff]
  %v27 = vld [vmem:[%s0 + $0x98] sm:$0xff]
  %v28 = vld [vmem:[%s0 + $0xa0] sm:$0xff]
  %v29 = vld [vmem:[%s0 + $0xa8] sm:$0xff]
  %v30 = vld [vmem:[%s0 + $0xb0] sm:$0xff]
  %v31 = vld [vmem:[%s0 + $0xb8] sm:$0xff]
  %v32 = vld [vmem:[%s0 + $0xc0] sm:$0xff]
  %v33 = vld [vmem:[%s0 + $0xc8] sm:$0xff]
  %v34 = vld [vmem:[%s0 + $0xd0] sm:$0xff]
  %v35 = vld [vmem:[%s0 + $0xd8] sm:$0xff]
  %v36 = vld [vmem:[%s0 + $0xe0] sm:$0xff]
  %v37 = vld [vmem:[%s0 + $0xe8] sm:$0xff]
  %v38 = vld [vmem:[%s0 + $0xf0] sm:$0xff]
  %v39 = vld [vmem:[%s0 + $0xf8] sm:$0xff]
  %v40 = vld [vmem:[%s0 + $0x100] sm:$0xff]
  %v41 = vld [vmem:[%s0 + $0x108] sm:$0xff]
  %v42 = vld [vmem:[%s0 + $0x110] sm:$0xff]
  %v43 = vld [vmem:[%s0 + $0x118] sm:$0xff]
  %v44 = vld [vmem:[%s0 + $0x120] sm:$0xff]
  %v45 = vld [vmem:[%s0 + $0x128] sm:$0xff]
  %v46 = vld [vmem:[%s0 + $0x130] sm:$0xff]
  %v47 = vld [vmem:[%s0 + $0x138] sm:$0xff]
  %v48 = vld [vmem:[%s0 + $0x140] sm:$0xff]
  %v49 = vld [vmem:[%s0 + $0x148] sm:$0xff]
  %v50 = vld [vmem:[%s0 + $0x150] sm:$0xff]
  %v51 = vld [vmem:[%s0 + $0x158] sm:$0xff]
  %v52 = vld [vmem:[%s0 + $0x160] sm:$0xff]
  %v53 = vld [vmem:[%s0 + $0x168] sm:$0xff]
  %v54 = vld [vmem:[%s0 + $0x170] sm:$0xff]
  %v55 = vld [vmem:[%s0 + $0x178] sm:$0xff]
  %v56 = vld [vmem:[%s0 + $0x180] sm:$0xff]
  %v57 = vld [vmem:[%s0 + $0x188] sm:$0xff]
  %v58 = vld [vmem:[%s0 + $0x190] sm:$0xff]
  %v59 = vld [vmem:[%s0 + $0x198] sm:$0xff]
  %v60 = vld [vmem:[%s0 + $0x1a0] sm:$0xff]
  %v61 = vld [vmem:[%s0 + $0x1a8] sm:$0xff]
  %v62 = vld [vmem:[%s0 + $0x1b0] sm:$0xff]
  %v63 = vld [vmem:[%s0 + $0x1b8] sm:$0xff]
  %v64 = vld [vmem:[%s0 + $0x1c0] sm:$0xff]
  %v65 = vld [vmem:[%s0 + $0x1c8] sm:$0xff]
  %v66 = vld [vmem:[%s0 + $0x1d0] sm:$0xff]
  %v67 = vld [vmem:[%s0 + $0x1d8] sm:$0xff]
  %v68 = vld [vmem:[%s0 + $0x1e0] sm:$0xff]
  %v69 = vld [vmem:[%s0 + $0x1e8] sm:$0xff]
  %v70 = vld [vmem:[%s0 + $0x1f0] sm:$0xff]
  %v71 = vld [vmem:[%s0 + $0x1f8] sm:$0xff]
  %v72 = vtanh.pop %v8
  %v73 = vtanh.pop %v9
  %v74 = vtanh.pop %v10
  %v75 = vtanh.pop %v11
  %v76 = vtanh.pop %v12
  %v77 = vtanh.pop %v13
  %v78 = vtanh.pop %v14
  %v79 = vtanh.pop %v15
  %v80 = vtanh.pop %v16
  %v81 = vtanh.pop %v17
  %v82 = vtanh.pop %v18
  %v83 = vtanh.pop %v19
  %v84 = vtanh.pop %v20
  %v85 = vtanh.pop %v21
  %v86 = vtanh.pop %v22
  %v87 = vtanh.pop %v23
  %v88 = vtanh.pop %v24
  %v89 = vtanh.pop %v25
  %v90 = vtanh.pop %v26
  %v91 = vtanh.pop %v27
  %v92 = vtanh.pop %v28
  %v93 = vtanh.pop %v29
  %v94 = vtanh.pop %v30
  %v95 = vtanh.pop %v31
  %v96 = vtanh.pop %v32
  %v97 = vtanh.pop %v33
  %v98 = vtanh.pop %v34
  %v99 = vtanh.pop %v35
  %v100 = vtanh.pop %v36
  %v101 = vtanh.pop %v37
  %v102 = vtanh.pop %v38
  %v103 = vtanh.pop %v39
  %v104 = vtanh.pop %v40
  %v105 = vtanh.pop %v41
  %v106 = vtanh.pop %v42
  %v107 = vtanh.pop %v43
  %v108 = vtanh.pop %v44
  %v109 = vtanh.pop %v45
  %v110 = vtanh.pop %v46
  %v111 = vtanh.pop %v47
  %v112 = vtanh.pop %v48
  %v113 = vtanh.pop %v49
  %v114 = vtanh.pop %v50
  %v115 = vtanh.pop %v51
  %v116 = vtanh.pop %v52
  %v117 = vtanh.pop %v53
  %v118 = vtanh.pop %v54
  %v119 = vtanh.pop %v55
  %v120 = vtanh.pop %v56
  %v121 = vtanh.pop %v57
  %v122 = vtanh.pop %v58
  %v123 = vtanh.pop %v59
  %v124 = vtanh.pop %v60
  %v125 = vtanh.pop %v61
  %v126 = vtanh.pop %v62
  %v127 = vtanh.pop %v63
  %v128 = vtanh.pop %v64
  %v129 = vtanh.pop %v65
  %v130 = vtanh.pop %v66
  %v131 = vtanh.pop %v67
  %v132 = vtanh.pop %v68
  %v133 = vtanh.pop %v69
  %v134 = vtanh.pop %v70
  %v135 = vtanh.pop %v71
  %136 = vst [vmem:[%s1] sm:$0xff] %v72
  %137 = vst [vmem:[%s1 + $0x8] sm:$0xff] %v73
  %138 = vst [vmem:[%s1 + $0x10] sm:$0xff] %v74
  %139 = vst [vmem:[%s1 + $0x18] sm:$0xff] %v75
  %140 = vst [vmem:[%s1 + $0x20] sm:$0xff] %v76
  %141 = vst [vmem:[%s1 + $0x28] sm:$0xff] %v77
  %142 = vst [vmem:[%s1 + $0x30] sm:$0xff] %v78
  %143 = vst [vmem:[%s1 + $0x38] sm:$0xff] %v79
  %144 = vst [vmem:[%s1 + $0x40] sm:$0xff] %v80
  %145 = vst [vmem:[%s1 + $0x48] sm:$0xff] %v81
  %146 = vst [vmem:[%s1 + $0x50] sm:$0xff] %v82
  %147 = vst [vmem:[%s1 + $0x58] sm:$0xff] %v83
  %148 = vst [vmem:[%s1 + $0x60] sm:$0xff] %v84
  %149 = vst [vmem:[%s1 + $0x68] sm:$0xff] %v85
  %150 = vst [vmem:[%s1 + $0x70] sm:$0xff] %v86
  %151 = vst [vmem:[%s1 + $0x78] sm:$0xff] %v87
  %152 = vst [vmem:[%s1 + $0x80] sm:$0xff] %v88
  %153 = vst [vmem:[%s1 + $0x88] sm:$0xff] %v89
  %154 = vst [vmem:[%s1 + $0x90] sm:$0xff] %v90
  %155 = vst [vmem:[%s1 + $0x98] sm:$0xff] %v91
  %156 = vst [vmem:[%s1 + $0xa0] sm:$0xff] %v92
  %157 = vst [vmem:[%s1 + $0xa8] sm:$0xff] %v93
  %158 = vst [vmem:[%s1 + $0xb0] sm:$0xff] %v94
  %159 = vst [vmem:[%s1 + $0xb8] sm:$0xff] %v95
  %160 = vst [vmem:[%s1 + $0xc0] sm:$0xff] %v96
  %161 = vst [vmem:[%s1 + $0xc8] sm:$0xff] %v97
  %162 = vst [vmem:[%s1 + $0xd0] sm:$0xff] %v98
  %163 = vst [vmem:[%s1 + $0xd8] sm:$0xff] %v99
  %164 = vst [vmem:[%s1 + $0xe0] sm:$0xff] %v100
  %165 = vst [vmem:[%s1 + $0xe8] sm:$0xff] %v101
  %166 = vst [vmem:[%s1 + $0xf0] sm:$0xff] %v102
  %167 = vst [vmem:[%s1 + $0xf8] sm:$0xff] %v103
  %168 = vst [vmem:[%s1 + $0x100] sm:$0xff] %v104
  %169 = vst [vmem:[%s1 + $0x108] sm:$0xff] %v105
  %170 = vst [vmem:[%s1 + $0x110] sm:$0xff] %v106
  %171 = vst [vmem:[%s1 + $0x118] sm:$0xff] %v107
  %172 = vst [vmem:[%s1 + $0x120] sm:$0xff] %v108
  %173 = vst [vmem:[%s1 + $0x128] sm:$0xff] %v109
  %174 = vst [vmem:[%s1 + $0x130] sm:$0xff] %v110
  %175 = vst [vmem:[%s1 + $0x138] sm:$0xff] %v111
  %176 = vst [vmem:[%s1 + $0x140] sm:$0xff] %v112
  %177 = vst [vmem:[%s1 + $0x148] sm:$0xff] %v113
  %178 = vst [vmem:[%s1 + $0x150] sm:$0xff] %v114
  %179 = vst [vmem:[%s1 + $0x158] sm:$0xff] %v115
  %180 = vst [vmem:[%s1 + $0x160] sm:$0xff] %v116
  %181 = vst [vmem:[%s1 + $0x168] sm:$0xff] %v117
  %182 = vst [vmem:[%s1 + $0x170] sm:$0xff] %v118
  %183 = vst [vmem:[%s1 + $0x178] sm:$0xff] %v119
  %184 = vst [vmem:[%s1 + $0x180] sm:$0xff] %v120
  %185 = vst [vmem:[%s1 + $0x188] sm:$0xff] %v121
  %186 = vst [vmem:[%s1 + $0x190] sm:$0xff] %v122
  %187 = vst [vmem:[%s1 + $0x198] sm:$0xff] %v123
  %188 = vst [vmem:[%s1 + $0x1a0] sm:$0xff] %v124
  %189 = vst [vmem:[%s1 + $0x1a8] sm:$0xff] %v125
  %190 = vst [vmem:[%s1 + $0x1b0] sm:$0xff] %v126
  %191 = vst [vmem:[%s1 + $0x1b8] sm:$0xff] %v127
  %192 = vst [vmem:[%s1 + $0x1c0] sm:$0xff] %v128
  %193 = vst [vmem:[%s1 + $0x1c8] sm:$0xff] %v129
  %194 = vst [vmem:[%s1 + $0x1d0] sm:$0xff] %v130
  %195 = vst [vmem:[%s1 + $0x1d8] sm:$0xff] %v131
  %196 = vst [vmem:[%s1 + $0x1e0] sm:$0xff] %v132
  %197 = vst [vmem:[%s1 + $0x1e8] sm:$0xff] %v133
  %198 = vst [vmem:[%s1 + $0x1f0] sm:$0xff] %v134
  %199 = vst [vmem:[%s1 + $0x1f8] sm:$0xff] %v135
  // Predicated region
  $region6: #{generator_forward.19} parent=0 // pred_check
    _
  $region7: #{generator_forward.19} parent=0 // pred_check_branch
    %201 = sbr.rel (0) target = $region9
  $region8: #{generator_forward.19} parent=0 // pred_region
    _
  $region9: #{generator_forward.19} parent=0 // pred_fallthru
    _
  // Predicated region
  $region10: #{generator_forward.19} parent=0 // pred_check
    _
  $region11: #{generator_forward.19} parent=0 // pred_check_branch
    %203 = sbr.rel (0) target = $region13
  $region12: #{generator_forward.19} parent=0 // pred_region
    _
  $region13: #{generator_forward.19} parent=0 // pred_fallthru
    _

</llo_original>
